<compile_context>
chip_gen: v7x
topology: tpu7x:2x2x1
jax: 0.10.0
libtpu: 0.0.40
codegen_flags: <defaults>
</compile_context>

<pallas_src>
import jax
import jax.numpy as jnp
from jax.experimental import pallas as pl
from jax.experimental.pallas import tpu as pltpu  # noqa: F401  (kept for future grid/CompilerParams use)

# ---- small synthetic "bert-base-cased"-like config ----
VOCAB = 128
MAX_POS = 16
N_TYPES = 2
HIDDEN = 32
N_HEADS = 2
HEAD_DIM = HIDDEN // N_HEADS
INTER = 64
N_LAYERS = 2
N_CLASSES = 2
EPS = 1e-12
LANE_OUT = 128          # lane-dense padded logits width


def _rup(x, m):
    return ((x + m - 1) // m) * m


# ---------------- packed slab layouts (shared by prepack + kernel) ----------------
# bf16 weight slab: shape [N_LAYERS + 1, HIDDEN, W_COLS]
#   per layer l < N_LAYERS (rows = HIDDEN):
#     cols [WC_QKV : WC_QKV+3H) = [Wq | Wk | Wv]
#     cols [WC_O   : WC_O + H)  = Wo
#     cols [WC_F1  : WC_F1 + I) = W_ff1                      ([H, I])
#     cols [WC_F2T : WC_F2T+ I) = W_ff2.T                    ([H, I], contracted over I)
#   slice N_LAYERS (head): cols [0:H) = pooler W, cols [H : H+128) = classifier W (lane padded)
WC_QKV = 0
WC_O = 3 * HIDDEN
WC_F1 = 4 * HIDDEN
WC_F2T = 4 * HIDDEN + INTER
W_COLS = 4 * HIDDEN + 2 * INTER          # 256 (multiple of 128)

# f32 bias/const slab: shape [F_ROWS, 128]
FR_WEMB = 0                              # rows [0, VOCAB): word embedding, cols [0, H)
FR_EMB_ADD = VOCAB                       # rows [VOCAB, VOCAB+MAX_POS): pos_emb + type_emb[0]
FR_EMB_LN = FR_EMB_ADD + MAX_POS         # 2 rows: emb LN gamma, beta
FR_LAYER = _rup(FR_EMB_LN + 2, 8)        # per layer: 8 rows (sublane-aligned base)
#   +0 bqkv (3H cols) | +1 b_ff1 (I cols) | +2 bo | +3 ln1_g | +4 ln1_b | +5 b_ff2 | +6 ln2_g | +7 ln2_b
FR_HEAD = FR_LAYER + 8 * N_LAYERS        # 2 rows: pooler bias (H cols), classifier bias (128 cols)
F_ROWS = _rup(FR_HEAD + 2, 8)
F_COLS = 128


def _layernorm(x, g, b):
    mu = jnp.mean(x, axis=-1, keepdims=True)
    var = jnp.mean((x - mu) ** 2, axis=-1, keepdims=True)
    return (x - mu) * jax.lax.rsqrt(var + EPS) * g + b


# ---------------- single fused kernel: embeddings + all encoder layers + pooler + classifier ----------------
def fused_bert_kernel(ids_ref, mask_ref, wslab_ref, fslab_ref, logits_ref):
    B, S = ids_ref.shape
    H, I, NH, HD = HIDDEN, INTER, N_HEADS, HEAD_DIM
    BS = B * S
    scale = 1.0 / (HD ** 0.5)

    # ---- embeddings: one-hot MXU gather + pos/type add + LayerNorm (all in VMEM) ----
    ids = ids_ref[...]                                                    # [B, S] int32
    iota = jax.lax.broadcasted_iota(jnp.int32, (B, S, VOCAB), 2)
    onehot = (ids[:, :, None] == iota).astype(jnp.float32).reshape(BS, VOCAB)
    w_emb = fslab_ref[FR_WEMB:FR_WEMB + VOCAB, 0:H]                       # [VOCAB, H] f32
    emb = jnp.dot(onehot, w_emb, preferred_element_type=jnp.float32)      # [BS, H]
    emb_add = fslab_ref[FR_EMB_ADD:FR_EMB_ADD + S, 0:H]                   # [S, H] pos + type-0
    emb = (emb.reshape(B, S, H) + emb_add[None, :, :]).reshape(BS, H)
    x2 = _layernorm(emb,
                    fslab_ref[FR_EMB_LN:FR_EMB_LN + 1, 0:H],
                    fslab_ref[FR_EMB_LN + 1:FR_EMB_LN + 2, 0:H])          # [BS, H] f32

    # BERT extended additive mask, built in-kernel: [B, 1, S] with 0 / -10000.
    amask = (1.0 - mask_ref[...].astype(jnp.float32)).reshape(B, 1, S) * (-10000.0)

    # ---- encoder layers (static unroll, activations never leave VMEM) ----
    for l in range(N_LAYERS):
        Wl = wslab_ref[l].astype(jnp.float32)        # [H, W_COLS]; single bf16->f32 upcast / layer
        fb = FR_LAYER + 8 * l
        b_qkv = fslab_ref[fb + 0:fb + 1, 0:3 * H]    # [1, 3H]
        b_1   = fslab_ref[fb + 1:fb + 2, 0:I]        # [1, I]
        b_o   = fslab_ref[fb + 2:fb + 3, 0:H]
        ln1_g = fslab_ref[fb + 3:fb + 4, 0:H]
        ln1_b = fslab_ref[fb + 4:fb + 5, 0:H]
        b_2   = fslab_ref[fb + 5:fb + 6, 0:H]
        ln2_g = fslab_ref[fb + 6:fb + 7, 0:H]
        ln2_b = fslab_ref[fb + 7:fb + 8, 0:H]

        # fused QKV projection
        qkv = jnp.dot(x2, Wl[:, WC_QKV:WC_QKV + 3 * H],
                      preferred_element_type=jnp.float32) + b_qkv          # [BS, 3H]

        # per-head attention: direct lane slices of qkv, no axis-0 fold/unfold concats
        ctx_heads = []
        for h in range(NH):
            q_h = qkv[:, h * HD:(h + 1) * HD].reshape(B, S, HD)
            k_h = qkv[:, H + h * HD:H + (h + 1) * HD].reshape(B, S, HD)
            v_h = qkv[:, 2 * H + h * HD:2 * H + (h + 1) * HD].reshape(B, S, HD)
            s = jnp.einsum('bqd,bkd->bqk', q_h, k_h,
                           preferred_element_type=jnp.float32) * scale + amask   # [B, S, S]
            # No max-subtraction: logits are bounded and every row has >=1 unmasked token.
            p = jnp.exp(s)
            p = p * pl.reciprocal(jnp.sum(p, axis=-1, keepdims=True), approx=True)
            ctx_heads.append(jnp.einsum('bqk,bkd->bqd', p, v_h,
                                        preferred_element_type=jnp.float32))     # [B, S, HD]
        ctx = jnp.concatenate(ctx_heads, axis=-1).reshape(BS, H)          # [BS, H]

        attn = jnp.dot(ctx, Wl[:, WC_O:WC_O + H],
                       preferred_element_type=jnp.float32) + b_o
        h1 = _layernorm(x2 + attn, ln1_g, ln1_b)

        ff = jnp.dot(h1, Wl[:, WC_F1:WC_F1 + I],
                     preferred_element_type=jnp.float32) + b_1
        # TODO(synk): HF/PyTorch BERT default is exact (erf) GELU; tanh approximation used here.
        ff = jax.nn.gelu(ff, approximate=True)
        w2t = Wl[:, WC_F2T:WC_F2T + I]                                    # [H, I] == W_ff2.T
        ff2 = jax.lax.dot_general(ff, w2t,
                                  dimension_numbers=(((1,), (1,)), ((), ())),
                                  preferred_element_type=jnp.float32) + b_2      # [BS, H]
        x2 = _layernorm(h1 + ff2, ln2_g, ln2_b)

    # ---- CLS -> pooler tanh -> Dropout(p=0.3, eval => identity) -> classifier (lane-padded) ----
    Wh = wslab_ref[N_LAYERS].astype(jnp.float32)                          # [H, W_COLS]
    pool_w = Wh[:, 0:H]
    out_w = Wh[:, H:H + LANE_OUT]
    pool_b = fslab_ref[FR_HEAD:FR_HEAD + 1, 0:H]
    out_b = fslab_ref[FR_HEAD + 1:FR_HEAD + 2, 0:LANE_OUT]

    cls = x2.reshape(B, S, H)[:, 0:1, :].reshape(B, H)
    pooled = jnp.tanh(jnp.dot(cls, pool_w, preferred_element_type=jnp.float32) + pool_b)
    logits_ref[...] = jnp.dot(pooled, out_w, preferred_element_type=jnp.float32) + out_b


# ---------------- parameters (deterministic synthetic init) ----------------
def init_params(key):
    def dense(k, shape):
        return (jax.random.normal(k, shape, jnp.float32) * 0.02).astype(jnp.float32)

    keys = jax.random.split(key, 8 + N_LAYERS)
    params = {
        'word_emb': dense(keys[0], (VOCAB, HIDDEN)),
        'pos_emb': dense(keys[1], (MAX_POS, HIDDEN)),
        'type_emb': dense(keys[2], (N_TYPES, HIDDEN)),
        'emb_ln_g': jnp.ones((HIDDEN,), jnp.float32),
        'emb_ln_b': jnp.zeros((HIDDEN,), jnp.float32),
        'pool_w': dense(keys[3], (HIDDEN, HIDDEN)),
        'pool_b': jnp.zeros((1, HIDDEN), jnp.float32),
        'out_w': dense(keys[4], (HIDDEN, N_CLASSES)),
        'out_b': jnp.zeros((1, N_CLASSES), jnp.float32),
        'layers': [],
    }
    for l in range(N_LAYERS):
        lk = jax.random.split(keys[5 + l], 6)
        params['layers'].append({
            'wq': dense(lk[0], (HIDDEN, HIDDEN)), 'bq': jnp.zeros((1, HIDDEN), jnp.float32),
            'wk': dense(lk[1], (HIDDEN, HIDDEN)), 'bk': jnp.zeros((1, HIDDEN), jnp.float32),
            'wv': dense(lk[2], (HIDDEN, HIDDEN)), 'bv': jnp.zeros((1, HIDDEN), jnp.float32),
            'wo': dense(lk[3], (HIDDEN, HIDDEN)), 'bo': jnp.zeros((1, HIDDEN), jnp.float32),
            'ln1_g': jnp.ones((1, HIDDEN), jnp.float32),
            'ln1_b': jnp.zeros((1, HIDDEN), jnp.float32),
            'w1': dense(lk[4], (HIDDEN, INTER)), 'b1': jnp.zeros((1, INTER), jnp.float32),
            'w2': dense(lk[5], (INTER, HIDDEN)), 'b2': jnp.zeros((1, HIDDEN), jnp.float32),
            'ln2_g': jnp.ones((1, HIDDEN), jnp.float32),
            'ln2_b': jnp.zeros((1, HIDDEN), jnp.float32),
        })
    return params


# ---------------- one-time prepack: build the two kernel slabs (NOT on the per-call path) ----------------
def prepack_params(params):
    H, I, L = HIDDEN, INTER, N_LAYERS

    wslab = jnp.zeros((L + 1, H, W_COLS), jnp.float32)
    for l, lp in enumerate(params['layers']):
        wqkv = jnp.concatenate([lp['wq'], lp['wk'], lp['wv']], axis=1)    # [H, 3H]
        wslab = wslab.at[l, :, WC_QKV:WC_QKV + 3 * H].set(wqkv)
        wslab = wslab.at[l, :, WC_O:WC_O + H].set(lp['wo'])
        wslab = wslab.at[l, :, WC_F1:WC_F1 + I].set(lp['w1'])
        wslab = wslab.at[l, :, WC_F2T:WC_F2T + I].set(lp['w2'].T)
    wslab = wslab.at[L, :, 0:H].set(params['pool_w'])
    wslab = wslab.at[L, :, H:H + N_CLASSES].set(params['out_w'])
    wslab = wslab.astype(jnp.bfloat16)

    fslab = jnp.zeros((F_ROWS, F_COLS), jnp.float32)
    fslab = fslab.at[FR_WEMB:FR_WEMB + VOCAB, 0:H].set(params['word_emb'])
    emb_add = params['pos_emb'] + params['type_emb'][0][None, :]          # type id 0 for all tokens
    fslab = fslab.at[FR_EMB_ADD:FR_EMB_ADD + MAX_POS, 0:H].set(emb_add)
    fslab = fslab.at[FR_EMB_LN, 0:H].set(params['emb_ln_g'])
    fslab = fslab.at[FR_EMB_LN + 1, 0:H].set(params['emb_ln_b'])
    for l, lp in enumerate(params['layers']):
        r = FR_LAYER + 8 * l
        bqkv = jnp.concatenate([lp['bq'], lp['bk'], lp['bv']], axis=1)    # [1, 3H]
        fslab = fslab.at[r + 0, 0:3 * H].set(bqkv[0])
        fslab = fslab.at[r + 1, 0:I].set(lp['b1'][0])
        fslab = fslab.at[r + 2, 0:H].set(lp['bo'][0])
        fslab = fslab.at[r + 3, 0:H].set(lp['ln1_g'][0])
        fslab = fslab.at[r + 4, 0:H].set(lp['ln1_b'][0])
        fslab = fslab.at[r + 5, 0:H].set(lp['b2'][0])
        fslab = fslab.at[r + 6, 0:H].set(lp['ln2_g'][0])
        fslab = fslab.at[r + 7, 0:H].set(lp['ln2_b'][0])
    fslab = fslab.at[FR_HEAD, 0:H].set(params['pool_b'][0])
    fslab = fslab.at[FR_HEAD + 1, 0:N_CLASSES].set(params['out_b'][0])

    return {'wslab': wslab, 'fslab': fslab}


# ---------------- full forward: SarcasmDetector.forward(input_ids, attention_mask) ----------------
def sarcasm_detector_forward(packed, input_ids, attention_mask):
    B, _ = input_ids.shape
    logits_pad = pl.pallas_call(
        fused_bert_kernel,
        out_shape=jax.ShapeDtypeStruct((B, LANE_OUT), jnp.float32),
    )(input_ids.astype(jnp.int32), attention_mask.astype(jnp.int32),
      packed['wslab'], packed['fslab'])
    return logits_pad[:, :N_CLASSES]


if __name__ == "__main__":
    key = jax.random.PRNGKey(0)
    pkey, ikey = jax.random.split(key)
    params = init_params(pkey)
    packed = prepack_params(params)                      # one-time weight prepack
    packed = jax.tree_util.tree_map(jax.block_until_ready, packed)

    B, S = 2, 8
    input_ids = jax.random.randint(ikey, (B, S), 0, VOCAB, dtype=jnp.int32)
    attention_mask = jnp.array([[1, 1, 1, 1, 1, 1, 1, 1],
                                [1, 1, 1, 1, 1, 0, 0, 0]], dtype=jnp.int32)

    logits = jax.jit(sarcasm_detector_forward)(packed, input_ids, attention_mask)
    jax.block_until_ready(logits)
    assert logits.shape == (B, N_CLASSES)
    print("KERNEL_OK")
</pallas_src>

<mosaic_0001>
module attributes {stable_mosaic.version = 11 : i64} {
  func.func @fused_bert_kernel(%arg0: memref<2x8xi32, #tpu.memory_space<vmem>>, %arg1: memref<2x8xi32, #tpu.memory_space<vmem>>, %arg2: memref<3x32x256xbf16, #tpu.memory_space<vmem>>, %arg3: memref<176x128xf32, #tpu.memory_space<vmem>>, %arg4: memref<2x128xf32, #tpu.memory_space<vmem>>) attributes {dimension_semantics = [], scalar_prefetch = 0 : i64, scratch_operands = 0 : i64, tpu.core_type = #tpu.core_type<tc>} {
    %c0 = arith.constant 0 : index
    %c0_0 = arith.constant 0 : index
    %0 = vector.load %arg0[%c0, %c0_0] : memref<2x8xi32, #tpu.memory_space<vmem>>, vector<2x8xi32>
    %1 = tpu.iota {dimensions = array<i32: 2>} : vector<2x8x128xi32>
    %2 = vector.shape_cast %0 : vector<2x8xi32> to vector<2x8x1xi32>
    %3 = vector.broadcast %2 : vector<2x8x1xi32> to vector<2x8x128xi32>
    %4 = arith.cmpi eq, %3, %1 : vector<2x8x128xi32>
    %5 = arith.extui %4 : vector<2x8x128xi1> to vector<2x8x128xi32>
    %6 = arith.sitofp %5 : vector<2x8x128xi32> to vector<2x8x128xf32>
    %7 = vector.shape_cast %6 : vector<2x8x128xf32> to vector<16x128xf32>
    %c0_1 = arith.constant 0 : index
    %c0_2 = arith.constant 0 : index
    %8 = vector.load %arg3[%c0_1, %c0_2] : memref<176x128xf32, #tpu.memory_space<vmem>>, vector<128x32xf32>
    %cst = arith.constant dense<0.000000e+00> : vector<16x32xf32>
    %9 = tpu.matmul %7, %8, %cst {dimension_numbers = #tpu.dot_dimension_numbers<[1], [0], [0], [1], [0, 0, 1, 1], [], []>} : vector<16x128xf32>, vector<128x32xf32>, vector<16x32xf32> -> vector<16x32xf32>
    %c128 = arith.constant 128 : index
    %c0_3 = arith.constant 0 : index
    %10 = vector.load %arg3[%c128, %c0_3] : memref<176x128xf32, #tpu.memory_space<vmem>>, vector<8x32xf32>
    %11 = vector.shape_cast %9 : vector<16x32xf32> to vector<2x8x32xf32>
    %12 = vector.shape_cast %10 : vector<8x32xf32> to vector<1x8x32xf32>
    %13 = vector.broadcast %12 : vector<1x8x32xf32> to vector<2x8x32xf32>
    %14 = arith.addf %11, %13 : vector<2x8x32xf32>
    %15 = vector.shape_cast %14 : vector<2x8x32xf32> to vector<16x32xf32>
    %c144 = arith.constant 144 : index
    %c0_4 = arith.constant 0 : index
    %16 = vector.load %arg3[%c144, %c0_4] : memref<176x128xf32, #tpu.memory_space<vmem>>, vector<1x32xf32>
    %c145 = arith.constant 145 : index
    %c0_5 = arith.constant 0 : index
    %17 = vector.load %arg3[%c145, %c0_5] : memref<176x128xf32, #tpu.memory_space<vmem>>, vector<1x32xf32>
    %cst_6 = arith.constant dense<0.000000e+00> : vector<16xf32>
    %18 = vector.multi_reduction <add>, %15, %cst_6 [1] : vector<16x32xf32> to vector<16xf32>
    %19 = vector.shape_cast %18 : vector<16xf32> to vector<16x1xf32>
    %cst_7 = arith.constant 3.200000e+01 : f32
    %20 = vector.broadcast %cst_7 : f32 to vector<16x1xf32>
    %21 = arith.divf %19, %20 : vector<16x1xf32>
    %22 = vector.broadcast %21 : vector<16x1xf32> to vector<16x32xf32>
    %23 = arith.subf %15, %22 : vector<16x32xf32>
    %24 = arith.mulf %23, %23 : vector<16x32xf32>
    %cst_8 = arith.constant dense<0.000000e+00> : vector<16xf32>
    %25 = vector.multi_reduction <add>, %24, %cst_8 [1] : vector<16x32xf32> to vector<16xf32>
    %26 = vector.shape_cast %25 : vector<16xf32> to vector<16x1xf32>
    %cst_9 = arith.constant 3.200000e+01 : f32
    %27 = vector.broadcast %cst_9 : f32 to vector<16x1xf32>
    %28 = arith.divf %26, %27 : vector<16x1xf32>
    %29 = vector.broadcast %21 : vector<16x1xf32> to vector<16x32xf32>
    %30 = arith.subf %15, %29 : vector<16x32xf32>
    %cst_10 = arith.constant 9.99999996E-13 : f32
    %31 = vector.broadcast %cst_10 : f32 to vector<16x1xf32>
    %32 = arith.addf %28, %31 : vector<16x1xf32>
    %33 = math.rsqrt %32 : vector<16x1xf32>
    %34 = vector.broadcast %33 : vector<16x1xf32> to vector<16x32xf32>
    %35 = arith.mulf %30, %34 : vector<16x32xf32>
    %36 = vector.broadcast %16 : vector<1x32xf32> to vector<16x32xf32>
    %37 = arith.mulf %35, %36 : vector<16x32xf32>
    %38 = vector.broadcast %17 : vector<1x32xf32> to vector<16x32xf32>
    %39 = arith.addf %37, %38 : vector<16x32xf32>
    %c0_11 = arith.constant 0 : index
    %c0_12 = arith.constant 0 : index
    %40 = vector.load %arg1[%c0_11, %c0_12] : memref<2x8xi32, #tpu.memory_space<vmem>>, vector<2x8xi32>
    %41 = arith.sitofp %40 : vector<2x8xi32> to vector<2x8xf32>
    %cst_13 = arith.constant 1.000000e+00 : f32
    %42 = vector.broadcast %cst_13 : f32 to vector<2x8xf32>
    %43 = arith.subf %42, %41 : vector<2x8xf32>
    %44 = vector.shape_cast %43 : vector<2x8xf32> to vector<2x1x8xf32>
    %cst_14 = arith.constant -1.000000e+04 : f32
    %45 = vector.broadcast %cst_14 : f32 to vector<2x1x8xf32>
    %46 = arith.mulf %44, %45 : vector<2x1x8xf32>
    %c0_15 = arith.constant 0 : index
    %c0_16 = arith.constant 0 : index
    %c0_17 = arith.constant 0 : index
    %47 = vector.load %arg2[%c0_15, %c0_16, %c0_17] : memref<3x32x256xbf16, #tpu.memory_space<vmem>>, vector<1x32x256xbf16>
    %48 = vector.shape_cast %47 : vector<1x32x256xbf16> to vector<32x256xbf16>
    %49 = arith.extf %48 : vector<32x256xbf16> to vector<32x256xf32>
    %c152 = arith.constant 152 : index
    %c0_18 = arith.constant 0 : index
    %50 = vector.load %arg3[%c152, %c0_18] : memref<176x128xf32, #tpu.memory_space<vmem>>, vector<1x96xf32>
    %c153 = arith.constant 153 : index
    %c0_19 = arith.constant 0 : index
    %51 = vector.load %arg3[%c153, %c0_19] : memref<176x128xf32, #tpu.memory_space<vmem>>, vector<1x64xf32>
    %c154 = arith.constant 154 : index
    %c0_20 = arith.constant 0 : index
    %52 = vector.load %arg3[%c154, %c0_20] : memref<176x128xf32, #tpu.memory_space<vmem>>, vector<1x32xf32>
    %c155 = arith.constant 155 : index
    %c0_21 = arith.constant 0 : index
    %53 = vector.load %arg3[%c155, %c0_21] : memref<176x128xf32, #tpu.memory_space<vmem>>, vector<1x32xf32>
    %c156 = arith.constant 156 : index
    %c0_22 = arith.constant 0 : index
    %54 = vector.load %arg3[%c156, %c0_22] : memref<176x128xf32, #tpu.memory_space<vmem>>, vector<1x32xf32>
    %c157 = arith.constant 157 : index
    %c0_23 = arith.constant 0 : index
    %55 = vector.load %arg3[%c157, %c0_23] : memref<176x128xf32, #tpu.memory_space<vmem>>, vector<1x32xf32>
    %c158 = arith.constant 158 : index
    %c0_24 = arith.constant 0 : index
    %56 = vector.load %arg3[%c158, %c0_24] : memref<176x128xf32, #tpu.memory_space<vmem>>, vector<1x32xf32>
    %c159 = arith.constant 159 : index
    %c0_25 = arith.constant 0 : index
    %57 = vector.load %arg3[%c159, %c0_25] : memref<176x128xf32, #tpu.memory_space<vmem>>, vector<1x32xf32>
    %58 = vector.extract_strided_slice %49 {offsets = [0, 0], sizes = [32, 96], strides = [1, 1]} : vector<32x256xf32> to vector<32x96xf32>
    %cst_26 = arith.constant dense<0.000000e+00> : vector<16x96xf32>
    %59 = tpu.matmul %39, %58, %cst_26 {dimension_numbers = #tpu.dot_dimension_numbers<[1], [0], [0], [1], [0, 0, 1, 1], [], []>} : vector<16x32xf32>, vector<32x96xf32>, vector<16x96xf32> -> vector<16x96xf32>
    %60 = vector.broadcast %50 : vector<1x96xf32> to vector<16x96xf32>
    %61 = arith.addf %59, %60 : vector<16x96xf32>
    %62 = vector.extract_strided_slice %61 {offsets = [0, 0], sizes = [16, 16], strides = [1, 1]} : vector<16x96xf32> to vector<16x16xf32>
    %63 = vector.shape_cast %62 : vector<16x16xf32> to vector<2x8x16xf32>
    %64 = vector.extract_strided_slice %61 {offsets = [0, 32], sizes = [16, 16], strides = [1, 1]} : vector<16x96xf32> to vector<16x16xf32>
    %65 = vector.shape_cast %64 : vector<16x16xf32> to vector<2x8x16xf32>
    %66 = vector.extract_strided_slice %61 {offsets = [0, 64], sizes = [16, 16], strides = [1, 1]} : vector<16x96xf32> to vector<16x16xf32>
    %67 = vector.shape_cast %66 : vector<16x16xf32> to vector<2x8x16xf32>
    "tpu.trace_start"() <{level = 10 : i32, message = "bqd,bkd->bqk"}> : () -> ()
    %cst_27 = arith.constant dense<0.000000e+00> : vector<2x8x8xf32>
    %68 = tpu.matmul %63, %65, %cst_27 {dimension_numbers = #tpu.dot_dimension_numbers<[2], [2], [1], [1], [0, 0, 0, 1, 1, 1], [0], [0]>} : vector<2x8x16xf32>, vector<2x8x16xf32>, vector<2x8x8xf32> -> vector<2x8x8xf32>
    "tpu.trace_stop"() : () -> ()
    %cst_28 = arith.constant 2.500000e-01 : f32
    %69 = vector.broadcast %cst_28 : f32 to vector<2x8x8xf32>
    %70 = arith.mulf %68, %69 : vector<2x8x8xf32>
    %71 = vector.broadcast %46 : vector<2x1x8xf32> to vector<2x8x8xf32>
    %72 = arith.addf %70, %71 : vector<2x8x8xf32>
    %73 = math.exp %72 : vector<2x8x8xf32>
    %cst_29 = arith.constant dense<0.000000e+00> : vector<2x8xf32>
    %74 = vector.multi_reduction <add>, %73, %cst_29 [2] : vector<2x8x8xf32> to vector<2x8xf32>
    %75 = vector.shape_cast %74 : vector<2x8xf32> to vector<2x8x1xf32>
    %76 = tpu.reciprocal %75 {approx = true} : vector<2x8x1xf32> -> vector<2x8x1xf32>
    %77 = vector.broadcast %76 : vector<2x8x1xf32> to vector<2x8x8xf32>
    %78 = arith.mulf %73, %77 : vector<2x8x8xf32>
    "tpu.trace_start"() <{level = 10 : i32, message = "bqk,bkd->bqd"}> : () -> ()
    %cst_30 = arith.constant dense<0.000000e+00> : vector<2x8x16xf32>
    %79 = tpu.matmul %78, %67, %cst_30 {dimension_numbers = #tpu.dot_dimension_numbers<[2], [1], [1], [2], [0, 0, 0, 1, 1, 2], [0], [0]>} : vector<2x8x8xf32>, vector<2x8x16xf32>, vector<2x8x16xf32> -> vector<2x8x16xf32>
    "tpu.trace_stop"() : () -> ()
    %80 = vector.extract_strided_slice %61 {offsets = [0, 16], sizes = [16, 16], strides = [1, 1]} : vector<16x96xf32> to vector<16x16xf32>
    %81 = vector.shape_cast %80 : vector<16x16xf32> to vector<2x8x16xf32>
    %82 = vector.extract_strided_slice %61 {offsets = [0, 48], sizes = [16, 16], strides = [1, 1]} : vector<16x96xf32> to vector<16x16xf32>
    %83 = vector.shape_cast %82 : vector<16x16xf32> to vector<2x8x16xf32>
    %84 = vector.extract_strided_slice %61 {offsets = [0, 80], sizes = [16, 16], strides = [1, 1]} : vector<16x96xf32> to vector<16x16xf32>
    %85 = vector.shape_cast %84 : vector<16x16xf32> to vector<2x8x16xf32>
    "tpu.trace_start"() <{level = 10 : i32, message = "bqd,bkd->bqk"}> : () -> ()
    %cst_31 = arith.constant dense<0.000000e+00> : vector<2x8x8xf32>
    %86 = tpu.matmul %81, %83, %cst_31 {dimension_numbers = #tpu.dot_dimension_numbers<[2], [2], [1], [1], [0, 0, 0, 1, 1, 1], [0], [0]>} : vector<2x8x16xf32>, vector<2x8x16xf32>, vector<2x8x8xf32> -> vector<2x8x8xf32>
    "tpu.trace_stop"() : () -> ()
    %cst_32 = arith.constant 2.500000e-01 : f32
    %87 = vector.broadcast %cst_32 : f32 to vector<2x8x8xf32>
    %88 = arith.mulf %86, %87 : vector<2x8x8xf32>
    %89 = vector.broadcast %46 : vector<2x1x8xf32> to vector<2x8x8xf32>
    %90 = arith.addf %88, %89 : vector<2x8x8xf32>
    %91 = math.exp %90 : vector<2x8x8xf32>
    %cst_33 = arith.constant dense<0.000000e+00> : vector<2x8xf32>
    %92 = vector.multi_reduction <add>, %91, %cst_33 [2] : vector<2x8x8xf32> to vector<2x8xf32>
    %93 = vector.shape_cast %92 : vector<2x8xf32> to vector<2x8x1xf32>
    %94 = tpu.reciprocal %93 {approx = true} : vector<2x8x1xf32> -> vector<2x8x1xf32>
    %95 = vector.broadcast %94 : vector<2x8x1xf32> to vector<2x8x8xf32>
    %96 = arith.mulf %91, %95 : vector<2x8x8xf32>
    "tpu.trace_start"() <{level = 10 : i32, message = "bqk,bkd->bqd"}> : () -> ()
    %cst_34 = arith.constant dense<0.000000e+00> : vector<2x8x16xf32>
    %97 = tpu.matmul %96, %85, %cst_34 {dimension_numbers = #tpu.dot_dimension_numbers<[2], [1], [1], [2], [0, 0, 0, 1, 1, 2], [0], [0]>} : vector<2x8x8xf32>, vector<2x8x16xf32>, vector<2x8x16xf32> -> vector<2x8x16xf32>
    "tpu.trace_stop"() : () -> ()
    %98 = tpu.concatenate %79, %97 in 2 : vector<2x8x16xf32>, vector<2x8x16xf32> -> vector<2x8x32xf32>
    %99 = vector.shape_cast %98 : vector<2x8x32xf32> to vector<16x32xf32>
    %100 = vector.extract_strided_slice %49 {offsets = [0, 96], sizes = [32, 32], strides = [1, 1]} : vector<32x256xf32> to vector<32x32xf32>
    %cst_35 = arith.constant dense<0.000000e+00> : vector<16x32xf32>
    %101 = tpu.matmul %99, %100, %cst_35 {dimension_numbers = #tpu.dot_dimension_numbers<[1], [0], [0], [1], [0, 0, 1, 1], [], []>} : vector<16x32xf32>, vector<32x32xf32>, vector<16x32xf32> -> vector<16x32xf32>
    %102 = vector.broadcast %52 : vector<1x32xf32> to vector<16x32xf32>
    %103 = arith.addf %101, %102 : vector<16x32xf32>
    %104 = arith.addf %39, %103 : vector<16x32xf32>
    %cst_36 = arith.constant dense<0.000000e+00> : vector<16xf32>
    %105 = vector.multi_reduction <add>, %104, %cst_36 [1] : vector<16x32xf32> to vector<16xf32>
    %106 = vector.shape_cast %105 : vector<16xf32> to vector<16x1xf32>
    %cst_37 = arith.constant 3.200000e+01 : f32
    %107 = vector.broadcast %cst_37 : f32 to vector<16x1xf32>
    %108 = arith.divf %106, %107 : vector<16x1xf32>
    %109 = vector.broadcast %108 : vector<16x1xf32> to vector<16x32xf32>
    %110 = arith.subf %104, %109 : vector<16x32xf32>
    %111 = arith.mulf %110, %110 : vector<16x32xf32>
    %cst_38 = arith.constant dense<0.000000e+00> : vector<16xf32>
    %112 = vector.multi_reduction <add>, %111, %cst_38 [1] : vector<16x32xf32> to vector<16xf32>
    %113 = vector.shape_cast %112 : vector<16xf32> to vector<16x1xf32>
    %cst_39 = arith.constant 3.200000e+01 : f32
    %114 = vector.broadcast %cst_39 : f32 to vector<16x1xf32>
    %115 = arith.divf %113, %114 : vector<16x1xf32>
    %116 = vector.broadcast %108 : vector<16x1xf32> to vector<16x32xf32>
    %117 = arith.subf %104, %116 : vector<16x32xf32>
    %cst_40 = arith.constant 9.99999996E-13 : f32
    %118 = vector.broadcast %cst_40 : f32 to vector<16x1xf32>
    %119 = arith.addf %115, %118 : vector<16x1xf32>
    %120 = math.rsqrt %119 : vector<16x1xf32>
    %121 = vector.broadcast %120 : vector<16x1xf32> to vector<16x32xf32>
    %122 = arith.mulf %117, %121 : vector<16x32xf32>
    %123 = vector.broadcast %53 : vector<1x32xf32> to vector<16x32xf32>
    %124 = arith.mulf %122, %123 : vector<16x32xf32>
    %125 = vector.broadcast %54 : vector<1x32xf32> to vector<16x32xf32>
    %126 = arith.addf %124, %125 : vector<16x32xf32>
    %127 = vector.extract_strided_slice %49 {offsets = [0, 128], sizes = [32, 64], strides = [1, 1]} : vector<32x256xf32> to vector<32x64xf32>
    %cst_41 = arith.constant dense<0.000000e+00> : vector<16x64xf32>
    %128 = tpu.matmul %126, %127, %cst_41 {dimension_numbers = #tpu.dot_dimension_numbers<[1], [0], [0], [1], [0, 0, 1, 1], [], []>} : vector<16x32xf32>, vector<32x64xf32>, vector<16x64xf32> -> vector<16x64xf32>
    %129 = vector.broadcast %51 : vector<1x64xf32> to vector<16x64xf32>
    %130 = arith.addf %128, %129 : vector<16x64xf32>
    %131 = arith.mulf %130, %130 : vector<16x64xf32>
    %132 = arith.mulf %130, %131 : vector<16x64xf32>
    %cst_42 = arith.constant 4.471500e-02 : f32
    %133 = vector.broadcast %cst_42 : f32 to vector<16x64xf32>
    %134 = arith.mulf %133, %132 : vector<16x64xf32>
    %135 = arith.addf %130, %134 : vector<16x64xf32>
    %cst_43 = arith.constant 0.797884583 : f32
    %136 = vector.broadcast %cst_43 : f32 to vector<16x64xf32>
    %137 = arith.mulf %136, %135 : vector<16x64xf32>
    %138 = math.tanh %137 : vector<16x64xf32>
    %cst_44 = arith.constant 1.000000e+00 : f32
    %139 = vector.broadcast %cst_44 : f32 to vector<16x64xf32>
    %140 = arith.addf %139, %138 : vector<16x64xf32>
    %cst_45 = arith.constant 5.000000e-01 : f32
    %141 = vector.broadcast %cst_45 : f32 to vector<16x64xf32>
    %142 = arith.mulf %141, %140 : vector<16x64xf32>
    %143 = arith.mulf %130, %142 : vector<16x64xf32>
    %144 = vector.extract_strided_slice %49 {offsets = [0, 192], sizes = [32, 64], strides = [1, 1]} : vector<32x256xf32> to vector<32x64xf32>
    %cst_46 = arith.constant dense<0.000000e+00> : vector<16x32xf32>
    %145 = tpu.matmul %143, %144, %cst_46 {dimension_numbers = #tpu.dot_dimension_numbers<[1], [1], [0], [0], [0, 0, 1, 0], [], []>} : vector<16x64xf32>, vector<32x64xf32>, vector<16x32xf32> -> vector<16x32xf32>
    %146 = vector.broadcast %55 : vector<1x32xf32> to vector<16x32xf32>
    %147 = arith.addf %145, %146 : vector<16x32xf32>
    %148 = arith.addf %126, %147 : vector<16x32xf32>
    %cst_47 = arith.constant dense<0.000000e+00> : vector<16xf32>
    %149 = vector.multi_reduction <add>, %148, %cst_47 [1] : vector<16x32xf32> to vector<16xf32>
    %150 = vector.shape_cast %149 : vector<16xf32> to vector<16x1xf32>
    %cst_48 = arith.constant 3.200000e+01 : f32
    %151 = vector.broadcast %cst_48 : f32 to vector<16x1xf32>
    %152 = arith.divf %150, %151 : vector<16x1xf32>
    %153 = vector.broadcast %152 : vector<16x1xf32> to vector<16x32xf32>
    %154 = arith.subf %148, %153 : vector<16x32xf32>
    %155 = arith.mulf %154, %154 : vector<16x32xf32>
    %cst_49 = arith.constant dense<0.000000e+00> : vector<16xf32>
    %156 = vector.multi_reduction <add>, %155, %cst_49 [1] : vector<16x32xf32> to vector<16xf32>
    %157 = vector.shape_cast %156 : vector<16xf32> to vector<16x1xf32>
    %cst_50 = arith.constant 3.200000e+01 : f32
    %158 = vector.broadcast %cst_50 : f32 to vector<16x1xf32>
    %159 = arith.divf %157, %158 : vector<16x1xf32>
    %160 = vector.broadcast %152 : vector<16x1xf32> to vector<16x32xf32>
    %161 = arith.subf %148, %160 : vector<16x32xf32>
    %cst_51 = arith.constant 9.99999996E-13 : f32
    %162 = vector.broadcast %cst_51 : f32 to vector<16x1xf32>
    %163 = arith.addf %159, %162 : vector<16x1xf32>
    %164 = math.rsqrt %163 : vector<16x1xf32>
    %165 = vector.broadcast %164 : vector<16x1xf32> to vector<16x32xf32>
    %166 = arith.mulf %161, %165 : vector<16x32xf32>
    %167 = vector.broadcast %56 : vector<1x32xf32> to vector<16x32xf32>
    %168 = arith.mulf %166, %167 : vector<16x32xf32>
    %169 = vector.broadcast %57 : vector<1x32xf32> to vector<16x32xf32>
    %170 = arith.addf %168, %169 : vector<16x32xf32>
    %c1 = arith.constant 1 : index
    %c0_52 = arith.constant 0 : index
    %c0_53 = arith.constant 0 : index
    %171 = vector.load %arg2[%c1, %c0_52, %c0_53] : memref<3x32x256xbf16, #tpu.memory_space<vmem>>, vector<1x32x256xbf16>
    %172 = vector.shape_cast %171 : vector<1x32x256xbf16> to vector<32x256xbf16>
    %173 = arith.extf %172 : vector<32x256xbf16> to vector<32x256xf32>
    %c160 = arith.constant 160 : index
    %c0_54 = arith.constant 0 : index
    %174 = vector.load %arg3[%c160, %c0_54] : memref<176x128xf32, #tpu.memory_space<vmem>>, vector<1x96xf32>
    %c161 = arith.constant 161 : index
    %c0_55 = arith.constant 0 : index
    %175 = vector.load %arg3[%c161, %c0_55] : memref<176x128xf32, #tpu.memory_space<vmem>>, vector<1x64xf32>
    %c162 = arith.constant 162 : index
    %c0_56 = arith.constant 0 : index
    %176 = vector.load %arg3[%c162, %c0_56] : memref<176x128xf32, #tpu.memory_space<vmem>>, vector<1x32xf32>
    %c163 = arith.constant 163 : index
    %c0_57 = arith.constant 0 : index
    %177 = vector.load %arg3[%c163, %c0_57] : memref<176x128xf32, #tpu.memory_space<vmem>>, vector<1x32xf32>
    %c164 = arith.constant 164 : index
    %c0_58 = arith.constant 0 : index
    %178 = vector.load %arg3[%c164, %c0_58] : memref<176x128xf32, #tpu.memory_space<vmem>>, vector<1x32xf32>
    %c165 = arith.constant 165 : index
    %c0_59 = arith.constant 0 : index
    %179 = vector.load %arg3[%c165, %c0_59] : memref<176x128xf32, #tpu.memory_space<vmem>>, vector<1x32xf32>
    %c166 = arith.constant 166 : index
    %c0_60 = arith.constant 0 : index
    %180 = vector.load %arg3[%c166, %c0_60] : memref<176x128xf32, #tpu.memory_space<vmem>>, vector<1x32xf32>
    %c167 = arith.constant 167 : index
    %c0_61 = arith.constant 0 : index
    %181 = vector.load %arg3[%c167, %c0_61] : memref<176x128xf32, #tpu.memory_space<vmem>>, vector<1x32xf32>
    %182 = vector.extract_strided_slice %173 {offsets = [0, 0], sizes = [32, 96], strides = [1, 1]} : vector<32x256xf32> to vector<32x96xf32>
    %cst_62 = arith.constant dense<0.000000e+00> : vector<16x96xf32>
    %183 = tpu.matmul %170, %182, %cst_62 {dimension_numbers = #tpu.dot_dimension_numbers<[1], [0], [0], [1], [0, 0, 1, 1], [], []>} : vector<16x32xf32>, vector<32x96xf32>, vector<16x96xf32> -> vector<16x96xf32>
    %184 = vector.broadcast %174 : vector<1x96xf32> to vector<16x96xf32>
    %185 = arith.addf %183, %184 : vector<16x96xf32>
    %186 = vector.extract_strided_slice %185 {offsets = [0, 0], sizes = [16, 16], strides = [1, 1]} : vector<16x96xf32> to vector<16x16xf32>
    %187 = vector.shape_cast %186 : vector<16x16xf32> to vector<2x8x16xf32>
    %188 = vector.extract_strided_slice %185 {offsets = [0, 32], sizes = [16, 16], strides = [1, 1]} : vector<16x96xf32> to vector<16x16xf32>
    %189 = vector.shape_cast %188 : vector<16x16xf32> to vector<2x8x16xf32>
    %190 = vector.extract_strided_slice %185 {offsets = [0, 64], sizes = [16, 16], strides = [1, 1]} : vector<16x96xf32> to vector<16x16xf32>
    %191 = vector.shape_cast %190 : vector<16x16xf32> to vector<2x8x16xf32>
    "tpu.trace_start"() <{level = 10 : i32, message = "bqd,bkd->bqk"}> : () -> ()
    %cst_63 = arith.constant dense<0.000000e+00> : vector<2x8x8xf32>
    %192 = tpu.matmul %187, %189, %cst_63 {dimension_numbers = #tpu.dot_dimension_numbers<[2], [2], [1], [1], [0, 0, 0, 1, 1, 1], [0], [0]>} : vector<2x8x16xf32>, vector<2x8x16xf32>, vector<2x8x8xf32> -> vector<2x8x8xf32>
    "tpu.trace_stop"() : () -> ()
    %cst_64 = arith.constant 2.500000e-01 : f32
    %193 = vector.broadcast %cst_64 : f32 to vector<2x8x8xf32>
    %194 = arith.mulf %192, %193 : vector<2x8x8xf32>
    %195 = vector.broadcast %46 : vector<2x1x8xf32> to vector<2x8x8xf32>
    %196 = arith.addf %194, %195 : vector<2x8x8xf32>
    %197 = math.exp %196 : vector<2x8x8xf32>
    %cst_65 = arith.constant dense<0.000000e+00> : vector<2x8xf32>
    %198 = vector.multi_reduction <add>, %197, %cst_65 [2] : vector<2x8x8xf32> to vector<2x8xf32>
    %199 = vector.shape_cast %198 : vector<2x8xf32> to vector<2x8x1xf32>
    %200 = tpu.reciprocal %199 {approx = true} : vector<2x8x1xf32> -> vector<2x8x1xf32>
    %201 = vector.broadcast %200 : vector<2x8x1xf32> to vector<2x8x8xf32>
    %202 = arith.mulf %197, %201 : vector<2x8x8xf32>
    "tpu.trace_start"() <{level = 10 : i32, message = "bqk,bkd->bqd"}> : () -> ()
    %cst_66 = arith.constant dense<0.000000e+00> : vector<2x8x16xf32>
    %203 = tpu.matmul %202, %191, %cst_66 {dimension_numbers = #tpu.dot_dimension_numbers<[2], [1], [1], [2], [0, 0, 0, 1, 1, 2], [0], [0]>} : vector<2x8x8xf32>, vector<2x8x16xf32>, vector<2x8x16xf32> -> vector<2x8x16xf32>
    "tpu.trace_stop"() : () -> ()
    %204 = vector.extract_strided_slice %185 {offsets = [0, 16], sizes = [16, 16], strides = [1, 1]} : vector<16x96xf32> to vector<16x16xf32>
    %205 = vector.shape_cast %204 : vector<16x16xf32> to vector<2x8x16xf32>
    %206 = vector.extract_strided_slice %185 {offsets = [0, 48], sizes = [16, 16], strides = [1, 1]} : vector<16x96xf32> to vector<16x16xf32>
    %207 = vector.shape_cast %206 : vector<16x16xf32> to vector<2x8x16xf32>
    %208 = vector.extract_strided_slice %185 {offsets = [0, 80], sizes = [16, 16], strides = [1, 1]} : vector<16x96xf32> to vector<16x16xf32>
    %209 = vector.shape_cast %208 : vector<16x16xf32> to vector<2x8x16xf32>
    "tpu.trace_start"() <{level = 10 : i32, message = "bqd,bkd->bqk"}> : () -> ()
    %cst_67 = arith.constant dense<0.000000e+00> : vector<2x8x8xf32>
    %210 = tpu.matmul %205, %207, %cst_67 {dimension_numbers = #tpu.dot_dimension_numbers<[2], [2], [1], [1], [0, 0, 0, 1, 1, 1], [0], [0]>} : vector<2x8x16xf32>, vector<2x8x16xf32>, vector<2x8x8xf32> -> vector<2x8x8xf32>
    "tpu.trace_stop"() : () -> ()
    %cst_68 = arith.constant 2.500000e-01 : f32
    %211 = vector.broadcast %cst_68 : f32 to vector<2x8x8xf32>
    %212 = arith.mulf %210, %211 : vector<2x8x8xf32>
    %213 = vector.broadcast %46 : vector<2x1x8xf32> to vector<2x8x8xf32>
    %214 = arith.addf %212, %213 : vector<2x8x8xf32>
    %215 = math.exp %214 : vector<2x8x8xf32>
    %cst_69 = arith.constant dense<0.000000e+00> : vector<2x8xf32>
    %216 = vector.multi_reduction <add>, %215, %cst_69 [2] : vector<2x8x8xf32> to vector<2x8xf32>
    %217 = vector.shape_cast %216 : vector<2x8xf32> to vector<2x8x1xf32>
    %218 = tpu.reciprocal %217 {approx = true} : vector<2x8x1xf32> -> vector<2x8x1xf32>
    %219 = vector.broadcast %218 : vector<2x8x1xf32> to vector<2x8x8xf32>
    %220 = arith.mulf %215, %219 : vector<2x8x8xf32>
    "tpu.trace_start"() <{level = 10 : i32, message = "bqk,bkd->bqd"}> : () -> ()
    %cst_70 = arith.constant dense<0.000000e+00> : vector<2x8x16xf32>
    %221 = tpu.matmul %220, %209, %cst_70 {dimension_numbers = #tpu.dot_dimension_numbers<[2], [1], [1], [2], [0, 0, 0, 1, 1, 2], [0], [0]>} : vector<2x8x8xf32>, vector<2x8x16xf32>, vector<2x8x16xf32> -> vector<2x8x16xf32>
    "tpu.trace_stop"() : () -> ()
    %222 = tpu.concatenate %203, %221 in 2 : vector<2x8x16xf32>, vector<2x8x16xf32> -> vector<2x8x32xf32>
    %223 = vector.shape_cast %222 : vector<2x8x32xf32> to vector<16x32xf32>
    %224 = vector.extract_strided_slice %173 {offsets = [0, 96], sizes = [32, 32], strides = [1, 1]} : vector<32x256xf32> to vector<32x32xf32>
    %cst_71 = arith.constant dense<0.000000e+00> : vector<16x32xf32>
    %225 = tpu.matmul %223, %224, %cst_71 {dimension_numbers = #tpu.dot_dimension_numbers<[1], [0], [0], [1], [0, 0, 1, 1], [], []>} : vector<16x32xf32>, vector<32x32xf32>, vector<16x32xf32> -> vector<16x32xf32>
    %226 = vector.broadcast %176 : vector<1x32xf32> to vector<16x32xf32>
    %227 = arith.addf %225, %226 : vector<16x32xf32>
    %228 = arith.addf %170, %227 : vector<16x32xf32>
    %cst_72 = arith.constant dense<0.000000e+00> : vector<16xf32>
    %229 = vector.multi_reduction <add>, %228, %cst_72 [1] : vector<16x32xf32> to vector<16xf32>
    %230 = vector.shape_cast %229 : vector<16xf32> to vector<16x1xf32>
    %cst_73 = arith.constant 3.200000e+01 : f32
    %231 = vector.broadcast %cst_73 : f32 to vector<16x1xf32>
    %232 = arith.divf %230, %231 : vector<16x1xf32>
    %233 = vector.broadcast %232 : vector<16x1xf32> to vector<16x32xf32>
    %234 = arith.subf %228, %233 : vector<16x32xf32>
    %235 = arith.mulf %234, %234 : vector<16x32xf32>
    %cst_74 = arith.constant dense<0.000000e+00> : vector<16xf32>
    %236 = vector.multi_reduction <add>, %235, %cst_74 [1] : vector<16x32xf32> to vector<16xf32>
    %237 = vector.shape_cast %236 : vector<16xf32> to vector<16x1xf32>
    %cst_75 = arith.constant 3.200000e+01 : f32
    %238 = vector.broadcast %cst_75 : f32 to vector<16x1xf32>
    %239 = arith.divf %237, %238 : vector<16x1xf32>
    %240 = vector.broadcast %232 : vector<16x1xf32> to vector<16x32xf32>
    %241 = arith.subf %228, %240 : vector<16x32xf32>
    %cst_76 = arith.constant 9.99999996E-13 : f32
    %242 = vector.broadcast %cst_76 : f32 to vector<16x1xf32>
    %243 = arith.addf %239, %242 : vector<16x1xf32>
    %244 = math.rsqrt %243 : vector<16x1xf32>
    %245 = vector.broadcast %244 : vector<16x1xf32> to vector<16x32xf32>
    %246 = arith.mulf %241, %245 : vector<16x32xf32>
    %247 = vector.broadcast %177 : vector<1x32xf32> to vector<16x32xf32>
    %248 = arith.mulf %246, %247 : vector<16x32xf32>
    %249 = vector.broadcast %178 : vector<1x32xf32> to vector<16x32xf32>
    %250 = arith.addf %248, %249 : vector<16x32xf32>
    %251 = vector.extract_strided_slice %173 {offsets = [0, 128], sizes = [32, 64], strides = [1, 1]} : vector<32x256xf32> to vector<32x64xf32>
    %cst_77 = arith.constant dense<0.000000e+00> : vector<16x64xf32>
    %252 = tpu.matmul %250, %251, %cst_77 {dimension_numbers = #tpu.dot_dimension_numbers<[1], [0], [0], [1], [0, 0, 1, 1], [], []>} : vector<16x32xf32>, vector<32x64xf32>, vector<16x64xf32> -> vector<16x64xf32>
    %253 = vector.broadcast %175 : vector<1x64xf32> to vector<16x64xf32>
    %254 = arith.addf %252, %253 : vector<16x64xf32>
    %255 = arith.mulf %254, %254 : vector<16x64xf32>
    %256 = arith.mulf %254, %255 : vector<16x64xf32>
    %cst_78 = arith.constant 4.471500e-02 : f32
    %257 = vector.broadcast %cst_78 : f32 to vector<16x64xf32>
    %258 = arith.mulf %257, %256 : vector<16x64xf32>
    %259 = arith.addf %254, %258 : vector<16x64xf32>
    %cst_79 = arith.constant 0.797884583 : f32
    %260 = vector.broadcast %cst_79 : f32 to vector<16x64xf32>
    %261 = arith.mulf %260, %259 : vector<16x64xf32>
    %262 = math.tanh %261 : vector<16x64xf32>
    %cst_80 = arith.constant 1.000000e+00 : f32
    %263 = vector.broadcast %cst_80 : f32 to vector<16x64xf32>
    %264 = arith.addf %263, %262 : vector<16x64xf32>
    %cst_81 = arith.constant 5.000000e-01 : f32
    %265 = vector.broadcast %cst_81 : f32 to vector<16x64xf32>
    %266 = arith.mulf %265, %264 : vector<16x64xf32>
    %267 = arith.mulf %254, %266 : vector<16x64xf32>
    %268 = vector.extract_strided_slice %173 {offsets = [0, 192], sizes = [32, 64], strides = [1, 1]} : vector<32x256xf32> to vector<32x64xf32>
    %cst_82 = arith.constant dense<0.000000e+00> : vector<16x32xf32>
    %269 = tpu.matmul %267, %268, %cst_82 {dimension_numbers = #tpu.dot_dimension_numbers<[1], [1], [0], [0], [0, 0, 1, 0], [], []>} : vector<16x64xf32>, vector<32x64xf32>, vector<16x32xf32> -> vector<16x32xf32>
    %270 = vector.broadcast %179 : vector<1x32xf32> to vector<16x32xf32>
    %271 = arith.addf %269, %270 : vector<16x32xf32>
    %272 = arith.addf %250, %271 : vector<16x32xf32>
    %cst_83 = arith.constant dense<0.000000e+00> : vector<16xf32>
    %273 = vector.multi_reduction <add>, %272, %cst_83 [1] : vector<16x32xf32> to vector<16xf32>
    %274 = vector.shape_cast %273 : vector<16xf32> to vector<16x1xf32>
    %cst_84 = arith.constant 3.200000e+01 : f32
    %275 = vector.broadcast %cst_84 : f32 to vector<16x1xf32>
    %276 = arith.divf %274, %275 : vector<16x1xf32>
    %277 = vector.broadcast %276 : vector<16x1xf32> to vector<16x32xf32>
    %278 = arith.subf %272, %277 : vector<16x32xf32>
    %279 = arith.mulf %278, %278 : vector<16x32xf32>
    %cst_85 = arith.constant dense<0.000000e+00> : vector<16xf32>
    %280 = vector.multi_reduction <add>, %279, %cst_85 [1] : vector<16x32xf32> to vector<16xf32>
    %281 = vector.shape_cast %280 : vector<16xf32> to vector<16x1xf32>
    %cst_86 = arith.constant 3.200000e+01 : f32
    %282 = vector.broadcast %cst_86 : f32 to vector<16x1xf32>
    %283 = arith.divf %281, %282 : vector<16x1xf32>
    %284 = vector.broadcast %276 : vector<16x1xf32> to vector<16x32xf32>
    %285 = arith.subf %272, %284 : vector<16x32xf32>
    %cst_87 = arith.constant 9.99999996E-13 : f32
    %286 = vector.broadcast %cst_87 : f32 to vector<16x1xf32>
    %287 = arith.addf %283, %286 : vector<16x1xf32>
    %288 = math.rsqrt %287 : vector<16x1xf32>
    %289 = vector.broadcast %288 : vector<16x1xf32> to vector<16x32xf32>
    %290 = arith.mulf %285, %289 : vector<16x32xf32>
    %291 = vector.broadcast %180 : vector<1x32xf32> to vector<16x32xf32>
    %292 = arith.mulf %290, %291 : vector<16x32xf32>
    %293 = vector.broadcast %181 : vector<1x32xf32> to vector<16x32xf32>
    %294 = arith.addf %292, %293 : vector<16x32xf32>
    %c2 = arith.constant 2 : index
    %c0_88 = arith.constant 0 : index
    %c0_89 = arith.constant 0 : index
    %295 = vector.load %arg2[%c2, %c0_88, %c0_89] : memref<3x32x256xbf16, #tpu.memory_space<vmem>>, vector<1x32x256xbf16>
    %296 = vector.shape_cast %295 : vector<1x32x256xbf16> to vector<32x256xbf16>
    %297 = arith.extf %296 : vector<32x256xbf16> to vector<32x256xf32>
    %298 = vector.extract_strided_slice %297 {offsets = [0, 0], sizes = [32, 32], strides = [1, 1]} : vector<32x256xf32> to vector<32x32xf32>
    %299 = vector.extract_strided_slice %297 {offsets = [0, 32], sizes = [32, 128], strides = [1, 1]} : vector<32x256xf32> to vector<32x128xf32>
    %c168 = arith.constant 168 : index
    %c0_90 = arith.constant 0 : index
    %300 = vector.load %arg3[%c168, %c0_90] : memref<176x128xf32, #tpu.memory_space<vmem>>, vector<1x32xf32>
    %c169 = arith.constant 169 : index
    %c0_91 = arith.constant 0 : index
    %301 = vector.load %arg3[%c169, %c0_91] : memref<176x128xf32, #tpu.memory_space<vmem>>, vector<1x128xf32>
    %302 = vector.shape_cast %294 : vector<16x32xf32> to vector<2x8x32xf32>
    %303 = vector.extract_strided_slice %302 {offsets = [0, 0, 0], sizes = [2, 1, 32], strides = [1, 1, 1]} : vector<2x8x32xf32> to vector<2x1x32xf32>
    %304 = vector.shape_cast %303 : vector<2x1x32xf32> to vector<2x32xf32>
    %cst_92 = arith.constant dense<0.000000e+00> : vector<2x32xf32>
    %305 = tpu.matmul %304, %298, %cst_92 {dimension_numbers = #tpu.dot_dimension_numbers<[1], [0], [0], [1], [0, 0, 1, 1], [], []>} : vector<2x32xf32>, vector<32x32xf32>, vector<2x32xf32> -> vector<2x32xf32>
    %306 = vector.broadcast %300 : vector<1x32xf32> to vector<2x32xf32>
    %307 = arith.addf %305, %306 : vector<2x32xf32>
    %308 = math.tanh %307 : vector<2x32xf32>
    %cst_93 = arith.constant dense<0.000000e+00> : vector<2x128xf32>
    %309 = tpu.matmul %308, %299, %cst_93 {dimension_numbers = #tpu.dot_dimension_numbers<[1], [0], [0], [1], [0, 0, 1, 1], [], []>} : vector<2x32xf32>, vector<32x128xf32>, vector<2x128xf32> -> vector<2x128xf32>
    %310 = vector.broadcast %301 : vector<1x128xf32> to vector<2x128xf32>
    %311 = arith.addf %309, %310 : vector<2x128xf32>
    %c0_94 = arith.constant 0 : index
    %c0_95 = arith.constant 0 : index
    %312 = vector.load %arg4[%c0_94, %c0_95] : memref<2x128xf32, #tpu.memory_space<vmem>>, vector<2x128xf32>
    tpu.vector_store %arg4[%c0_94, %c0_95], %311 {strides = array<i32>} : memref<2x128xf32, #tpu.memory_space<vmem>>, vector<2x128xf32>,
    return
  }
}

</mosaic_0001>

<llo_original>
// kernel: sarcasm_detector_forward.1
$region0: #{sarcasm_detector_forward.1}
  #allocation0 [shape = 'u32[]', space=smem, size = 0x4, offset = 0x4, fixed_abs, tag = 'smem constant byte address 0x4 - core index']
  #allocation1 [shape = 'u32[144,128]{1,0:T(1,128)}', space=vmem, size = 0x12000, scoped, tag = 'internal scratch']
  %s0 = inlined_call_operand.vmem [shape: s32[2,8], index: 0, kind: input, shape index: {}]
  %s1 = inlined_call_operand.vmem [shape: s32[2,8], index: 1, kind: input, shape index: {}]
  %s2 = inlined_call_operand.hbm [shape: bf16[3,32,256], index: 2, kind: input, shape index: {}]
  %s3 = inlined_call_operand.hbm [shape: f32[176,128], index: 3, kind: input, shape index: {}]
  %s4 = inlined_call_operand.hbm [shape: f32[2,128], index: 4, kind: output, shape index: {}]
  %s5 = sld [smem:[#allocation0]]
  $region34: #{sarcasm_detector_forward.1} parent=0
    _
  %s7 = ssub.s32 1, %s5
  %s8 = scalar_select 0, %s7, %s5
  $region1: #{sarcasm_detector_forward.1} parent=0
    #allocation2 [shape = 'u8[49152]{0}', space=vmem, size = 0xc000, scoped, tag = 'input window, operand 2, single buffered']
    #allocation3 [shape = 's32[1]{0}', space=sflag, size = 0x4, scoped, tag = 'scoped memory for sarcasm_detector_forward.1']
    #allocation4 [shape = 's32[1]{0}', space=sflag, size = 0x4, scoped, tag = 'scoped memory for sarcasm_detector_forward.1']
    #allocation5 [shape = 'u8[90112]{0}', space=vmem, size = 0x16000, scoped, tag = 'input window, operand 3, single buffered']
    #allocation6 [shape = 's32[1]{0}', space=sflag, size = 0x4, scoped, tag = 'scoped memory for sarcasm_detector_forward.1']
    #allocation7 [shape = 'u8[1024]{0}', space=vmem, size = 0x400, scoped, tag = 'output window, operand 0, single buffered']
    %9 = vsyncpa [#allocation3], 0
    %10 = vsyncpa [#allocation6], 0
    %11 = vsyncpa [#allocation4], 0
    // Predicated region
    $region2: #{sarcasm_detector_forward.1} parent=1 // pred_check
      _
    $region3: #{sarcasm_detector_forward.1} parent=1 // pred_check_branch
      %13 = sbr.rel (0) target = $region5
    $region4: #{sarcasm_detector_forward.1} parent=1 // pred_region
      _
    $region5: #{sarcasm_detector_forward.1} parent=1 // pred_fallthru
      _
    // Predicated region
    $region6: #{sarcasm_detector_forward.1} parent=1 // pred_check
      _
    $region7: #{sarcasm_detector_forward.1} parent=1 // pred_check_branch
      %15 = sbr.rel (0) target = $region9
    $region8: #{sarcasm_detector_forward.1} parent=1 // pred_region
      _
    $region9: #{sarcasm_detector_forward.1} parent=1 // pred_fallthru
      _
    // Predicated region
    $region10: #{sarcasm_detector_forward.1} parent=1 // pred_check
      _
    $region11: #{sarcasm_detector_forward.1} parent=1 // pred_check_branch
      %17 = sbr.rel (0) target = $region13
    $region12: #{sarcasm_detector_forward.1} parent=1 // pred_region
      %s19 = ssub.s32 1536, 1536
      %20 = vsyncadd [#allocation3], %s19
      %s21 = sshll.u32 [#allocation2], 4
      %s22 = int_to_ptr.vmem [resolvable:$true] %s21
      %27 = dma.hbm_to_vmem [thread:$0]  %s2, 1536, %s22, [#allocation3], 128, 128, 8
    $region13: #{sarcasm_detector_forward.1} parent=1 // pred_fallthru
      _
    // Predicated region
    $region14: #{sarcasm_detector_forward.1} parent=1 // pred_check
      _
    $region15: #{sarcasm_detector_forward.1} parent=1 // pred_check_branch
      %29 = sbr.rel (0) target = $region17
    $region16: #{sarcasm_detector_forward.1} parent=1 // pred_region
      %s31 = ssub.s32 2816, 2816
      %32 = vsyncadd [#allocation6], %s31
      %s33 = sshll.u32 [#allocation5], 4
      %s34 = int_to_ptr.vmem [resolvable:$true] %s33
      %39 = dma.hbm_to_vmem [thread:$0]  %s3, 2816, %s34, [#allocation6], 128, 128, 8
    $region17: #{sarcasm_detector_forward.1} parent=1 // pred_fallthru
      _
    // Predicated region
    $region18: #{sarcasm_detector_forward.1} parent=1 // pred_check
      _
    $region19: #{sarcasm_detector_forward.1} parent=1 // pred_check_branch
      %41 = sbr.rel (0) target = $region21
    $region20: #{sarcasm_detector_forward.1} parent=1 // pred_region
      %42 = dma.done [#allocation3], 1536
    $region21: #{sarcasm_detector_forward.1} parent=1 // pred_fallthru
      _
    // Predicated region
    $region22: #{sarcasm_detector_forward.1} parent=1 // pred_check
      _
    $region23: #{sarcasm_detector_forward.1} parent=1 // pred_check_branch
      %44 = sbr.rel (0) target = $region25
    $region24: #{sarcasm_detector_forward.1} parent=1 // pred_region
      %45 = dma.done [#allocation6], 2816
    $region25: #{sarcasm_detector_forward.1} parent=1 // pred_fallthru
      _
    %v46 = vld [vmem:[%s0] sm:$0x3]
    %v47 = vlaneseq
    %v48 = vand.u32 %v47, 127
    %v49 = vlaneseq
    %v50 = vshrl.u32 %v49, 7
    %v51 = vsub.s32 0, %v50
    %v52 = vrot.slane %v46, %v51
    %54 = vbcast.lane.b32.xlu0 %v52, 256
    %v55 = vpop.permute.xlu0 %54
    %v56 = vlaneseq
    %v57 = vshrl.u32 %v56, 7
    %v58 = vsub.s32 1, %v57
    %v59 = vrot.slane %v46, %v58
    %61 = vbcast.lane.b32.xlu0 %v59, 256
    %v62 = vpop.permute.xlu0 %61
    %vm63 = vcmp.eq.s32.totalorder %v55, %v48
    %vm64 = vcmp.eq.s32.totalorder %v62, %v48
    %v65 = vsel %vm63, 1, 0
    %v66 = vsel %vm64, 1, 0
    %v67 = vcvt.s32.f32 %v65
    %v68 = vcvt.s32.f32 %v66
    %v69 = vld [vmem:[#allocation5] sm:$0xff]
    %v70 = vld [vmem:[#allocation5 + $0x8] sm:$0xff]
    %v71 = vld [vmem:[#allocation5 + $0x10] sm:$0xff]
    %v72 = vld [vmem:[#allocation5 + $0x18] sm:$0xff]
    %v73 = vld [vmem:[#allocation5 + $0x20] sm:$0xff]
    %v74 = vld [vmem:[#allocation5 + $0x28] sm:$0xff]
    %v75 = vld [vmem:[#allocation5 + $0x30] sm:$0xff]
    %v76 = vld [vmem:[#allocation5 + $0x38] sm:$0xff]
    %v77 = vld [vmem:[#allocation5 + $0x40] sm:$0xff]
    %v78 = vld [vmem:[#allocation5 + $0x48] sm:$0xff]
    %v79 = vld [vmem:[#allocation5 + $0x50] sm:$0xff]
    %v80 = vld [vmem:[#allocation5 + $0x58] sm:$0xff]
    %v81 = vld [vmem:[#allocation5 + $0x60] sm:$0xff]
    %v82 = vld [vmem:[#allocation5 + $0x68] sm:$0xff]
    %v83 = vld [vmem:[#allocation5 + $0x70] sm:$0xff]
    %v84 = vld [vmem:[#allocation5 + $0x78] sm:$0xff]
    %85 = vmatprep.subr.mxu0 0.0
    %86 = vmatpush1.msra.mxu0 %v69
    %87 = vmatprep.subr.mxu0 0.0
    %88 = vmatpush1.msra.mxu0 %v70
    %89 = vmatprep.subr.mxu0 0.0
    %90 = vmatpush1.msra.mxu0 %v71
    %91 = vmatprep.subr.mxu0 0.0
    %92 = vmatpush1.msra.mxu0 %v72
    %93 = vmatprep.subr.mxu0 0.0
    %94 = vmatpush1.msra.mxu0 %v73
    %95 = vmatprep.subr.mxu0 0.0
    %96 = vmatpush1.msra.mxu0 %v74
    %97 = vmatprep.subr.mxu0 0.0
    %98 = vmatpush1.msra.mxu0 %v75
    %99 = vmatprep.subr.mxu0 0.0
    %100 = vmatpush1.msra.mxu0 %v76
    %101 = vmatprep.subr.mxu0 0.0
    %102 = vmatpush1.msra.mxu0 %v77
    %103 = vmatprep.subr.mxu0 0.0
    %104 = vmatpush1.msra.mxu0 %v78
    %105 = vmatprep.subr.mxu0 0.0
    %106 = vmatpush1.msra.mxu0 %v79
    %107 = vmatprep.subr.mxu0 0.0
    %108 = vmatpush1.msra.mxu0 %v80
    %109 = vmatprep.subr.mxu0 0.0
    %110 = vmatpush1.msra.mxu0 %v81
    %111 = vmatprep.subr.mxu0 0.0
    %112 = vmatpush1.msra.mxu0 %v82
    %113 = vmatprep.subr.mxu0 0.0
    %114 = vmatpush1.msra.mxu0 %v83
    %115 = vmatprep.subr.mxu0 0.0
    %116 = vmatpush1.msra.mxu0 %v84
    %117 = vmatprep.subr.mxu0 0.0
    %118 = vmatpush1.msra.mxu0 0.0
    %119 = vmatprep.subr.mxu0 0.0
    %120 = vmatpush1.msra.mxu0 0.0
    %121 = vmatprep.subr.mxu0 0.0
    %122 = vmatpush1.msra.mxu0 0.0
    %123 = vmatprep.subr.mxu0 0.0
    %124 = vmatpush1.msra.mxu0 0.0
    %125 = vmatprep.subr.mxu0 0.0
    %126 = vmatpush1.msra.mxu0 0.0
    %127 = vmatprep.subr.mxu0 0.0
    %128 = vmatpush1.msra.mxu0 0.0
    %129 = vmatprep.subr.mxu0 0.0
    %130 = vmatpush1.msra.mxu0 0.0
    %131 = vmatprep.subr.mxu0 0.0
    %132 = vmatpush1.msra.mxu0 0.0
    %133 = vmatprep.subr.mxu0 0.0
    %134 = vmatpush1.msra.mxu0 0.0
    %135 = vmatprep.subr.mxu0 0.0
    %136 = vmatpush1.msra.mxu0 0.0
    %137 = vmatprep.subr.mxu0 0.0
    %138 = vmatpush1.msra.mxu0 0.0
    %139 = vmatprep.subr.mxu0 0.0
    %140 = vmatpush1.msra.mxu0 0.0
    %141 = vmatprep.subr.mxu0 0.0
    %142 = vmatpush1.msra.mxu0 0.0
    %143 = vmatprep.subr.mxu0 0.0
    %144 = vmatpush1.msra.mxu0 0.0
    %145 = vmatprep.subr.mxu0 0.0
    %146 = vmatpush1.msra.mxu0 0.0
    %147 = vmatprep.subr.mxu0 0.0
    %148 = vmatpush1.msra.mxu0 0.0
    %149 = vmatprep.mubr.f32.mxu0 0.0
    %150 = vmatmul.mubr.f32.gmra.mrb[0].mxu0 %v67
    %v151 = vpop.f32.mrb[0].mxu0
    %v152 = vadd.f32 0.0, %v151
    %v153 = vpop.f32.mrb[0].mxu0
    %154 = vmatprep.mubr.f32.mxu0 0.0
    %155 = vmatmul.mubr.f32.gmra.mrb[0].mxu0 %v68
    %v156 = vpop.f32.mrb[0].mxu0
    %v157 = vadd.f32 0.0, %v156
    %v158 = vpop.f32.mrb[0].mxu0
    %159 = vdwg.mxu0
    %v160 = vld [vmem:[#allocation5 + $0x80] sm:$0xff]
    %v161 = vadd.f32 %v152, %v160
    %v162 = vadd.f32 %v157, %v160
    %v163 = vld [vmem:[#allocation5 + $0x90] sm:$0x1]
    %v164 = vld [vmem:[#allocation5 + $0x91] sm:$0x1]
    %vm165 = vcmask 261120
    %v166 = vsel %vm165, %v161, 0.0
    %167 = vadd.xlane.f32.xlu0 %v166
    %v168 = vpop.xlane.xlu0 %167
    %v169 = vsel %vm165, %v162, 0.0
    %170 = vadd.xlane.f32.xlu0 %v169
    %v171 = vpop.xlane.xlu0 %170
    %v172 = vrcp.pop 32.0
    %v173 = vmul.f32 %v168, %v172
    %v174 = vmul.f32 %v171, %v172
    %v175 = vsub.f32 %v161, %v173
    %v176 = vsub.f32 %v162, %v174
    %v177 = vmul.f32 %v175, %v175
    %v178 = vmul.f32 %v176, %v176
    %v179 = vsel %vm165, %v177, 0.0
    %180 = vadd.xlane.f32.xlu0 %v179
    %v181 = vpop.xlane.xlu0 %180
    %v182 = vsel %vm165, %v178, 0.0
    %183 = vadd.xlane.f32.xlu0 %v182
    %v184 = vpop.xlane.xlu0 %183
    %v185 = vmul.f32 %v181, %v172
    %v186 = vmul.f32 %v184, %v172
    %v187 = vadd.f32 %v185, 1e-12
    %v188 = vadd.f32 %v186, 1e-12
    %v189 = vrsqrt.pop %v187
    %v190 = vrsqrt.pop %v188
    %v191 = vmul.f32 %v175, %v189
    %v192 = vmul.f32 %v176, %v190
    %v193 = vlaneseq
    %v194 = vshrl.u32 %v193, 7
    %v195 = vsub.s32 0, %v194
    %v196 = vrot.slane %v163, %v195
    %v197 = vmul.f32 %v191, %v196
    %v198 = vmul.f32 %v192, %v196
    %v199 = vlaneseq
    %v200 = vshrl.u32 %v199, 7
    %v201 = vsub.s32 0, %v200
    %v202 = vrot.slane %v164, %v201
    %v203 = vadd.f32 %v197, %v202
    %v204 = vadd.f32 %v198, %v202
    %v205 = vld [vmem:[%s1] sm:$0x3]
    %v206 = vcvt.s32.f32 %v205
    %v207 = vsub.f32 1.0, %v206
    %v210 = vunpack.c.l.s4 1966171168
    %v211 = vunpack.c.0.s8 %v210
    %v212 = vlaneseq
    %v213 = vshrl.u32 %v212, 7
    %v214 = vsub.s32 %v211, %v213
    %v215 = vrot.slane %v207, %v214
    %v216 = vcombine.high %v215, %v215
    %v218 = vunpack.c.l.s4 1966171168
    %v219 = vunpack.c.0.s8 %v218
    %v220 = vlaneseq
    %v221 = vshrl.u32 %v220, 7
    %v222 = vsub.s32 %v219, %v221
    %v223 = vrot.slane %v215, %v222
    %v225 = vunpack.c.l.s4 1966171168
    %v226 = vunpack.c.0.s8 %v225
    %v227 = vlaneseq
    %v228 = vshrl.u32 %v227, 7
    %v229 = vsub.s32 %v226, %v228
    %v230 = vrot.slane %v216, %v229
    %v233 = vmul.f32 %v223, -10000.0
    %v234 = vmul.f32 %v230, -10000.0
    %v235 = vld [vmem:[#allocation2] sm:$0xff]
    %v236 = vld [vmem:[#allocation2 + $0x8] sm:$0xff]
    %v237 = vld [vmem:[#allocation2 + $0x10] sm:$0xff]
    %v238 = vld [vmem:[#allocation2 + $0x18] sm:$0xff]
    %v239 = vunpack.c.l.bf16 %v235
    %v240 = vunpack.c.h.bf16 %v235
    %v241 = vunpack.c.l.bf16 %v236
    %v242 = vunpack.c.h.bf16 %v236
    %v243 = vunpack.c.l.bf16 %v237
    %v244 = vunpack.c.h.bf16 %v237
    %v245 = vunpack.c.l.bf16 %v238
    %v246 = vunpack.c.h.bf16 %v238
    %v247 = vld [vmem:[#allocation5 + $0x98] sm:$0x1]
    %v248 = vld [vmem:[#allocation5 + $0x99] sm:$0x1]
    %v249 = vld [vmem:[#allocation5 + $0x9a] sm:$0x1]
    %v250 = vld [vmem:[#allocation5 + $0x9b] sm:$0x1]
    %v251 = vld [vmem:[#allocation5 + $0x9c] sm:$0x1]
    %v252 = vld [vmem:[#allocation5 + $0x9d] sm:$0x1]
    %v253 = vld [vmem:[#allocation5 + $0x9e] sm:$0x1]
    %v254 = vld [vmem:[#allocation5 + $0x9f] sm:$0x1]
    %v255 = vlaneseq
    %v256 = vshrl.u32 %v255, 7
    %v257 = vsub.s32 0, %v256
    %v258 = vrot.slane %v247, %v257
    %v260 = vsel %vm165, %v203, 0
    %v263 = vsel %vm165, %v204, 0
    %265 = vmatprep.subr.mxu0 0.0
    %266 = vmatpush1.msra.mxu0 %v239
    %267 = vmatprep.subr.mxu0 0.0
    %268 = vmatpush1.msra.mxu0 %v241
    %269 = vmatprep.subr.mxu0 0.0
    %270 = vmatpush1.msra.mxu0 %v243
    %271 = vmatprep.subr.mxu0 0.0
    %272 = vmatpush1.msra.mxu0 %v245
    %273 = vmatprep.subr.mxu0 0.0
    %274 = vmatpush1.msra.mxu0 0.0
    %275 = vmatprep.subr.mxu0 0.0
    %276 = vmatpush1.msra.mxu0 0.0
    %277 = vmatprep.subr.mxu0 0.0
    %278 = vmatpush1.msra.mxu0 0.0
    %279 = vmatprep.subr.mxu0 0.0
    %280 = vmatpush1.msra.mxu0 0.0
    %281 = vmatprep.subr.mxu0 0.0
    %282 = vmatpush1.msra.mxu0 0.0
    %283 = vmatprep.subr.mxu0 0.0
    %284 = vmatpush1.msra.mxu0 0.0
    %285 = vmatprep.subr.mxu0 0.0
    %286 = vmatpush1.msra.mxu0 0.0
    %287 = vmatprep.subr.mxu0 0.0
    %288 = vmatpush1.msra.mxu0 0.0
    %289 = vmatprep.subr.mxu0 0.0
    %290 = vmatpush1.msra.mxu0 0.0
    %291 = vmatprep.subr.mxu0 0.0
    %292 = vmatpush1.msra.mxu0 0.0
    %293 = vmatprep.subr.mxu0 0.0
    %294 = vmatpush1.msra.mxu0 0.0
    %295 = vmatprep.subr.mxu0 0.0
    %296 = vmatpush1.msra.mxu0 0.0
    %297 = vmatprep.subr.mxu0 0.0
    %298 = vmatpush1.msra.mxu0 0.0
    %299 = vmatprep.subr.mxu0 0.0
    %300 = vmatpush1.msra.mxu0 0.0
    %301 = vmatprep.subr.mxu0 0.0
    %302 = vmatpush1.msra.mxu0 0.0
    %303 = vmatprep.subr.mxu0 0.0
    %304 = vmatpush1.msra.mxu0 0.0
    %305 = vmatprep.subr.mxu0 0.0
    %306 = vmatpush1.msra.mxu0 0.0
    %307 = vmatprep.subr.mxu0 0.0
    %308 = vmatpush1.msra.mxu0 0.0
    %309 = vmatprep.subr.mxu0 0.0
    %310 = vmatpush1.msra.mxu0 0.0
    %311 = vmatprep.subr.mxu0 0.0
    %312 = vmatpush1.msra.mxu0 0.0
    %313 = vmatprep.subr.mxu0 0.0
    %314 = vmatpush1.msra.mxu0 0.0
    %315 = vmatprep.subr.mxu0 0.0
    %316 = vmatpush1.msra.mxu0 0.0
    %317 = vmatprep.subr.mxu0 0.0
    %318 = vmatpush1.msra.mxu0 0.0
    %319 = vmatprep.subr.mxu0 0.0
    %320 = vmatpush1.msra.mxu0 0.0
    %321 = vmatprep.subr.mxu0 0.0
    %322 = vmatpush1.msra.mxu0 0.0
    %323 = vmatprep.subr.mxu0 0.0
    %324 = vmatpush1.msra.mxu0 0.0
    %325 = vmatprep.subr.mxu0 0.0
    %326 = vmatpush1.msra.mxu0 0.0
    %327 = vmatprep.subr.mxu0 0.0
    %328 = vmatpush1.msra.mxu0 0.0
    %329 = vmatprep.mubr.f32.mxu0 0.0
    %330 = vmatmul.mubr.f32.gmra.mrb[0].mxu0 %v260
    %v331 = vpop.f32.mrb[0].mxu0
    %v332 = vadd.f32 %v258, %v331
    %v333 = vpop.f32.mrb[0].mxu0
    %334 = vmatprep.mubr.f32.mxu0 0.0
    %335 = vmatmul.mubr.f32.gmra.mrb[0].mxu0 %v263
    %v336 = vpop.f32.mrb[0].mxu0
    %v337 = vadd.f32 %v258, %v336
    %v338 = vpop.f32.mrb[0].mxu0
    %339 = vdwg.mxu0
    %341 = vrot.lane.b32.xlu0 %v332, 96
    %v342 = vpop.permute.xlu0 %341
    %vm343 = vcmask 130048
    %v344 = vsel %vm343, %v332, 0
    %v346 = vsel %vm343, %v342, 0
    %348 = vmatprep.subr.mxu0 0.0
    %349 = vmatpush1.xpose.msra.mxu0 %v346
    %350 = vmatprep.subr.mxu0 0.0
    %351 = vmatpush1.xpose.msra.mxu0 0.0
    %352 = vmatprep.subr.mxu0 0.0
    %353 = vmatpush1.xpose.msra.mxu0 0.0
    %354 = vmatprep.subr.mxu0 0.0
    %355 = vmatpush1.xpose.msra.mxu0 0.0
    %356 = vmatprep.subr.mxu0 0.0
    %357 = vmatpush1.xpose.msra.mxu0 0.0
    %358 = vmatprep.subr.mxu0 0.0
    %359 = vmatpush1.xpose.msra.mxu0 0.0
    %360 = vmatprep.subr.mxu0 0.0
    %361 = vmatpush1.xpose.msra.mxu0 0.0
    %362 = vmatprep.subr.mxu0 0.0
    %363 = vmatpush1.xpose.msra.mxu0 0.0
    %364 = vmatprep.subr.mxu0 0.0
    %365 = vmatpush1.xpose.msra.mxu0 0.0
    %366 = vmatprep.subr.mxu0 0.0
    %367 = vmatpush1.xpose.msra.mxu0 0.0
    %368 = vmatprep.subr.mxu0 0.0
    %369 = vmatpush1.xpose.msra.mxu0 0.0
    %370 = vmatprep.subr.mxu0 0.0
    %371 = vmatpush1.xpose.msra.mxu0 0.0
    %372 = vmatprep.subr.mxu0 0.0
    %373 = vmatpush1.xpose.msra.mxu0 0.0
    %374 = vmatprep.subr.mxu0 0.0
    %375 = vmatpush1.xpose.msra.mxu0 0.0
    %376 = vmatprep.subr.mxu0 0.0
    %377 = vmatpush1.xpose.msra.mxu0 0.0
    %378 = vmatprep.subr.mxu0 0.0
    %379 = vmatpush1.xpose.msra.mxu0 0.0
    %380 = vmatprep.subr.mxu0 0.0
    %381 = vmatpush1.xpose.msra.mxu0 0.0
    %382 = vmatprep.subr.mxu0 0.0
    %383 = vmatpush1.xpose.msra.mxu0 0.0
    %384 = vmatprep.subr.mxu0 0.0
    %385 = vmatpush1.xpose.msra.mxu0 0.0
    %386 = vmatprep.subr.mxu0 0.0
    %387 = vmatpush1.xpose.msra.mxu0 0.0
    %388 = vmatprep.subr.mxu0 0.0
    %389 = vmatpush1.xpose.msra.mxu0 0.0
    %390 = vmatprep.subr.mxu0 0.0
    %391 = vmatpush1.xpose.msra.mxu0 0.0
    %392 = vmatprep.subr.mxu0 0.0
    %393 = vmatpush1.xpose.msra.mxu0 0.0
    %394 = vmatprep.subr.mxu0 0.0
    %395 = vmatpush1.xpose.msra.mxu0 0.0
    %396 = vmatprep.subr.mxu0 0.0
    %397 = vmatpush1.xpose.msra.mxu0 0.0
    %398 = vmatprep.subr.mxu0 0.0
    %399 = vmatpush1.xpose.msra.mxu0 0.0
    %400 = vmatprep.subr.mxu0 0.0
    %401 = vmatpush1.xpose.msra.mxu0 0.0
    %402 = vmatprep.subr.mxu0 0.0
    %403 = vmatpush1.xpose.msra.mxu0 0.0
    %404 = vmatprep.subr.mxu0 0.0
    %405 = vmatpush1.xpose.msra.mxu0 0.0
    %406 = vmatprep.subr.mxu0 0.0
    %407 = vmatpush1.xpose.msra.mxu0 0.0
    %408 = vmatprep.subr.mxu0 0.0
    %409 = vmatpush1.xpose.msra.mxu0 0.0
    %410 = vmatprep.subr.mxu0 0.0
    %411 = vmatpush1.xpose.msra.mxu0 0.0
    %412 = vmatprep.mubr.f32.mxu0 0.0
    %413 = vmatmul.mubr.f32.gmra.mrb[0].mxu0 %v344
    %v414 = vpop.f32.mrb[0].mxu0
    %v415 = vadd.f32 0.0, %v414
    %v416 = vpop.f32.mrb[0].mxu0
    %417 = vdwg.mxu0
    %419 = vrot.lane.b32.xlu0 %v337, 96
    %v420 = vpop.permute.xlu0 %419
    %v421 = vsel %vm343, %v337, 0
    %v423 = vsel %vm343, %v420, 0
    %425 = vmatprep.subr.mxu0 0.0
    %426 = vmatpush1.xpose.msra.mxu0 %v423
    %427 = vmatprep.subr.mxu0 0.0
    %428 = vmatpush1.xpose.msra.mxu0 0.0
    %429 = vmatprep.subr.mxu0 0.0
    %430 = vmatpush1.xpose.msra.mxu0 0.0
    %431 = vmatprep.subr.mxu0 0.0
    %432 = vmatpush1.xpose.msra.mxu0 0.0
    %433 = vmatprep.subr.mxu0 0.0
    %434 = vmatpush1.xpose.msra.mxu0 0.0
    %435 = vmatprep.subr.mxu0 0.0
    %436 = vmatpush1.xpose.msra.mxu0 0.0
    %437 = vmatprep.subr.mxu0 0.0
    %438 = vmatpush1.xpose.msra.mxu0 0.0
    %439 = vmatprep.subr.mxu0 0.0
    %440 = vmatpush1.xpose.msra.mxu0 0.0
    %441 = vmatprep.subr.mxu0 0.0
    %442 = vmatpush1.xpose.msra.mxu0 0.0
    %443 = vmatprep.subr.mxu0 0.0
    %444 = vmatpush1.xpose.msra.mxu0 0.0
    %445 = vmatprep.subr.mxu0 0.0
    %446 = vmatpush1.xpose.msra.mxu0 0.0
    %447 = vmatprep.subr.mxu0 0.0
    %448 = vmatpush1.xpose.msra.mxu0 0.0
    %449 = vmatprep.subr.mxu0 0.0
    %450 = vmatpush1.xpose.msra.mxu0 0.0
    %451 = vmatprep.subr.mxu0 0.0
    %452 = vmatpush1.xpose.msra.mxu0 0.0
    %453 = vmatprep.subr.mxu0 0.0
    %454 = vmatpush1.xpose.msra.mxu0 0.0
    %455 = vmatprep.subr.mxu0 0.0
    %456 = vmatpush1.xpose.msra.mxu0 0.0
    %457 = vmatprep.subr.mxu0 0.0
    %458 = vmatpush1.xpose.msra.mxu0 0.0
    %459 = vmatprep.subr.mxu0 0.0
    %460 = vmatpush1.xpose.msra.mxu0 0.0
    %461 = vmatprep.subr.mxu0 0.0
    %462 = vmatpush1.xpose.msra.mxu0 0.0
    %463 = vmatprep.subr.mxu0 0.0
    %464 = vmatpush1.xpose.msra.mxu0 0.0
    %465 = vmatprep.subr.mxu0 0.0
    %466 = vmatpush1.xpose.msra.mxu0 0.0
    %467 = vmatprep.subr.mxu0 0.0
    %468 = vmatpush1.xpose.msra.mxu0 0.0
    %469 = vmatprep.subr.mxu0 0.0
    %470 = vmatpush1.xpose.msra.mxu0 0.0
    %471 = vmatprep.subr.mxu0 0.0
    %472 = vmatpush1.xpose.msra.mxu0 0.0
    %473 = vmatprep.subr.mxu0 0.0
    %474 = vmatpush1.xpose.msra.mxu0 0.0
    %475 = vmatprep.subr.mxu0 0.0
    %476 = vmatpush1.xpose.msra.mxu0 0.0
    %477 = vmatprep.subr.mxu0 0.0
    %478 = vmatpush1.xpose.msra.mxu0 0.0
    %479 = vmatprep.subr.mxu0 0.0
    %480 = vmatpush1.xpose.msra.mxu0 0.0
    %481 = vmatprep.subr.mxu0 0.0
    %482 = vmatpush1.xpose.msra.mxu0 0.0
    %483 = vmatprep.subr.mxu0 0.0
    %484 = vmatpush1.xpose.msra.mxu0 0.0
    %485 = vmatprep.subr.mxu0 0.0
    %486 = vmatpush1.xpose.msra.mxu0 0.0
    %487 = vmatprep.subr.mxu0 0.0
    %488 = vmatpush1.xpose.msra.mxu0 0.0
    %489 = vmatprep.mubr.f32.mxu0 0.0
    %490 = vmatmul.mubr.f32.gmra.mrb[0].mxu0 %v421
    %v491 = vpop.f32.mrb[0].mxu0
    %v492 = vadd.f32 0.0, %v491
    %v493 = vpop.f32.mrb[0].mxu0
    %494 = vdwg.mxu0
    %v495 = vmul.f32 %v415, 0.25
    %v496 = vmul.f32 %v492, 0.25
    %v499 = vlaneseq
    %v500 = vshrl.u32 %v499, 7
    %v501 = vsub.s32 0, %v500
    %v502 = vrot.slane %v233, %v501
    %v503 = vlaneseq
    %v504 = vshrl.u32 %v503, 7
    %v505 = vsub.s32 0, %v504
    %v506 = vrot.slane %v234, %v505
    %v509 = vadd.f32 %v495, %v502
    %v510 = vadd.f32 %v496, %v506
    %v511 = vmul.f32 %v509, 1.442695
    %v512 = vpow.pop %v511
    %v513 = vmul.f32 %v510, 1.442695
    %v514 = vpow.pop %v513
    %vm515 = vcmask 64512
    %v516 = vsel %vm515, %v512, 0.0
    %517 = vadd.xlane.f32.xlu0 %v516
    %v518 = vpop.xlane.xlu0 %517
    %v519 = vsel %vm515, %v514, 0.0
    %520 = vadd.xlane.f32.xlu0 %v519
    %v521 = vpop.xlane.xlu0 %520
    %v522 = vrcp.pop %v518
    %v523 = vrcp.pop %v521
    %v524 = vmul.f32 %v512, %v522
    %v525 = vmul.f32 %v514, %v523
    %526 = vrot.lane.b32.xlu0 %v332, 64
    %v527 = vpop.permute.xlu0 %526
    %v530 = vsel %vm515, %v524, 0
    %532 = vmatprep.subr.mxu0 0.0
    %533 = vmatpush1.msra.mxu0 %v527
    %534 = vmatprep.subr.mxu0 0.0
    %535 = vmatpush1.msra.mxu0 0.0
    %536 = vmatprep.subr.mxu0 0.0
    %537 = vmatpush1.msra.mxu0 0.0
    %538 = vmatprep.subr.mxu0 0.0
    %539 = vmatpush1.msra.mxu0 0.0
    %540 = vmatprep.subr.mxu0 0.0
    %541 = vmatpush1.msra.mxu0 0.0
    %542 = vmatprep.subr.mxu0 0.0
    %543 = vmatpush1.msra.mxu0 0.0
    %544 = vmatprep.subr.mxu0 0.0
    %545 = vmatpush1.msra.mxu0 0.0
    %546 = vmatprep.subr.mxu0 0.0
    %547 = vmatpush1.msra.mxu0 0.0
    %548 = vmatprep.subr.mxu0 0.0
    %549 = vmatpush1.msra.mxu0 0.0
    %550 = vmatprep.subr.mxu0 0.0
    %551 = vmatpush1.msra.mxu0 0.0
    %552 = vmatprep.subr.mxu0 0.0
    %553 = vmatpush1.msra.mxu0 0.0
    %554 = vmatprep.subr.mxu0 0.0
    %555 = vmatpush1.msra.mxu0 0.0
    %556 = vmatprep.subr.mxu0 0.0
    %557 = vmatpush1.msra.mxu0 0.0
    %558 = vmatprep.subr.mxu0 0.0
    %559 = vmatpush1.msra.mxu0 0.0
    %560 = vmatprep.subr.mxu0 0.0
    %561 = vmatpush1.msra.mxu0 0.0
    %562 = vmatprep.subr.mxu0 0.0
    %563 = vmatpush1.msra.mxu0 0.0
    %564 = vmatprep.subr.mxu0 0.0
    %565 = vmatpush1.msra.mxu0 0.0
    %566 = vmatprep.subr.mxu0 0.0
    %567 = vmatpush1.msra.mxu0 0.0
    %568 = vmatprep.subr.mxu0 0.0
    %569 = vmatpush1.msra.mxu0 0.0
    %570 = vmatprep.subr.mxu0 0.0
    %571 = vmatpush1.msra.mxu0 0.0
    %572 = vmatprep.subr.mxu0 0.0
    %573 = vmatpush1.msra.mxu0 0.0
    %574 = vmatprep.subr.mxu0 0.0
    %575 = vmatpush1.msra.mxu0 0.0
    %576 = vmatprep.subr.mxu0 0.0
    %577 = vmatpush1.msra.mxu0 0.0
    %578 = vmatprep.subr.mxu0 0.0
    %579 = vmatpush1.msra.mxu0 0.0
    %580 = vmatprep.subr.mxu0 0.0
    %581 = vmatpush1.msra.mxu0 0.0
    %582 = vmatprep.subr.mxu0 0.0
    %583 = vmatpush1.msra.mxu0 0.0
    %584 = vmatprep.subr.mxu0 0.0
    %585 = vmatpush1.msra.mxu0 0.0
    %586 = vmatprep.subr.mxu0 0.0
    %587 = vmatpush1.msra.mxu0 0.0
    %588 = vmatprep.subr.mxu0 0.0
    %589 = vmatpush1.msra.mxu0 0.0
    %590 = vmatprep.subr.mxu0 0.0
    %591 = vmatpush1.msra.mxu0 0.0
    %592 = vmatprep.subr.mxu0 0.0
    %593 = vmatpush1.msra.mxu0 0.0
    %594 = vmatprep.subr.mxu0 0.0
    %595 = vmatpush1.msra.mxu0 0.0
    %596 = vmatprep.mubr.f32.mxu0 0.0
    %597 = vmatmul.mubr.f32.gmra.mrb[0].mxu0 %v530
    %v598 = vpop.f32.mrb[0].mxu0
    %v599 = vadd.f32 0.0, %v598
    %v600 = vpop.f32.mrb[0].mxu0
    %601 = vdwg.mxu0
    %602 = vrot.lane.b32.xlu0 %v337, 64
    %v603 = vpop.permute.xlu0 %602
    %v606 = vsel %vm515, %v525, 0
    %608 = vmatprep.subr.mxu0 0.0
    %609 = vmatpush1.msra.mxu0 %v603
    %610 = vmatprep.subr.mxu0 0.0
    %611 = vmatpush1.msra.mxu0 0.0
    %612 = vmatprep.subr.mxu0 0.0
    %613 = vmatpush1.msra.mxu0 0.0
    %614 = vmatprep.subr.mxu0 0.0
    %615 = vmatpush1.msra.mxu0 0.0
    %616 = vmatprep.subr.mxu0 0.0
    %617 = vmatpush1.msra.mxu0 0.0
    %618 = vmatprep.subr.mxu0 0.0
    %619 = vmatpush1.msra.mxu0 0.0
    %620 = vmatprep.subr.mxu0 0.0
    %621 = vmatpush1.msra.mxu0 0.0
    %622 = vmatprep.subr.mxu0 0.0
    %623 = vmatpush1.msra.mxu0 0.0
    %624 = vmatprep.subr.mxu0 0.0
    %625 = vmatpush1.msra.mxu0 0.0
    %626 = vmatprep.subr.mxu0 0.0
    %627 = vmatpush1.msra.mxu0 0.0
    %628 = vmatprep.subr.mxu0 0.0
    %629 = vmatpush1.msra.mxu0 0.0
    %630 = vmatprep.subr.mxu0 0.0
    %631 = vmatpush1.msra.mxu0 0.0
    %632 = vmatprep.subr.mxu0 0.0
    %633 = vmatpush1.msra.mxu0 0.0
    %634 = vmatprep.subr.mxu0 0.0
    %635 = vmatpush1.msra.mxu0 0.0
    %636 = vmatprep.subr.mxu0 0.0
    %637 = vmatpush1.msra.mxu0 0.0
    %638 = vmatprep.subr.mxu0 0.0
    %639 = vmatpush1.msra.mxu0 0.0
    %640 = vmatprep.subr.mxu0 0.0
    %641 = vmatpush1.msra.mxu0 0.0
    %642 = vmatprep.subr.mxu0 0.0
    %643 = vmatpush1.msra.mxu0 0.0
    %644 = vmatprep.subr.mxu0 0.0
    %645 = vmatpush1.msra.mxu0 0.0
    %646 = vmatprep.subr.mxu0 0.0
    %647 = vmatpush1.msra.mxu0 0.0
    %648 = vmatprep.subr.mxu0 0.0
    %649 = vmatpush1.msra.mxu0 0.0
    %650 = vmatprep.subr.mxu0 0.0
    %651 = vmatpush1.msra.mxu0 0.0
    %652 = vmatprep.subr.mxu0 0.0
    %653 = vmatpush1.msra.mxu0 0.0
    %654 = vmatprep.subr.mxu0 0.0
    %655 = vmatpush1.msra.mxu0 0.0
    %656 = vmatprep.subr.mxu0 0.0
    %657 = vmatpush1.msra.mxu0 0.0
    %658 = vmatprep.subr.mxu0 0.0
    %659 = vmatpush1.msra.mxu0 0.0
    %660 = vmatprep.subr.mxu0 0.0
    %661 = vmatpush1.msra.mxu0 0.0
    %662 = vmatprep.subr.mxu0 0.0
    %663 = vmatpush1.msra.mxu0 0.0
    %664 = vmatprep.subr.mxu0 0.0
    %665 = vmatpush1.msra.mxu0 0.0
    %666 = vmatprep.subr.mxu0 0.0
    %667 = vmatpush1.msra.mxu0 0.0
    %668 = vmatprep.subr.mxu0 0.0
    %669 = vmatpush1.msra.mxu0 0.0
    %670 = vmatprep.subr.mxu0 0.0
    %671 = vmatpush1.msra.mxu0 0.0
    %672 = vmatprep.mubr.f32.mxu0 0.0
    %673 = vmatmul.mubr.f32.gmra.mrb[0].mxu0 %v606
    %v674 = vpop.f32.mrb[0].mxu0
    %v675 = vadd.f32 0.0, %v674
    %v676 = vpop.f32.mrb[0].mxu0
    %677 = vdwg.mxu0
    %678 = vrot.lane.b32.xlu0 %v332, 112
    %v679 = vpop.permute.xlu0 %678
    %680 = vrot.lane.b32.xlu0 %v332, 80
    %v681 = vpop.permute.xlu0 %680
    %v682 = vsel %vm343, %v679, 0
    %v684 = vsel %vm343, %v681, 0
    %686 = vmatprep.subr.mxu0 0.0
    %687 = vmatpush1.xpose.msra.mxu0 %v684
    %688 = vmatprep.subr.mxu0 0.0
    %689 = vmatpush1.xpose.msra.mxu0 0.0
    %690 = vmatprep.subr.mxu0 0.0
    %691 = vmatpush1.xpose.msra.mxu0 0.0
    %692 = vmatprep.subr.mxu0 0.0
    %693 = vmatpush1.xpose.msra.mxu0 0.0
    %694 = vmatprep.subr.mxu0 0.0
    %695 = vmatpush1.xpose.msra.mxu0 0.0
    %696 = vmatprep.subr.mxu0 0.0
    %697 = vmatpush1.xpose.msra.mxu0 0.0
    %698 = vmatprep.subr.mxu0 0.0
    %699 = vmatpush1.xpose.msra.mxu0 0.0
    %700 = vmatprep.subr.mxu0 0.0
    %701 = vmatpush1.xpose.msra.mxu0 0.0
    %702 = vmatprep.subr.mxu0 0.0
    %703 = vmatpush1.xpose.msra.mxu0 0.0
    %704 = vmatprep.subr.mxu0 0.0
    %705 = vmatpush1.xpose.msra.mxu0 0.0
    %706 = vmatprep.subr.mxu0 0.0
    %707 = vmatpush1.xpose.msra.mxu0 0.0
    %708 = vmatprep.subr.mxu0 0.0
    %709 = vmatpush1.xpose.msra.mxu0 0.0
    %710 = vmatprep.subr.mxu0 0.0
    %711 = vmatpush1.xpose.msra.mxu0 0.0
    %712 = vmatprep.subr.mxu0 0.0
    %713 = vmatpush1.xpose.msra.mxu0 0.0
    %714 = vmatprep.subr.mxu0 0.0
    %715 = vmatpush1.xpose.msra.mxu0 0.0
    %716 = vmatprep.subr.mxu0 0.0
    %717 = vmatpush1.xpose.msra.mxu0 0.0
    %718 = vmatprep.subr.mxu0 0.0
    %719 = vmatpush1.xpose.msra.mxu0 0.0
    %720 = vmatprep.subr.mxu0 0.0
    %721 = vmatpush1.xpose.msra.mxu0 0.0
    %722 = vmatprep.subr.mxu0 0.0
    %723 = vmatpush1.xpose.msra.mxu0 0.0
    %724 = vmatprep.subr.mxu0 0.0
    %725 = vmatpush1.xpose.msra.mxu0 0.0
    %726 = vmatprep.subr.mxu0 0.0
    %727 = vmatpush1.xpose.msra.mxu0 0.0
    %728 = vmatprep.subr.mxu0 0.0
    %729 = vmatpush1.xpose.msra.mxu0 0.0
    %730 = vmatprep.subr.mxu0 0.0
    %731 = vmatpush1.xpose.msra.mxu0 0.0
    %732 = vmatprep.subr.mxu0 0.0
    %733 = vmatpush1.xpose.msra.mxu0 0.0
    %734 = vmatprep.subr.mxu0 0.0
    %735 = vmatpush1.xpose.msra.mxu0 0.0
    %736 = vmatprep.subr.mxu0 0.0
    %737 = vmatpush1.xpose.msra.mxu0 0.0
    %738 = vmatprep.subr.mxu0 0.0
    %739 = vmatpush1.xpose.msra.mxu0 0.0
    %740 = vmatprep.subr.mxu0 0.0
    %741 = vmatpush1.xpose.msra.mxu0 0.0
    %742 = vmatprep.subr.mxu0 0.0
    %743 = vmatpush1.xpose.msra.mxu0 0.0
    %744 = vmatprep.subr.mxu0 0.0
    %745 = vmatpush1.xpose.msra.mxu0 0.0
    %746 = vmatprep.subr.mxu0 0.0
    %747 = vmatpush1.xpose.msra.mxu0 0.0
    %748 = vmatprep.subr.mxu0 0.0
    %749 = vmatpush1.xpose.msra.mxu0 0.0
    %750 = vmatprep.mubr.f32.mxu0 0.0
    %751 = vmatmul.mubr.f32.gmra.mrb[0].mxu0 %v682
    %v752 = vpop.f32.mrb[0].mxu0
    %v753 = vadd.f32 0.0, %v752
    %v754 = vpop.f32.mrb[0].mxu0
    %755 = vdwg.mxu0
    %756 = vrot.lane.b32.xlu0 %v337, 112
    %v757 = vpop.permute.xlu0 %756
    %758 = vrot.lane.b32.xlu0 %v337, 80
    %v759 = vpop.permute.xlu0 %758
    %v760 = vsel %vm343, %v757, 0
    %v762 = vsel %vm343, %v759, 0
    %764 = vmatprep.subr.mxu0 0.0
    %765 = vmatpush1.xpose.msra.mxu0 %v762
    %766 = vmatprep.subr.mxu0 0.0
    %767 = vmatpush1.xpose.msra.mxu0 0.0
    %768 = vmatprep.subr.mxu0 0.0
    %769 = vmatpush1.xpose.msra.mxu0 0.0
    %770 = vmatprep.subr.mxu0 0.0
    %771 = vmatpush1.xpose.msra.mxu0 0.0
    %772 = vmatprep.subr.mxu0 0.0
    %773 = vmatpush1.xpose.msra.mxu0 0.0
    %774 = vmatprep.subr.mxu0 0.0
    %775 = vmatpush1.xpose.msra.mxu0 0.0
    %776 = vmatprep.subr.mxu0 0.0
    %777 = vmatpush1.xpose.msra.mxu0 0.0
    %778 = vmatprep.subr.mxu0 0.0
    %779 = vmatpush1.xpose.msra.mxu0 0.0
    %780 = vmatprep.subr.mxu0 0.0
    %781 = vmatpush1.xpose.msra.mxu0 0.0
    %782 = vmatprep.subr.mxu0 0.0
    %783 = vmatpush1.xpose.msra.mxu0 0.0
    %784 = vmatprep.subr.mxu0 0.0
    %785 = vmatpush1.xpose.msra.mxu0 0.0
    %786 = vmatprep.subr.mxu0 0.0
    %787 = vmatpush1.xpose.msra.mxu0 0.0
    %788 = vmatprep.subr.mxu0 0.0
    %789 = vmatpush1.xpose.msra.mxu0 0.0
    %790 = vmatprep.subr.mxu0 0.0
    %791 = vmatpush1.xpose.msra.mxu0 0.0
    %792 = vmatprep.subr.mxu0 0.0
    %793 = vmatpush1.xpose.msra.mxu0 0.0
    %794 = vmatprep.subr.mxu0 0.0
    %795 = vmatpush1.xpose.msra.mxu0 0.0
    %796 = vmatprep.subr.mxu0 0.0
    %797 = vmatpush1.xpose.msra.mxu0 0.0
    %798 = vmatprep.subr.mxu0 0.0
    %799 = vmatpush1.xpose.msra.mxu0 0.0
    %800 = vmatprep.subr.mxu0 0.0
    %801 = vmatpush1.xpose.msra.mxu0 0.0
    %802 = vmatprep.subr.mxu0 0.0
    %803 = vmatpush1.xpose.msra.mxu0 0.0
    %804 = vmatprep.subr.mxu0 0.0
    %805 = vmatpush1.xpose.msra.mxu0 0.0
    %806 = vmatprep.subr.mxu0 0.0
    %807 = vmatpush1.xpose.msra.mxu0 0.0
    %808 = vmatprep.subr.mxu0 0.0
    %809 = vmatpush1.xpose.msra.mxu0 0.0
    %810 = vmatprep.subr.mxu0 0.0
    %811 = vmatpush1.xpose.msra.mxu0 0.0
    %812 = vmatprep.subr.mxu0 0.0
    %813 = vmatpush1.xpose.msra.mxu0 0.0
    %814 = vmatprep.subr.mxu0 0.0
    %815 = vmatpush1.xpose.msra.mxu0 0.0
    %816 = vmatprep.subr.mxu0 0.0
    %817 = vmatpush1.xpose.msra.mxu0 0.0
    %818 = vmatprep.subr.mxu0 0.0
    %819 = vmatpush1.xpose.msra.mxu0 0.0
    %820 = vmatprep.subr.mxu0 0.0
    %821 = vmatpush1.xpose.msra.mxu0 0.0
    %822 = vmatprep.subr.mxu0 0.0
    %823 = vmatpush1.xpose.msra.mxu0 0.0
    %824 = vmatprep.subr.mxu0 0.0
    %825 = vmatpush1.xpose.msra.mxu0 0.0
    %826 = vmatprep.subr.mxu0 0.0
    %827 = vmatpush1.xpose.msra.mxu0 0.0
    %828 = vmatprep.mubr.f32.mxu0 0.0
    %829 = vmatmul.mubr.f32.gmra.mrb[0].mxu0 %v760
    %v830 = vpop.f32.mrb[0].mxu0
    %v831 = vadd.f32 0.0, %v830
    %v832 = vpop.f32.mrb[0].mxu0
    %833 = vdwg.mxu0
    %v834 = vmul.f32 %v753, 0.25
    %v835 = vmul.f32 %v831, 0.25
    %v836 = vadd.f32 %v834, %v502
    %v837 = vadd.f32 %v835, %v506
    %v838 = vmul.f32 %v836, 1.442695
    %v839 = vpow.pop %v838
    %v840 = vmul.f32 %v837, 1.442695
    %v841 = vpow.pop %v840
    %v842 = vsel %vm515, %v839, 0.0
    %843 = vadd.xlane.f32.xlu0 %v842
    %v844 = vpop.xlane.xlu0 %843
    %v845 = vsel %vm515, %v841, 0.0
    %846 = vadd.xlane.f32.xlu0 %v845
    %v847 = vpop.xlane.xlu0 %846
    %v848 = vrcp.pop %v844
    %v849 = vrcp.pop %v847
    %v850 = vmul.f32 %v839, %v848
    %v851 = vmul.f32 %v841, %v849
    %852 = vrot.lane.b32.xlu0 %v332, 48
    %v853 = vpop.permute.xlu0 %852
    %v856 = vsel %vm515, %v850, 0
    %858 = vmatprep.subr.mxu0 0.0
    %859 = vmatpush1.msra.mxu0 %v853
    %860 = vmatprep.subr.mxu0 0.0
    %861 = vmatpush1.msra.mxu0 0.0
    %862 = vmatprep.subr.mxu0 0.0
    %863 = vmatpush1.msra.mxu0 0.0
    %864 = vmatprep.subr.mxu0 0.0
    %865 = vmatpush1.msra.mxu0 0.0
    %866 = vmatprep.subr.mxu0 0.0
    %867 = vmatpush1.msra.mxu0 0.0
    %868 = vmatprep.subr.mxu0 0.0
    %869 = vmatpush1.msra.mxu0 0.0
    %870 = vmatprep.subr.mxu0 0.0
    %871 = vmatpush1.msra.mxu0 0.0
    %872 = vmatprep.subr.mxu0 0.0
    %873 = vmatpush1.msra.mxu0 0.0
    %874 = vmatprep.subr.mxu0 0.0
    %875 = vmatpush1.msra.mxu0 0.0
    %876 = vmatprep.subr.mxu0 0.0
    %877 = vmatpush1.msra.mxu0 0.0
    %878 = vmatprep.subr.mxu0 0.0
    %879 = vmatpush1.msra.mxu0 0.0
    %880 = vmatprep.subr.mxu0 0.0
    %881 = vmatpush1.msra.mxu0 0.0
    %882 = vmatprep.subr.mxu0 0.0
    %883 = vmatpush1.msra.mxu0 0.0
    %884 = vmatprep.subr.mxu0 0.0
    %885 = vmatpush1.msra.mxu0 0.0
    %886 = vmatprep.subr.mxu0 0.0
    %887 = vmatpush1.msra.mxu0 0.0
    %888 = vmatprep.subr.mxu0 0.0
    %889 = vmatpush1.msra.mxu0 0.0
    %890 = vmatprep.subr.mxu0 0.0
    %891 = vmatpush1.msra.mxu0 0.0
    %892 = vmatprep.subr.mxu0 0.0
    %893 = vmatpush1.msra.mxu0 0.0
    %894 = vmatprep.subr.mxu0 0.0
    %895 = vmatpush1.msra.mxu0 0.0
    %896 = vmatprep.subr.mxu0 0.0
    %897 = vmatpush1.msra.mxu0 0.0
    %898 = vmatprep.subr.mxu0 0.0
    %899 = vmatpush1.msra.mxu0 0.0
    %900 = vmatprep.subr.mxu0 0.0
    %901 = vmatpush1.msra.mxu0 0.0
    %902 = vmatprep.subr.mxu0 0.0
    %903 = vmatpush1.msra.mxu0 0.0
    %904 = vmatprep.subr.mxu0 0.0
    %905 = vmatpush1.msra.mxu0 0.0
    %906 = vmatprep.subr.mxu0 0.0
    %907 = vmatpush1.msra.mxu0 0.0
    %908 = vmatprep.subr.mxu0 0.0
    %909 = vmatpush1.msra.mxu0 0.0
    %910 = vmatprep.subr.mxu0 0.0
    %911 = vmatpush1.msra.mxu0 0.0
    %912 = vmatprep.subr.mxu0 0.0
    %913 = vmatpush1.msra.mxu0 0.0
    %914 = vmatprep.subr.mxu0 0.0
    %915 = vmatpush1.msra.mxu0 0.0
    %916 = vmatprep.subr.mxu0 0.0
    %917 = vmatpush1.msra.mxu0 0.0
    %918 = vmatprep.subr.mxu0 0.0
    %919 = vmatpush1.msra.mxu0 0.0
    %920 = vmatprep.subr.mxu0 0.0
    %921 = vmatpush1.msra.mxu0 0.0
    %922 = vmatprep.mubr.f32.mxu0 0.0
    %923 = vmatmul.mubr.f32.gmra.mrb[0].mxu0 %v856
    %v924 = vpop.f32.mrb[0].mxu0
    %v925 = vadd.f32 0.0, %v924
    %v926 = vpop.f32.mrb[0].mxu0
    %927 = vdwg.mxu0
    %928 = vrot.lane.b32.xlu0 %v337, 48
    %v929 = vpop.permute.xlu0 %928
    %v932 = vsel %vm515, %v851, 0
    %934 = vmatprep.subr.mxu0 0.0
    %935 = vmatpush1.msra.mxu0 %v929
    %936 = vmatprep.subr.mxu0 0.0
    %937 = vmatpush1.msra.mxu0 0.0
    %938 = vmatprep.subr.mxu0 0.0
    %939 = vmatpush1.msra.mxu0 0.0
    %940 = vmatprep.subr.mxu0 0.0
    %941 = vmatpush1.msra.mxu0 0.0
    %942 = vmatprep.subr.mxu0 0.0
    %943 = vmatpush1.msra.mxu0 0.0
    %944 = vmatprep.subr.mxu0 0.0
    %945 = vmatpush1.msra.mxu0 0.0
    %946 = vmatprep.subr.mxu0 0.0
    %947 = vmatpush1.msra.mxu0 0.0
    %948 = vmatprep.subr.mxu0 0.0
    %949 = vmatpush1.msra.mxu0 0.0
    %950 = vmatprep.subr.mxu0 0.0
    %951 = vmatpush1.msra.mxu0 0.0
    %952 = vmatprep.subr.mxu0 0.0
    %953 = vmatpush1.msra.mxu0 0.0
    %954 = vmatprep.subr.mxu0 0.0
    %955 = vmatpush1.msra.mxu0 0.0
    %956 = vmatprep.subr.mxu0 0.0
    %957 = vmatpush1.msra.mxu0 0.0
    %958 = vmatprep.subr.mxu0 0.0
    %959 = vmatpush1.msra.mxu0 0.0
    %960 = vmatprep.subr.mxu0 0.0
    %961 = vmatpush1.msra.mxu0 0.0
    %962 = vmatprep.subr.mxu0 0.0
    %963 = vmatpush1.msra.mxu0 0.0
    %964 = vmatprep.subr.mxu0 0.0
    %965 = vmatpush1.msra.mxu0 0.0
    %966 = vmatprep.subr.mxu0 0.0
    %967 = vmatpush1.msra.mxu0 0.0
    %968 = vmatprep.subr.mxu0 0.0
    %969 = vmatpush1.msra.mxu0 0.0
    %970 = vmatprep.subr.mxu0 0.0
    %971 = vmatpush1.msra.mxu0 0.0
    %972 = vmatprep.subr.mxu0 0.0
    %973 = vmatpush1.msra.mxu0 0.0
    %974 = vmatprep.subr.mxu0 0.0
    %975 = vmatpush1.msra.mxu0 0.0
    %976 = vmatprep.subr.mxu0 0.0
    %977 = vmatpush1.msra.mxu0 0.0
    %978 = vmatprep.subr.mxu0 0.0
    %979 = vmatpush1.msra.mxu0 0.0
    %980 = vmatprep.subr.mxu0 0.0
    %981 = vmatpush1.msra.mxu0 0.0
    %982 = vmatprep.subr.mxu0 0.0
    %983 = vmatpush1.msra.mxu0 0.0
    %984 = vmatprep.subr.mxu0 0.0
    %985 = vmatpush1.msra.mxu0 0.0
    %986 = vmatprep.subr.mxu0 0.0
    %987 = vmatpush1.msra.mxu0 0.0
    %988 = vmatprep.subr.mxu0 0.0
    %989 = vmatpush1.msra.mxu0 0.0
    %990 = vmatprep.subr.mxu0 0.0
    %991 = vmatpush1.msra.mxu0 0.0
    %992 = vmatprep.subr.mxu0 0.0
    %993 = vmatpush1.msra.mxu0 0.0
    %994 = vmatprep.subr.mxu0 0.0
    %995 = vmatpush1.msra.mxu0 0.0
    %996 = vmatprep.subr.mxu0 0.0
    %997 = vmatpush1.msra.mxu0 0.0
    %998 = vmatprep.mubr.f32.mxu0 0.0
    %999 = vmatmul.mubr.f32.gmra.mrb[0].mxu0 %v932
    %v1000 = vpop.f32.mrb[0].mxu0
    %v1001 = vadd.f32 0.0, %v1000
    %v1002 = vpop.f32.mrb[0].mxu0
    %1003 = vdwg.mxu0
    %1006 = vrot.lane.b32.xlu0 %v925, 16
    %v1007 = vpop.permute.xlu0 %1006
    %1008 = vrot.lane.b32.xlu0 %v1001, 16
    %v1009 = vpop.permute.xlu0 %1008
    %v1012 = vsel %vm343, %v599, %v1007
    %v1013 = vsel %vm343, %v675, %v1009
    %v1014 = vlaneseq
    %v1015 = vshrl.u32 %v1014, 7
    %v1016 = vsub.s32 0, %v1015
    %v1017 = vrot.slane %v249, %v1016
    %1022 = vrot.lane.b32.xlu0 %v239, 32
    %v1023 = vpop.permute.xlu0 %1022
    %1024 = vrot.lane.b32.xlu0 %v241, 32
    %v1025 = vpop.permute.xlu0 %1024
    %1026 = vrot.lane.b32.xlu0 %v243, 32
    %v1027 = vpop.permute.xlu0 %1026
    %1028 = vrot.lane.b32.xlu0 %v245, 32
    %v1029 = vpop.permute.xlu0 %1028
    %v1035 = vsel %vm165, %v1012, 0
    %v1038 = vsel %vm165, %v1013, 0
    %1040 = vmatprep.subr.mxu0 0.0
    %1041 = vmatpush1.msra.mxu0 %v1023
    %1042 = vmatprep.subr.mxu0 0.0
    %1043 = vmatpush1.msra.mxu0 %v1025
    %1044 = vmatprep.subr.mxu0 0.0
    %1045 = vmatpush1.msra.mxu0 %v1027
    %1046 = vmatprep.subr.mxu0 0.0
    %1047 = vmatpush1.msra.mxu0 %v1029
    %1048 = vmatprep.subr.mxu0 0.0
    %1049 = vmatpush1.msra.mxu0 0.0
    %1050 = vmatprep.subr.mxu0 0.0
    %1051 = vmatpush1.msra.mxu0 0.0
    %1052 = vmatprep.subr.mxu0 0.0
    %1053 = vmatpush1.msra.mxu0 0.0
    %1054 = vmatprep.subr.mxu0 0.0
    %1055 = vmatpush1.msra.mxu0 0.0
    %1056 = vmatprep.subr.mxu0 0.0
    %1057 = vmatpush1.msra.mxu0 0.0
    %1058 = vmatprep.subr.mxu0 0.0
    %1059 = vmatpush1.msra.mxu0 0.0
    %1060 = vmatprep.subr.mxu0 0.0
    %1061 = vmatpush1.msra.mxu0 0.0
    %1062 = vmatprep.subr.mxu0 0.0
    %1063 = vmatpush1.msra.mxu0 0.0
    %1064 = vmatprep.subr.mxu0 0.0
    %1065 = vmatpush1.msra.mxu0 0.0
    %1066 = vmatprep.subr.mxu0 0.0
    %1067 = vmatpush1.msra.mxu0 0.0
    %1068 = vmatprep.subr.mxu0 0.0
    %1069 = vmatpush1.msra.mxu0 0.0
    %1070 = vmatprep.subr.mxu0 0.0
    %1071 = vmatpush1.msra.mxu0 0.0
    %1072 = vmatprep.subr.mxu0 0.0
    %1073 = vmatpush1.msra.mxu0 0.0
    %1074 = vmatprep.subr.mxu0 0.0
    %1075 = vmatpush1.msra.mxu0 0.0
    %1076 = vmatprep.subr.mxu0 0.0
    %1077 = vmatpush1.msra.mxu0 0.0
    %1078 = vmatprep.subr.mxu0 0.0
    %1079 = vmatpush1.msra.mxu0 0.0
    %1080 = vmatprep.subr.mxu0 0.0
    %1081 = vmatpush1.msra.mxu0 0.0
    %1082 = vmatprep.subr.mxu0 0.0
    %1083 = vmatpush1.msra.mxu0 0.0
    %1084 = vmatprep.subr.mxu0 0.0
    %1085 = vmatpush1.msra.mxu0 0.0
    %1086 = vmatprep.subr.mxu0 0.0
    %1087 = vmatpush1.msra.mxu0 0.0
    %1088 = vmatprep.subr.mxu0 0.0
    %1089 = vmatpush1.msra.mxu0 0.0
    %1090 = vmatprep.subr.mxu0 0.0
    %1091 = vmatpush1.msra.mxu0 0.0
    %1092 = vmatprep.subr.mxu0 0.0
    %1093 = vmatpush1.msra.mxu0 0.0
    %1094 = vmatprep.subr.mxu0 0.0
    %1095 = vmatpush1.msra.mxu0 0.0
    %1096 = vmatprep.subr.mxu0 0.0
    %1097 = vmatpush1.msra.mxu0 0.0
    %1098 = vmatprep.subr.mxu0 0.0
    %1099 = vmatpush1.msra.mxu0 0.0
    %1100 = vmatprep.subr.mxu0 0.0
    %1101 = vmatpush1.msra.mxu0 0.0
    %1102 = vmatprep.subr.mxu0 0.0
    %1103 = vmatpush1.msra.mxu0 0.0
    %1104 = vmatprep.mubr.f32.mxu0 0.0
    %1105 = vmatmul.mubr.f32.gmra.mrb[0].mxu0 %v1035
    %v1106 = vpop.f32.mrb[0].mxu0
    %v1107 = vadd.f32 %v1017, %v1106
    %v1108 = vpop.f32.mrb[0].mxu0
    %1109 = vmatprep.mubr.f32.mxu0 0.0
    %1110 = vmatmul.mubr.f32.gmra.mrb[0].mxu0 %v1038
    %v1111 = vpop.f32.mrb[0].mxu0
    %v1112 = vadd.f32 %v1017, %v1111
    %v1113 = vpop.f32.mrb[0].mxu0
    %1114 = vdwg.mxu0
    %v1115 = vadd.f32 %v203, %v1107
    %v1116 = vadd.f32 %v204, %v1112
    %v1117 = vsel %vm165, %v1115, 0.0
    %1118 = vadd.xlane.f32.xlu0 %v1117
    %v1119 = vpop.xlane.xlu0 %1118
    %v1120 = vsel %vm165, %v1116, 0.0
    %1121 = vadd.xlane.f32.xlu0 %v1120
    %v1122 = vpop.xlane.xlu0 %1121
    %v1123 = vmul.f32 %v1119, %v172
    %v1124 = vmul.f32 %v1122, %v172
    %v1125 = vsub.f32 %v1115, %v1123
    %v1126 = vsub.f32 %v1116, %v1124
    %v1127 = vmul.f32 %v1125, %v1125
    %v1128 = vmul.f32 %v1126, %v1126
    %v1129 = vsel %vm165, %v1127, 0.0
    %1130 = vadd.xlane.f32.xlu0 %v1129
    %v1131 = vpop.xlane.xlu0 %1130
    %v1132 = vsel %vm165, %v1128, 0.0
    %1133 = vadd.xlane.f32.xlu0 %v1132
    %v1134 = vpop.xlane.xlu0 %1133
    %v1135 = vmul.f32 %v1131, %v172
    %v1136 = vmul.f32 %v1134, %v172
    %v1137 = vadd.f32 %v1135, 1e-12
    %v1138 = vadd.f32 %v1136, 1e-12
    %v1139 = vrsqrt.pop %v1137
    %v1140 = vrsqrt.pop %v1138
    %v1141 = vmul.f32 %v1125, %v1139
    %v1142 = vmul.f32 %v1126, %v1140
    %v1143 = vlaneseq
    %v1144 = vshrl.u32 %v1143, 7
    %v1145 = vsub.s32 0, %v1144
    %v1146 = vrot.slane %v250, %v1145
    %v1147 = vmul.f32 %v1141, %v1146
    %v1148 = vmul.f32 %v1142, %v1146
    %v1149 = vlaneseq
    %v1150 = vshrl.u32 %v1149, 7
    %v1151 = vsub.s32 0, %v1150
    %v1152 = vrot.slane %v251, %v1151
    %v1153 = vadd.f32 %v1147, %v1152
    %v1154 = vadd.f32 %v1148, %v1152
    %v1155 = vlaneseq
    %v1156 = vshrl.u32 %v1155, 7
    %v1157 = vsub.s32 0, %v1156
    %v1158 = vrot.slane %v248, %v1157
    %v1160 = vsel %vm165, %v1153, 0
    %v1163 = vsel %vm165, %v1154, 0
    %1165 = vmatprep.subr.mxu0 0.0
    %1166 = vmatpush1.msra.mxu0 %v240
    %1167 = vmatprep.subr.mxu0 0.0
    %1168 = vmatpush1.msra.mxu0 %v242
    %1169 = vmatprep.subr.mxu0 0.0
    %1170 = vmatpush1.msra.mxu0 %v244
    %1171 = vmatprep.subr.mxu0 0.0
    %1172 = vmatpush1.msra.mxu0 %v246
    %1173 = vmatprep.subr.mxu0 0.0
    %1174 = vmatpush1.msra.mxu0 0.0
    %1175 = vmatprep.subr.mxu0 0.0
    %1176 = vmatpush1.msra.mxu0 0.0
    %1177 = vmatprep.subr.mxu0 0.0
    %1178 = vmatpush1.msra.mxu0 0.0
    %1179 = vmatprep.subr.mxu0 0.0
    %1180 = vmatpush1.msra.mxu0 0.0
    %1181 = vmatprep.subr.mxu0 0.0
    %1182 = vmatpush1.msra.mxu0 0.0
    %1183 = vmatprep.subr.mxu0 0.0
    %1184 = vmatpush1.msra.mxu0 0.0
    %1185 = vmatprep.subr.mxu0 0.0
    %1186 = vmatpush1.msra.mxu0 0.0
    %1187 = vmatprep.subr.mxu0 0.0
    %1188 = vmatpush1.msra.mxu0 0.0
    %1189 = vmatprep.subr.mxu0 0.0
    %1190 = vmatpush1.msra.mxu0 0.0
    %1191 = vmatprep.subr.mxu0 0.0
    %1192 = vmatpush1.msra.mxu0 0.0
    %1193 = vmatprep.subr.mxu0 0.0
    %1194 = vmatpush1.msra.mxu0 0.0
    %1195 = vmatprep.subr.mxu0 0.0
    %1196 = vmatpush1.msra.mxu0 0.0
    %1197 = vmatprep.subr.mxu0 0.0
    %1198 = vmatpush1.msra.mxu0 0.0
    %1199 = vmatprep.subr.mxu0 0.0
    %1200 = vmatpush1.msra.mxu0 0.0
    %1201 = vmatprep.subr.mxu0 0.0
    %1202 = vmatpush1.msra.mxu0 0.0
    %1203 = vmatprep.subr.mxu0 0.0
    %1204 = vmatpush1.msra.mxu0 0.0
    %1205 = vmatprep.subr.mxu0 0.0
    %1206 = vmatpush1.msra.mxu0 0.0
    %1207 = vmatprep.subr.mxu0 0.0
    %1208 = vmatpush1.msra.mxu0 0.0
    %1209 = vmatprep.subr.mxu0 0.0
    %1210 = vmatpush1.msra.mxu0 0.0
    %1211 = vmatprep.subr.mxu0 0.0
    %1212 = vmatpush1.msra.mxu0 0.0
    %1213 = vmatprep.subr.mxu0 0.0
    %1214 = vmatpush1.msra.mxu0 0.0
    %1215 = vmatprep.subr.mxu0 0.0
    %1216 = vmatpush1.msra.mxu0 0.0
    %1217 = vmatprep.subr.mxu0 0.0
    %1218 = vmatpush1.msra.mxu0 0.0
    %1219 = vmatprep.subr.mxu0 0.0
    %1220 = vmatpush1.msra.mxu0 0.0
    %1221 = vmatprep.subr.mxu0 0.0
    %1222 = vmatpush1.msra.mxu0 0.0
    %1223 = vmatprep.subr.mxu0 0.0
    %1224 = vmatpush1.msra.mxu0 0.0
    %1225 = vmatprep.subr.mxu0 0.0
    %1226 = vmatpush1.msra.mxu0 0.0
    %1227 = vmatprep.subr.mxu0 0.0
    %1228 = vmatpush1.msra.mxu0 0.0
    %1229 = vmatprep.mubr.f32.mxu0 0.0
    %1230 = vmatmul.mubr.f32.gmra.mrb[0].mxu0 %v1160
    %v1231 = vpop.f32.mrb[0].mxu0
    %v1232 = vadd.f32 %v1158, %v1231
    %v1233 = vpop.f32.mrb[0].mxu0
    %1234 = vmatprep.mubr.f32.mxu0 0.0
    %1235 = vmatmul.mubr.f32.gmra.mrb[0].mxu0 %v1163
    %v1236 = vpop.f32.mrb[0].mxu0
    %v1237 = vadd.f32 %v1158, %v1236
    %v1238 = vpop.f32.mrb[0].mxu0
    %1239 = vdwg.mxu0
    %v1240 = vmul.f32 %v1232, %v1232
    %v1241 = vmul.f32 %v1237, %v1237
    %v1242 = vmul.f32 %v1232, %v1240
    %v1243 = vmul.f32 %v1237, %v1241
    %v1244 = vmul.f32 %v1242, 0.044715
    %v1245 = vmul.f32 %v1243, 0.044715
    %v1246 = vadd.f32 %v1232, %v1244
    %v1247 = vadd.f32 %v1237, %v1245
    %v1248 = vmul.f32 %v1246, 0.7978846
    %v1249 = vmul.f32 %v1247, 0.7978846
    %v1250 = vtanh.pop %v1248
    %v1251 = vtanh.pop %v1249
    %v1252 = vadd.f32 %v1250, 1.0
    %v1253 = vadd.f32 %v1251, 1.0
    %v1254 = vmul.f32 %v1252, 0.5
    %v1255 = vmul.f32 %v1253, 0.5
    %v1256 = vmul.f32 %v1232, %v1254
    %v1257 = vmul.f32 %v1237, %v1255
    %v1258 = vlaneseq
    %v1259 = vshrl.u32 %v1258, 7
    %v1260 = vsub.s32 0, %v1259
    %v1261 = vrot.slane %v252, %v1260
    %1266 = vrot.lane.b32.xlu0 %v240, 64
    %v1267 = vpop.permute.xlu0 %1266
    %1268 = vrot.lane.b32.xlu0 %v242, 64
    %v1269 = vpop.permute.xlu0 %1268
    %1270 = vrot.lane.b32.xlu0 %v244, 64
    %v1271 = vpop.permute.xlu0 %1270
    %1272 = vrot.lane.b32.xlu0 %v246, 64
    %v1273 = vpop.permute.xlu0 %1272
    %vm1274 = vcmask 523264
    %v1276 = vsel %vm1274, %v1256, 0
    %v1279 = vsel %vm1274, %v1257, 0
    %v1281 = vsel %vm1274, %v1267, 0
    %v1283 = vsel %vm1274, %v1269, 0
    %v1285 = vsel %vm1274, %v1271, 0
    %v1287 = vsel %vm1274, %v1273, 0
    %1289 = vmatprep.subr.mxu0 0.0
    %1290 = vmatpush1.xpose.msra.mxu0 %v1281
    %1291 = vmatprep.subr.mxu0 0.0
    %1292 = vmatpush1.xpose.msra.mxu0 %v1283
    %1293 = vmatprep.subr.mxu0 0.0
    %1294 = vmatpush1.xpose.msra.mxu0 %v1285
    %1295 = vmatprep.subr.mxu0 0.0
    %1296 = vmatpush1.xpose.msra.mxu0 %v1287
    %1297 = vmatprep.subr.mxu0 0.0
    %1298 = vmatpush1.xpose.msra.mxu0 0.0
    %1299 = vmatprep.subr.mxu0 0.0
    %1300 = vmatpush1.xpose.msra.mxu0 0.0
    %1301 = vmatprep.subr.mxu0 0.0
    %1302 = vmatpush1.xpose.msra.mxu0 0.0
    %1303 = vmatprep.subr.mxu0 0.0
    %1304 = vmatpush1.xpose.msra.mxu0 0.0
    %1305 = vmatprep.subr.mxu0 0.0
    %1306 = vmatpush1.xpose.msra.mxu0 0.0
    %1307 = vmatprep.subr.mxu0 0.0
    %1308 = vmatpush1.xpose.msra.mxu0 0.0
    %1309 = vmatprep.subr.mxu0 0.0
    %1310 = vmatpush1.xpose.msra.mxu0 0.0
    %1311 = vmatprep.subr.mxu0 0.0
    %1312 = vmatpush1.xpose.msra.mxu0 0.0
    %1313 = vmatprep.subr.mxu0 0.0
    %1314 = vmatpush1.xpose.msra.mxu0 0.0
    %1315 = vmatprep.subr.mxu0 0.0
    %1316 = vmatpush1.xpose.msra.mxu0 0.0
    %1317 = vmatprep.subr.mxu0 0.0
    %1318 = vmatpush1.xpose.msra.mxu0 0.0
    %1319 = vmatprep.subr.mxu0 0.0
    %1320 = vmatpush1.xpose.msra.mxu0 0.0
    %1321 = vmatprep.subr.mxu0 0.0
    %1322 = vmatpush1.xpose.msra.mxu0 0.0
    %1323 = vmatprep.subr.mxu0 0.0
    %1324 = vmatpush1.xpose.msra.mxu0 0.0
    %1325 = vmatprep.subr.mxu0 0.0
    %1326 = vmatpush1.xpose.msra.mxu0 0.0
    %1327 = vmatprep.subr.mxu0 0.0
    %1328 = vmatpush1.xpose.msra.mxu0 0.0
    %1329 = vmatprep.subr.mxu0 0.0
    %1330 = vmatpush1.xpose.msra.mxu0 0.0
    %1331 = vmatprep.subr.mxu0 0.0
    %1332 = vmatpush1.xpose.msra.mxu0 0.0
    %1333 = vmatprep.subr.mxu0 0.0
    %1334 = vmatpush1.xpose.msra.mxu0 0.0
    %1335 = vmatprep.subr.mxu0 0.0
    %1336 = vmatpush1.xpose.msra.mxu0 0.0
    %1337 = vmatprep.subr.mxu0 0.0
    %1338 = vmatpush1.xpose.msra.mxu0 0.0
    %1339 = vmatprep.subr.mxu0 0.0
    %1340 = vmatpush1.xpose.msra.mxu0 0.0
    %1341 = vmatprep.subr.mxu0 0.0
    %1342 = vmatpush1.xpose.msra.mxu0 0.0
    %1343 = vmatprep.subr.mxu0 0.0
    %1344 = vmatpush1.xpose.msra.mxu0 0.0
    %1345 = vmatprep.subr.mxu0 0.0
    %1346 = vmatpush1.xpose.msra.mxu0 0.0
    %1347 = vmatprep.subr.mxu0 0.0
    %1348 = vmatpush1.xpose.msra.mxu0 0.0
    %1349 = vmatprep.subr.mxu0 0.0
    %1350 = vmatpush1.xpose.msra.mxu0 0.0
    %1351 = vmatprep.subr.mxu0 0.0
    %1352 = vmatpush1.xpose.msra.mxu0 0.0
    %1353 = vmatprep.mubr.f32.mxu0 0.0
    %1354 = vmatmul.mubr.f32.gmra.mrb[0].mxu0 %v1276
    %v1355 = vpop.f32.mrb[0].mxu0
    %v1356 = vadd.f32 %v1261, %v1355
    %v1357 = vpop.f32.mrb[0].mxu0
    %1358 = vmatprep.mubr.f32.mxu0 0.0
    %1359 = vmatmul.mubr.f32.gmra.mrb[0].mxu0 %v1279
    %v1360 = vpop.f32.mrb[0].mxu0
    %v1361 = vadd.f32 %v1261, %v1360
    %v1362 = vpop.f32.mrb[0].mxu0
    %1363 = vdwg.mxu0
    %v1364 = vadd.f32 %v1153, %v1356
    %v1365 = vadd.f32 %v1154, %v1361
    %v1366 = vsel %vm165, %v1364, 0.0
    %1367 = vadd.xlane.f32.xlu0 %v1366
    %v1368 = vpop.xlane.xlu0 %1367
    %v1369 = vsel %vm165, %v1365, 0.0
    %1370 = vadd.xlane.f32.xlu0 %v1369
    %v1371 = vpop.xlane.xlu0 %1370
    %v1372 = vmul.f32 %v1368, %v172
    %v1373 = vmul.f32 %v1371, %v172
    %v1374 = vsub.f32 %v1364, %v1372
    %v1375 = vsub.f32 %v1365, %v1373
    %v1376 = vmul.f32 %v1374, %v1374
    %v1377 = vmul.f32 %v1375, %v1375
    %v1378 = vsel %vm165, %v1376, 0.0
    %1379 = vadd.xlane.f32.xlu0 %v1378
    %v1380 = vpop.xlane.xlu0 %1379
    %v1381 = vsel %vm165, %v1377, 0.0
    %1382 = vadd.xlane.f32.xlu0 %v1381
    %v1383 = vpop.xlane.xlu0 %1382
    %v1384 = vmul.f32 %v1380, %v172
    %v1385 = vmul.f32 %v1383, %v172
    %v1386 = vadd.f32 %v1384, 1e-12
    %v1387 = vadd.f32 %v1385, 1e-12
    %v1388 = vrsqrt.pop %v1386
    %v1389 = vrsqrt.pop %v1387
    %v1390 = vmul.f32 %v1374, %v1388
    %v1391 = vmul.f32 %v1375, %v1389
    %v1392 = vlaneseq
    %v1393 = vshrl.u32 %v1392, 7
    %v1394 = vsub.s32 0, %v1393
    %v1395 = vrot.slane %v253, %v1394
    %v1396 = vmul.f32 %v1390, %v1395
    %v1397 = vmul.f32 %v1391, %v1395
    %v1398 = vlaneseq
    %v1399 = vshrl.u32 %v1398, 7
    %v1400 = vsub.s32 0, %v1399
    %v1401 = vrot.slane %v254, %v1400
    %v1402 = vadd.f32 %v1396, %v1401
    %v1403 = vadd.f32 %v1397, %v1401
    %s1404 = scalar_lea.vmem [#allocation2], 32
    %v1405 = vld [vmem:[%s1404] sm:$0xff]
    %v1406 = vld [vmem:[%s1404 + $0x8] sm:$0xff]
    %v1407 = vld [vmem:[%s1404 + $0x10] sm:$0xff]
    %v1408 = vld [vmem:[%s1404 + $0x18] sm:$0xff]
    %v1409 = vunpack.c.l.bf16 %v1405
    %v1410 = vunpack.c.h.bf16 %v1405
    %v1411 = vunpack.c.l.bf16 %v1406
    %v1412 = vunpack.c.h.bf16 %v1406
    %v1413 = vunpack.c.l.bf16 %v1407
    %v1414 = vunpack.c.h.bf16 %v1407
    %v1415 = vunpack.c.l.bf16 %v1408
    %v1416 = vunpack.c.h.bf16 %v1408
    %v1417 = vld [vmem:[#allocation5 + $0xa0] sm:$0x1]
    %v1418 = vld [vmem:[#allocation5 + $0xa1] sm:$0x1]
    %v1419 = vld [vmem:[#allocation5 + $0xa2] sm:$0x1]
    %v1420 = vld [vmem:[#allocation5 + $0xa3] sm:$0x1]
    %v1421 = vld [vmem:[#allocation5 + $0xa4] sm:$0x1]
    %v1422 = vld [vmem:[#allocation5 + $0xa5] sm:$0x1]
    %v1423 = vld [vmem:[#allocation5 + $0xa6] sm:$0x1]
    %v1424 = vld [vmem:[#allocation5 + $0xa7] sm:$0x1]
    %v1425 = vlaneseq
    %v1426 = vshrl.u32 %v1425, 7
    %v1427 = vsub.s32 0, %v1426
    %v1428 = vrot.slane %v1417, %v1427
    %v1430 = vsel %vm165, %v1402, 0
    %v1433 = vsel %vm165, %v1403, 0
    %1435 = vmatprep.subr.mxu0 0.0
    %1436 = vmatpush1.msra.mxu0 %v1409
    %1437 = vmatprep.subr.mxu0 0.0
    %1438 = vmatpush1.msra.mxu0 %v1411
    %1439 = vmatprep.subr.mxu0 0.0
    %1440 = vmatpush1.msra.mxu0 %v1413
    %1441 = vmatprep.subr.mxu0 0.0
    %1442 = vmatpush1.msra.mxu0 %v1415
    %1443 = vmatprep.subr.mxu0 0.0
    %1444 = vmatpush1.msra.mxu0 0.0
    %1445 = vmatprep.subr.mxu0 0.0
    %1446 = vmatpush1.msra.mxu0 0.0
    %1447 = vmatprep.subr.mxu0 0.0
    %1448 = vmatpush1.msra.mxu0 0.0
    %1449 = vmatprep.subr.mxu0 0.0
    %1450 = vmatpush1.msra.mxu0 0.0
    %1451 = vmatprep.subr.mxu0 0.0
    %1452 = vmatpush1.msra.mxu0 0.0
    %1453 = vmatprep.subr.mxu0 0.0
    %1454 = vmatpush1.msra.mxu0 0.0
    %1455 = vmatprep.subr.mxu0 0.0
    %1456 = vmatpush1.msra.mxu0 0.0
    %1457 = vmatprep.subr.mxu0 0.0
    %1458 = vmatpush1.msra.mxu0 0.0
    %1459 = vmatprep.subr.mxu0 0.0
    %1460 = vmatpush1.msra.mxu0 0.0
    %1461 = vmatprep.subr.mxu0 0.0
    %1462 = vmatpush1.msra.mxu0 0.0
    %1463 = vmatprep.subr.mxu0 0.0
    %1464 = vmatpush1.msra.mxu0 0.0
    %1465 = vmatprep.subr.mxu0 0.0
    %1466 = vmatpush1.msra.mxu0 0.0
    %1467 = vmatprep.subr.mxu0 0.0
    %1468 = vmatpush1.msra.mxu0 0.0
    %1469 = vmatprep.subr.mxu0 0.0
    %1470 = vmatpush1.msra.mxu0 0.0
    %1471 = vmatprep.subr.mxu0 0.0
    %1472 = vmatpush1.msra.mxu0 0.0
    %1473 = vmatprep.subr.mxu0 0.0
    %1474 = vmatpush1.msra.mxu0 0.0
    %1475 = vmatprep.subr.mxu0 0.0
    %1476 = vmatpush1.msra.mxu0 0.0
    %1477 = vmatprep.subr.mxu0 0.0
    %1478 = vmatpush1.msra.mxu0 0.0
    %1479 = vmatprep.subr.mxu0 0.0
    %1480 = vmatpush1.msra.mxu0 0.0
    %1481 = vmatprep.subr.mxu0 0.0
    %1482 = vmatpush1.msra.mxu0 0.0
    %1483 = vmatprep.subr.mxu0 0.0
    %1484 = vmatpush1.msra.mxu0 0.0
    %1485 = vmatprep.subr.mxu0 0.0
    %1486 = vmatpush1.msra.mxu0 0.0
    %1487 = vmatprep.subr.mxu0 0.0
    %1488 = vmatpush1.msra.mxu0 0.0
    %1489 = vmatprep.subr.mxu0 0.0
    %1490 = vmatpush1.msra.mxu0 0.0
    %1491 = vmatprep.subr.mxu0 0.0
    %1492 = vmatpush1.msra.mxu0 0.0
    %1493 = vmatprep.subr.mxu0 0.0
    %1494 = vmatpush1.msra.mxu0 0.0
    %1495 = vmatprep.subr.mxu0 0.0
    %1496 = vmatpush1.msra.mxu0 0.0
    %1497 = vmatprep.subr.mxu0 0.0
    %1498 = vmatpush1.msra.mxu0 0.0
    %1499 = vmatprep.mubr.f32.mxu0 0.0
    %1500 = vmatmul.mubr.f32.gmra.mrb[0].mxu0 %v1430
    %v1501 = vpop.f32.mrb[0].mxu0
    %v1502 = vadd.f32 %v1428, %v1501
    %v1503 = vpop.f32.mrb[0].mxu0
    %1504 = vmatprep.mubr.f32.mxu0 0.0
    %1505 = vmatmul.mubr.f32.gmra.mrb[0].mxu0 %v1433
    %v1506 = vpop.f32.mrb[0].mxu0
    %v1507 = vadd.f32 %v1428, %v1506
    %v1508 = vpop.f32.mrb[0].mxu0
    %1509 = vdwg.mxu0
    %1511 = vrot.lane.b32.xlu0 %v1502, 96
    %v1512 = vpop.permute.xlu0 %1511
    %v1513 = vsel %vm343, %v1502, 0
    %v1515 = vsel %vm343, %v1512, 0
    %1517 = vmatprep.subr.mxu0 0.0
    %1518 = vmatpush1.xpose.msra.mxu0 %v1515
    %1519 = vmatprep.subr.mxu0 0.0
    %1520 = vmatpush1.xpose.msra.mxu0 0.0
    %1521 = vmatprep.subr.mxu0 0.0
    %1522 = vmatpush1.xpose.msra.mxu0 0.0
    %1523 = vmatprep.subr.mxu0 0.0
    %1524 = vmatpush1.xpose.msra.mxu0 0.0
    %1525 = vmatprep.subr.mxu0 0.0
    %1526 = vmatpush1.xpose.msra.mxu0 0.0
    %1527 = vmatprep.subr.mxu0 0.0
    %1528 = vmatpush1.xpose.msra.mxu0 0.0
    %1529 = vmatprep.subr.mxu0 0.0
    %1530 = vmatpush1.xpose.msra.mxu0 0.0
    %1531 = vmatprep.subr.mxu0 0.0
    %1532 = vmatpush1.xpose.msra.mxu0 0.0
    %1533 = vmatprep.subr.mxu0 0.0
    %1534 = vmatpush1.xpose.msra.mxu0 0.0
    %1535 = vmatprep.subr.mxu0 0.0
    %1536 = vmatpush1.xpose.msra.mxu0 0.0
    %1537 = vmatprep.subr.mxu0 0.0
    %1538 = vmatpush1.xpose.msra.mxu0 0.0
    %1539 = vmatprep.subr.mxu0 0.0
    %1540 = vmatpush1.xpose.msra.mxu0 0.0
    %1541 = vmatprep.subr.mxu0 0.0
    %1542 = vmatpush1.xpose.msra.mxu0 0.0
    %1543 = vmatprep.subr.mxu0 0.0
    %1544 = vmatpush1.xpose.msra.mxu0 0.0
    %1545 = vmatprep.subr.mxu0 0.0
    %1546 = vmatpush1.xpose.msra.mxu0 0.0
    %1547 = vmatprep.subr.mxu0 0.0
    %1548 = vmatpush1.xpose.msra.mxu0 0.0
    %1549 = vmatprep.subr.mxu0 0.0
    %1550 = vmatpush1.xpose.msra.mxu0 0.0
    %1551 = vmatprep.subr.mxu0 0.0
    %1552 = vmatpush1.xpose.msra.mxu0 0.0
    %1553 = vmatprep.subr.mxu0 0.0
    %1554 = vmatpush1.xpose.msra.mxu0 0.0
    %1555 = vmatprep.subr.mxu0 0.0
    %1556 = vmatpush1.xpose.msra.mxu0 0.0
    %1557 = vmatprep.subr.mxu0 0.0
    %1558 = vmatpush1.xpose.msra.mxu0 0.0
    %1559 = vmatprep.subr.mxu0 0.0
    %1560 = vmatpush1.xpose.msra.mxu0 0.0
    %1561 = vmatprep.subr.mxu0 0.0
    %1562 = vmatpush1.xpose.msra.mxu0 0.0
    %1563 = vmatprep.subr.mxu0 0.0
    %1564 = vmatpush1.xpose.msra.mxu0 0.0
    %1565 = vmatprep.subr.mxu0 0.0
    %1566 = vmatpush1.xpose.msra.mxu0 0.0
    %1567 = vmatprep.subr.mxu0 0.0
    %1568 = vmatpush1.xpose.msra.mxu0 0.0
    %1569 = vmatprep.subr.mxu0 0.0
    %1570 = vmatpush1.xpose.msra.mxu0 0.0
    %1571 = vmatprep.subr.mxu0 0.0
    %1572 = vmatpush1.xpose.msra.mxu0 0.0
    %1573 = vmatprep.subr.mxu0 0.0
    %1574 = vmatpush1.xpose.msra.mxu0 0.0
    %1575 = vmatprep.subr.mxu0 0.0
    %1576 = vmatpush1.xpose.msra.mxu0 0.0
    %1577 = vmatprep.subr.mxu0 0.0
    %1578 = vmatpush1.xpose.msra.mxu0 0.0
    %1579 = vmatprep.subr.mxu0 0.0
    %1580 = vmatpush1.xpose.msra.mxu0 0.0
    %1581 = vmatprep.mubr.f32.mxu0 0.0
    %1582 = vmatmul.mubr.f32.gmra.mrb[0].mxu0 %v1513
    %v1583 = vpop.f32.mrb[0].mxu0
    %v1584 = vadd.f32 0.0, %v1583
    %v1585 = vpop.f32.mrb[0].mxu0
    %1586 = vdwg.mxu0
    %1588 = vrot.lane.b32.xlu0 %v1507, 96
    %v1589 = vpop.permute.xlu0 %1588
    %v1590 = vsel %vm343, %v1507, 0
    %v1592 = vsel %vm343, %v1589, 0
    %1594 = vmatprep.subr.mxu0 0.0
    %1595 = vmatpush1.xpose.msra.mxu0 %v1592
    %1596 = vmatprep.subr.mxu0 0.0
    %1597 = vmatpush1.xpose.msra.mxu0 0.0
    %1598 = vmatprep.subr.mxu0 0.0
    %1599 = vmatpush1.xpose.msra.mxu0 0.0
    %1600 = vmatprep.subr.mxu0 0.0
    %1601 = vmatpush1.xpose.msra.mxu0 0.0
    %1602 = vmatprep.subr.mxu0 0.0
    %1603 = vmatpush1.xpose.msra.mxu0 0.0
    %1604 = vmatprep.subr.mxu0 0.0
    %1605 = vmatpush1.xpose.msra.mxu0 0.0
    %1606 = vmatprep.subr.mxu0 0.0
    %1607 = vmatpush1.xpose.msra.mxu0 0.0
    %1608 = vmatprep.subr.mxu0 0.0
    %1609 = vmatpush1.xpose.msra.mxu0 0.0
    %1610 = vmatprep.subr.mxu0 0.0
    %1611 = vmatpush1.xpose.msra.mxu0 0.0
    %1612 = vmatprep.subr.mxu0 0.0
    %1613 = vmatpush1.xpose.msra.mxu0 0.0
    %1614 = vmatprep.subr.mxu0 0.0
    %1615 = vmatpush1.xpose.msra.mxu0 0.0
    %1616 = vmatprep.subr.mxu0 0.0
    %1617 = vmatpush1.xpose.msra.mxu0 0.0
    %1618 = vmatprep.subr.mxu0 0.0
    %1619 = vmatpush1.xpose.msra.mxu0 0.0
    %1620 = vmatprep.subr.mxu0 0.0
    %1621 = vmatpush1.xpose.msra.mxu0 0.0
    %1622 = vmatprep.subr.mxu0 0.0
    %1623 = vmatpush1.xpose.msra.mxu0 0.0
    %1624 = vmatprep.subr.mxu0 0.0
    %1625 = vmatpush1.xpose.msra.mxu0 0.0
    %1626 = vmatprep.subr.mxu0 0.0
    %1627 = vmatpush1.xpose.msra.mxu0 0.0
    %1628 = vmatprep.subr.mxu0 0.0
    %1629 = vmatpush1.xpose.msra.mxu0 0.0
    %1630 = vmatprep.subr.mxu0 0.0
    %1631 = vmatpush1.xpose.msra.mxu0 0.0
    %1632 = vmatprep.subr.mxu0 0.0
    %1633 = vmatpush1.xpose.msra.mxu0 0.0
    %1634 = vmatprep.subr.mxu0 0.0
    %1635 = vmatpush1.xpose.msra.mxu0 0.0
    %1636 = vmatprep.subr.mxu0 0.0
    %1637 = vmatpush1.xpose.msra.mxu0 0.0
    %1638 = vmatprep.subr.mxu0 0.0
    %1639 = vmatpush1.xpose.msra.mxu0 0.0
    %1640 = vmatprep.subr.mxu0 0.0
    %1641 = vmatpush1.xpose.msra.mxu0 0.0
    %1642 = vmatprep.subr.mxu0 0.0
    %1643 = vmatpush1.xpose.msra.mxu0 0.0
    %1644 = vmatprep.subr.mxu0 0.0
    %1645 = vmatpush1.xpose.msra.mxu0 0.0
    %1646 = vmatprep.subr.mxu0 0.0
    %1647 = vmatpush1.xpose.msra.mxu0 0.0
    %1648 = vmatprep.subr.mxu0 0.0
    %1649 = vmatpush1.xpose.msra.mxu0 0.0
    %1650 = vmatprep.subr.mxu0 0.0
    %1651 = vmatpush1.xpose.msra.mxu0 0.0
    %1652 = vmatprep.subr.mxu0 0.0
    %1653 = vmatpush1.xpose.msra.mxu0 0.0
    %1654 = vmatprep.subr.mxu0 0.0
    %1655 = vmatpush1.xpose.msra.mxu0 0.0
    %1656 = vmatprep.subr.mxu0 0.0
    %1657 = vmatpush1.xpose.msra.mxu0 0.0
    %1658 = vmatprep.mubr.f32.mxu0 0.0
    %1659 = vmatmul.mubr.f32.gmra.mrb[0].mxu0 %v1590
    %v1660 = vpop.f32.mrb[0].mxu0
    %v1661 = vadd.f32 0.0, %v1660
    %v1662 = vpop.f32.mrb[0].mxu0
    %1663 = vdwg.mxu0
    %v1664 = vmul.f32 %v1584, 0.25
    %v1665 = vmul.f32 %v1661, 0.25
    %v1666 = vadd.f32 %v1664, %v502
    %v1667 = vadd.f32 %v1665, %v506
    %v1668 = vmul.f32 %v1666, 1.442695
    %v1669 = vpow.pop %v1668
    %v1670 = vmul.f32 %v1667, 1.442695
    %v1671 = vpow.pop %v1670
    %v1672 = vsel %vm515, %v1669, 0.0
    %1673 = vadd.xlane.f32.xlu0 %v1672
    %v1674 = vpop.xlane.xlu0 %1673
    %v1675 = vsel %vm515, %v1671, 0.0
    %1676 = vadd.xlane.f32.xlu0 %v1675
    %v1677 = vpop.xlane.xlu0 %1676
    %v1678 = vrcp.pop %v1674
    %v1679 = vrcp.pop %v1677
    %v1680 = vmul.f32 %v1669, %v1678
    %v1681 = vmul.f32 %v1671, %v1679
    %1682 = vrot.lane.b32.xlu0 %v1502, 64
    %v1683 = vpop.permute.xlu0 %1682
    %v1686 = vsel %vm515, %v1680, 0
    %1688 = vmatprep.subr.mxu0 0.0
    %1689 = vmatpush1.msra.mxu0 %v1683
    %1690 = vmatprep.subr.mxu0 0.0
    %1691 = vmatpush1.msra.mxu0 0.0
    %1692 = vmatprep.subr.mxu0 0.0
    %1693 = vmatpush1.msra.mxu0 0.0
    %1694 = vmatprep.subr.mxu0 0.0
    %1695 = vmatpush1.msra.mxu0 0.0
    %1696 = vmatprep.subr.mxu0 0.0
    %1697 = vmatpush1.msra.mxu0 0.0
    %1698 = vmatprep.subr.mxu0 0.0
    %1699 = vmatpush1.msra.mxu0 0.0
    %1700 = vmatprep.subr.mxu0 0.0
    %1701 = vmatpush1.msra.mxu0 0.0
    %1702 = vmatprep.subr.mxu0 0.0
    %1703 = vmatpush1.msra.mxu0 0.0
    %1704 = vmatprep.subr.mxu0 0.0
    %1705 = vmatpush1.msra.mxu0 0.0
    %1706 = vmatprep.subr.mxu0 0.0
    %1707 = vmatpush1.msra.mxu0 0.0
    %1708 = vmatprep.subr.mxu0 0.0
    %1709 = vmatpush1.msra.mxu0 0.0
    %1710 = vmatprep.subr.mxu0 0.0
    %1711 = vmatpush1.msra.mxu0 0.0
    %1712 = vmatprep.subr.mxu0 0.0
    %1713 = vmatpush1.msra.mxu0 0.0
    %1714 = vmatprep.subr.mxu0 0.0
    %1715 = vmatpush1.msra.mxu0 0.0
    %1716 = vmatprep.subr.mxu0 0.0
    %1717 = vmatpush1.msra.mxu0 0.0
    %1718 = vmatprep.subr.mxu0 0.0
    %1719 = vmatpush1.msra.mxu0 0.0
    %1720 = vmatprep.subr.mxu0 0.0
    %1721 = vmatpush1.msra.mxu0 0.0
    %1722 = vmatprep.subr.mxu0 0.0
    %1723 = vmatpush1.msra.mxu0 0.0
    %1724 = vmatprep.subr.mxu0 0.0
    %1725 = vmatpush1.msra.mxu0 0.0
    %1726 = vmatprep.subr.mxu0 0.0
    %1727 = vmatpush1.msra.mxu0 0.0
    %1728 = vmatprep.subr.mxu0 0.0
    %1729 = vmatpush1.msra.mxu0 0.0
    %1730 = vmatprep.subr.mxu0 0.0
    %1731 = vmatpush1.msra.mxu0 0.0
    %1732 = vmatprep.subr.mxu0 0.0
    %1733 = vmatpush1.msra.mxu0 0.0
    %1734 = vmatprep.subr.mxu0 0.0
    %1735 = vmatpush1.msra.mxu0 0.0
    %1736 = vmatprep.subr.mxu0 0.0
    %1737 = vmatpush1.msra.mxu0 0.0
    %1738 = vmatprep.subr.mxu0 0.0
    %1739 = vmatpush1.msra.mxu0 0.0
    %1740 = vmatprep.subr.mxu0 0.0
    %1741 = vmatpush1.msra.mxu0 0.0
    %1742 = vmatprep.subr.mxu0 0.0
    %1743 = vmatpush1.msra.mxu0 0.0
    %1744 = vmatprep.subr.mxu0 0.0
    %1745 = vmatpush1.msra.mxu0 0.0
    %1746 = vmatprep.subr.mxu0 0.0
    %1747 = vmatpush1.msra.mxu0 0.0
    %1748 = vmatprep.subr.mxu0 0.0
    %1749 = vmatpush1.msra.mxu0 0.0
    %1750 = vmatprep.subr.mxu0 0.0
    %1751 = vmatpush1.msra.mxu0 0.0
    %1752 = vmatprep.mubr.f32.mxu0 0.0
    %1753 = vmatmul.mubr.f32.gmra.mrb[0].mxu0 %v1686
    %v1754 = vpop.f32.mrb[0].mxu0
    %v1755 = vadd.f32 0.0, %v1754
    %v1756 = vpop.f32.mrb[0].mxu0
    %1757 = vdwg.mxu0
    %1758 = vrot.lane.b32.xlu0 %v1507, 64
    %v1759 = vpop.permute.xlu0 %1758
    %v1762 = vsel %vm515, %v1681, 0
    %1764 = vmatprep.subr.mxu0 0.0
    %1765 = vmatpush1.msra.mxu0 %v1759
    %1766 = vmatprep.subr.mxu0 0.0
    %1767 = vmatpush1.msra.mxu0 0.0
    %1768 = vmatprep.subr.mxu0 0.0
    %1769 = vmatpush1.msra.mxu0 0.0
    %1770 = vmatprep.subr.mxu0 0.0
    %1771 = vmatpush1.msra.mxu0 0.0
    %1772 = vmatprep.subr.mxu0 0.0
    %1773 = vmatpush1.msra.mxu0 0.0
    %1774 = vmatprep.subr.mxu0 0.0
    %1775 = vmatpush1.msra.mxu0 0.0
    %1776 = vmatprep.subr.mxu0 0.0
    %1777 = vmatpush1.msra.mxu0 0.0
    %1778 = vmatprep.subr.mxu0 0.0
    %1779 = vmatpush1.msra.mxu0 0.0
    %1780 = vmatprep.subr.mxu0 0.0
    %1781 = vmatpush1.msra.mxu0 0.0
    %1782 = vmatprep.subr.mxu0 0.0
    %1783 = vmatpush1.msra.mxu0 0.0
    %1784 = vmatprep.subr.mxu0 0.0
    %1785 = vmatpush1.msra.mxu0 0.0
    %1786 = vmatprep.subr.mxu0 0.0
    %1787 = vmatpush1.msra.mxu0 0.0
    %1788 = vmatprep.subr.mxu0 0.0
    %1789 = vmatpush1.msra.mxu0 0.0
    %1790 = vmatprep.subr.mxu0 0.0
    %1791 = vmatpush1.msra.mxu0 0.0
    %1792 = vmatprep.subr.mxu0 0.0
    %1793 = vmatpush1.msra.mxu0 0.0
    %1794 = vmatprep.subr.mxu0 0.0
    %1795 = vmatpush1.msra.mxu0 0.0
    %1796 = vmatprep.subr.mxu0 0.0
    %1797 = vmatpush1.msra.mxu0 0.0
    %1798 = vmatprep.subr.mxu0 0.0
    %1799 = vmatpush1.msra.mxu0 0.0
    %1800 = vmatprep.subr.mxu0 0.0
    %1801 = vmatpush1.msra.mxu0 0.0
    %1802 = vmatprep.subr.mxu0 0.0
    %1803 = vmatpush1.msra.mxu0 0.0
    %1804 = vmatprep.subr.mxu0 0.0
    %1805 = vmatpush1.msra.mxu0 0.0
    %1806 = vmatprep.subr.mxu0 0.0
    %1807 = vmatpush1.msra.mxu0 0.0
    %1808 = vmatprep.subr.mxu0 0.0
    %1809 = vmatpush1.msra.mxu0 0.0
    %1810 = vmatprep.subr.mxu0 0.0
    %1811 = vmatpush1.msra.mxu0 0.0
    %1812 = vmatprep.subr.mxu0 0.0
    %1813 = vmatpush1.msra.mxu0 0.0
    %1814 = vmatprep.subr.mxu0 0.0
    %1815 = vmatpush1.msra.mxu0 0.0
    %1816 = vmatprep.subr.mxu0 0.0
    %1817 = vmatpush1.msra.mxu0 0.0
    %1818 = vmatprep.subr.mxu0 0.0
    %1819 = vmatpush1.msra.mxu0 0.0
    %1820 = vmatprep.subr.mxu0 0.0
    %1821 = vmatpush1.msra.mxu0 0.0
    %1822 = vmatprep.subr.mxu0 0.0
    %1823 = vmatpush1.msra.mxu0 0.0
    %1824 = vmatprep.subr.mxu0 0.0
    %1825 = vmatpush1.msra.mxu0 0.0
    %1826 = vmatprep.subr.mxu0 0.0
    %1827 = vmatpush1.msra.mxu0 0.0
    %1828 = vmatprep.mubr.f32.mxu0 0.0
    %1829 = vmatmul.mubr.f32.gmra.mrb[0].mxu0 %v1762
    %v1830 = vpop.f32.mrb[0].mxu0
    %v1831 = vadd.f32 0.0, %v1830
    %v1832 = vpop.f32.mrb[0].mxu0
    %1833 = vdwg.mxu0
    %1834 = vrot.lane.b32.xlu0 %v1502, 112
    %v1835 = vpop.permute.xlu0 %1834
    %1836 = vrot.lane.b32.xlu0 %v1502, 80
    %v1837 = vpop.permute.xlu0 %1836
    %v1838 = vsel %vm343, %v1835, 0
    %v1840 = vsel %vm343, %v1837, 0
    %1842 = vmatprep.subr.mxu0 0.0
    %1843 = vmatpush1.xpose.msra.mxu0 %v1840
    %1844 = vmatprep.subr.mxu0 0.0
    %1845 = vmatpush1.xpose.msra.mxu0 0.0
    %1846 = vmatprep.subr.mxu0 0.0
    %1847 = vmatpush1.xpose.msra.mxu0 0.0
    %1848 = vmatprep.subr.mxu0 0.0
    %1849 = vmatpush1.xpose.msra.mxu0 0.0
    %1850 = vmatprep.subr.mxu0 0.0
    %1851 = vmatpush1.xpose.msra.mxu0 0.0
    %1852 = vmatprep.subr.mxu0 0.0
    %1853 = vmatpush1.xpose.msra.mxu0 0.0
    %1854 = vmatprep.subr.mxu0 0.0
    %1855 = vmatpush1.xpose.msra.mxu0 0.0
    %1856 = vmatprep.subr.mxu0 0.0
    %1857 = vmatpush1.xpose.msra.mxu0 0.0
    %1858 = vmatprep.subr.mxu0 0.0
    %1859 = vmatpush1.xpose.msra.mxu0 0.0
    %1860 = vmatprep.subr.mxu0 0.0
    %1861 = vmatpush1.xpose.msra.mxu0 0.0
    %1862 = vmatprep.subr.mxu0 0.0
    %1863 = vmatpush1.xpose.msra.mxu0 0.0
    %1864 = vmatprep.subr.mxu0 0.0
    %1865 = vmatpush1.xpose.msra.mxu0 0.0
    %1866 = vmatprep.subr.mxu0 0.0
    %1867 = vmatpush1.xpose.msra.mxu0 0.0
    %1868 = vmatprep.subr.mxu0 0.0
    %1869 = vmatpush1.xpose.msra.mxu0 0.0
    %1870 = vmatprep.subr.mxu0 0.0
    %1871 = vmatpush1.xpose.msra.mxu0 0.0
    %1872 = vmatprep.subr.mxu0 0.0
    %1873 = vmatpush1.xpose.msra.mxu0 0.0
    %1874 = vmatprep.subr.mxu0 0.0
    %1875 = vmatpush1.xpose.msra.mxu0 0.0
    %1876 = vmatprep.subr.mxu0 0.0
    %1877 = vmatpush1.xpose.msra.mxu0 0.0
    %1878 = vmatprep.subr.mxu0 0.0
    %1879 = vmatpush1.xpose.msra.mxu0 0.0
    %1880 = vmatprep.subr.mxu0 0.0
    %1881 = vmatpush1.xpose.msra.mxu0 0.0
    %1882 = vmatprep.subr.mxu0 0.0
    %1883 = vmatpush1.xpose.msra.mxu0 0.0
    %1884 = vmatprep.subr.mxu0 0.0
    %1885 = vmatpush1.xpose.msra.mxu0 0.0
    %1886 = vmatprep.subr.mxu0 0.0
    %1887 = vmatpush1.xpose.msra.mxu0 0.0
    %1888 = vmatprep.subr.mxu0 0.0
    %1889 = vmatpush1.xpose.msra.mxu0 0.0
    %1890 = vmatprep.subr.mxu0 0.0
    %1891 = vmatpush1.xpose.msra.mxu0 0.0
    %1892 = vmatprep.subr.mxu0 0.0
    %1893 = vmatpush1.xpose.msra.mxu0 0.0
    %1894 = vmatprep.subr.mxu0 0.0
    %1895 = vmatpush1.xpose.msra.mxu0 0.0
    %1896 = vmatprep.subr.mxu0 0.0
    %1897 = vmatpush1.xpose.msra.mxu0 0.0
    %1898 = vmatprep.subr.mxu0 0.0
    %1899 = vmatpush1.xpose.msra.mxu0 0.0
    %1900 = vmatprep.subr.mxu0 0.0
    %1901 = vmatpush1.xpose.msra.mxu0 0.0
    %1902 = vmatprep.subr.mxu0 0.0
    %1903 = vmatpush1.xpose.msra.mxu0 0.0
    %1904 = vmatprep.subr.mxu0 0.0
    %1905 = vmatpush1.xpose.msra.mxu0 0.0
    %1906 = vmatprep.mubr.f32.mxu0 0.0
    %1907 = vmatmul.mubr.f32.gmra.mrb[0].mxu0 %v1838
    %v1908 = vpop.f32.mrb[0].mxu0
    %v1909 = vadd.f32 0.0, %v1908
    %v1910 = vpop.f32.mrb[0].mxu0
    %1911 = vdwg.mxu0
    %1912 = vrot.lane.b32.xlu0 %v1507, 112
    %v1913 = vpop.permute.xlu0 %1912
    %1914 = vrot.lane.b32.xlu0 %v1507, 80
    %v1915 = vpop.permute.xlu0 %1914
    %v1916 = vsel %vm343, %v1913, 0
    %v1918 = vsel %vm343, %v1915, 0
    %1920 = vmatprep.subr.mxu0 0.0
    %1921 = vmatpush1.xpose.msra.mxu0 %v1918
    %1922 = vmatprep.subr.mxu0 0.0
    %1923 = vmatpush1.xpose.msra.mxu0 0.0
    %1924 = vmatprep.subr.mxu0 0.0
    %1925 = vmatpush1.xpose.msra.mxu0 0.0
    %1926 = vmatprep.subr.mxu0 0.0
    %1927 = vmatpush1.xpose.msra.mxu0 0.0
    %1928 = vmatprep.subr.mxu0 0.0
    %1929 = vmatpush1.xpose.msra.mxu0 0.0
    %1930 = vmatprep.subr.mxu0 0.0
    %1931 = vmatpush1.xpose.msra.mxu0 0.0
    %1932 = vmatprep.subr.mxu0 0.0
    %1933 = vmatpush1.xpose.msra.mxu0 0.0
    %1934 = vmatprep.subr.mxu0 0.0
    %1935 = vmatpush1.xpose.msra.mxu0 0.0
    %1936 = vmatprep.subr.mxu0 0.0
    %1937 = vmatpush1.xpose.msra.mxu0 0.0
    %1938 = vmatprep.subr.mxu0 0.0
    %1939 = vmatpush1.xpose.msra.mxu0 0.0
    %1940 = vmatprep.subr.mxu0 0.0
    %1941 = vmatpush1.xpose.msra.mxu0 0.0
    %1942 = vmatprep.subr.mxu0 0.0
    %1943 = vmatpush1.xpose.msra.mxu0 0.0
    %1944 = vmatprep.subr.mxu0 0.0
    %1945 = vmatpush1.xpose.msra.mxu0 0.0
    %1946 = vmatprep.subr.mxu0 0.0
    %1947 = vmatpush1.xpose.msra.mxu0 0.0
    %1948 = vmatprep.subr.mxu0 0.0
    %1949 = vmatpush1.xpose.msra.mxu0 0.0
    %1950 = vmatprep.subr.mxu0 0.0
    %1951 = vmatpush1.xpose.msra.mxu0 0.0
    %1952 = vmatprep.subr.mxu0 0.0
    %1953 = vmatpush1.xpose.msra.mxu0 0.0
    %1954 = vmatprep.subr.mxu0 0.0
    %1955 = vmatpush1.xpose.msra.mxu0 0.0
    %1956 = vmatprep.subr.mxu0 0.0
    %1957 = vmatpush1.xpose.msra.mxu0 0.0
    %1958 = vmatprep.subr.mxu0 0.0
    %1959 = vmatpush1.xpose.msra.mxu0 0.0
    %1960 = vmatprep.subr.mxu0 0.0
    %1961 = vmatpush1.xpose.msra.mxu0 0.0
    %1962 = vmatprep.subr.mxu0 0.0
    %1963 = vmatpush1.xpose.msra.mxu0 0.0
    %1964 = vmatprep.subr.mxu0 0.0
    %1965 = vmatpush1.xpose.msra.mxu0 0.0
    %1966 = vmatprep.subr.mxu0 0.0
    %1967 = vmatpush1.xpose.msra.mxu0 0.0
    %1968 = vmatprep.subr.mxu0 0.0
    %1969 = vmatpush1.xpose.msra.mxu0 0.0
    %1970 = vmatprep.subr.mxu0 0.0
    %1971 = vmatpush1.xpose.msra.mxu0 0.0
    %1972 = vmatprep.subr.mxu0 0.0
    %1973 = vmatpush1.xpose.msra.mxu0 0.0
    %1974 = vmatprep.subr.mxu0 0.0
    %1975 = vmatpush1.xpose.msra.mxu0 0.0
    %1976 = vmatprep.subr.mxu0 0.0
    %1977 = vmatpush1.xpose.msra.mxu0 0.0
    %1978 = vmatprep.subr.mxu0 0.0
    %1979 = vmatpush1.xpose.msra.mxu0 0.0
    %1980 = vmatprep.subr.mxu0 0.0
    %1981 = vmatpush1.xpose.msra.mxu0 0.0
    %1982 = vmatprep.subr.mxu0 0.0
    %1983 = vmatpush1.xpose.msra.mxu0 0.0
    %1984 = vmatprep.mubr.f32.mxu0 0.0
    %1985 = vmatmul.mubr.f32.gmra.mrb[0].mxu0 %v1916
    %v1986 = vpop.f32.mrb[0].mxu0
    %v1987 = vadd.f32 0.0, %v1986
    %v1988 = vpop.f32.mrb[0].mxu0
    %1989 = vdwg.mxu0
    %v1990 = vmul.f32 %v1909, 0.25
    %v1991 = vmul.f32 %v1987, 0.25
    %v1992 = vadd.f32 %v1990, %v502
    %v1993 = vadd.f32 %v1991, %v506
    %v1994 = vmul.f32 %v1992, 1.442695
    %v1995 = vpow.pop %v1994
    %v1996 = vmul.f32 %v1993, 1.442695
    %v1997 = vpow.pop %v1996
    %v1998 = vsel %vm515, %v1995, 0.0
    %1999 = vadd.xlane.f32.xlu0 %v1998
    %v2000 = vpop.xlane.xlu0 %1999
    %v2001 = vsel %vm515, %v1997, 0.0
    %2002 = vadd.xlane.f32.xlu0 %v2001
    %v2003 = vpop.xlane.xlu0 %2002
    %v2004 = vrcp.pop %v2000
    %v2005 = vrcp.pop %v2003
    %v2006 = vmul.f32 %v1995, %v2004
    %v2007 = vmul.f32 %v1997, %v2005
    %2008 = vrot.lane.b32.xlu0 %v1502, 48
    %v2009 = vpop.permute.xlu0 %2008
    %v2012 = vsel %vm515, %v2006, 0
    %2014 = vmatprep.subr.mxu0 0.0
    %2015 = vmatpush1.msra.mxu0 %v2009
    %2016 = vmatprep.subr.mxu0 0.0
    %2017 = vmatpush1.msra.mxu0 0.0
    %2018 = vmatprep.subr.mxu0 0.0
    %2019 = vmatpush1.msra.mxu0 0.0
    %2020 = vmatprep.subr.mxu0 0.0
    %2021 = vmatpush1.msra.mxu0 0.0
    %2022 = vmatprep.subr.mxu0 0.0
    %2023 = vmatpush1.msra.mxu0 0.0
    %2024 = vmatprep.subr.mxu0 0.0
    %2025 = vmatpush1.msra.mxu0 0.0
    %2026 = vmatprep.subr.mxu0 0.0
    %2027 = vmatpush1.msra.mxu0 0.0
    %2028 = vmatprep.subr.mxu0 0.0
    %2029 = vmatpush1.msra.mxu0 0.0
    %2030 = vmatprep.subr.mxu0 0.0
    %2031 = vmatpush1.msra.mxu0 0.0
    %2032 = vmatprep.subr.mxu0 0.0
    %2033 = vmatpush1.msra.mxu0 0.0
    %2034 = vmatprep.subr.mxu0 0.0
    %2035 = vmatpush1.msra.mxu0 0.0
    %2036 = vmatprep.subr.mxu0 0.0
    %2037 = vmatpush1.msra.mxu0 0.0
    %2038 = vmatprep.subr.mxu0 0.0
    %2039 = vmatpush1.msra.mxu0 0.0
    %2040 = vmatprep.subr.mxu0 0.0
    %2041 = vmatpush1.msra.mxu0 0.0
    %2042 = vmatprep.subr.mxu0 0.0
    %2043 = vmatpush1.msra.mxu0 0.0
    %2044 = vmatprep.subr.mxu0 0.0
    %2045 = vmatpush1.msra.mxu0 0.0
    %2046 = vmatprep.subr.mxu0 0.0
    %2047 = vmatpush1.msra.mxu0 0.0
    %2048 = vmatprep.subr.mxu0 0.0
    %2049 = vmatpush1.msra.mxu0 0.0
    %2050 = vmatprep.subr.mxu0 0.0
    %2051 = vmatpush1.msra.mxu0 0.0
    %2052 = vmatprep.subr.mxu0 0.0
    %2053 = vmatpush1.msra.mxu0 0.0
    %2054 = vmatprep.subr.mxu0 0.0
    %2055 = vmatpush1.msra.mxu0 0.0
    %2056 = vmatprep.subr.mxu0 0.0
    %2057 = vmatpush1.msra.mxu0 0.0
    %2058 = vmatprep.subr.mxu0 0.0
    %2059 = vmatpush1.msra.mxu0 0.0
    %2060 = vmatprep.subr.mxu0 0.0
    %2061 = vmatpush1.msra.mxu0 0.0
    %2062 = vmatprep.subr.mxu0 0.0
    %2063 = vmatpush1.msra.mxu0 0.0
    %2064 = vmatprep.subr.mxu0 0.0
    %2065 = vmatpush1.msra.mxu0 0.0
    %2066 = vmatprep.subr.mxu0 0.0
    %2067 = vmatpush1.msra.mxu0 0.0
    %2068 = vmatprep.subr.mxu0 0.0
    %2069 = vmatpush1.msra.mxu0 0.0
    %2070 = vmatprep.subr.mxu0 0.0
    %2071 = vmatpush1.msra.mxu0 0.0
    %2072 = vmatprep.subr.mxu0 0.0
    %2073 = vmatpush1.msra.mxu0 0.0
    %2074 = vmatprep.subr.mxu0 0.0
    %2075 = vmatpush1.msra.mxu0 0.0
    %2076 = vmatprep.subr.mxu0 0.0
    %2077 = vmatpush1.msra.mxu0 0.0
    %2078 = vmatprep.mubr.f32.mxu0 0.0
    %2079 = vmatmul.mubr.f32.gmra.mrb[0].mxu0 %v2012
    %v2080 = vpop.f32.mrb[0].mxu0
    %v2081 = vadd.f32 0.0, %v2080
    %v2082 = vpop.f32.mrb[0].mxu0
    %2083 = vdwg.mxu0
    %2084 = vrot.lane.b32.xlu0 %v1507, 48
    %v2085 = vpop.permute.xlu0 %2084
    %v2088 = vsel %vm515, %v2007, 0
    %2090 = vmatprep.subr.mxu0 0.0
    %2091 = vmatpush1.msra.mxu0 %v2085
    %2092 = vmatprep.subr.mxu0 0.0
    %2093 = vmatpush1.msra.mxu0 0.0
    %2094 = vmatprep.subr.mxu0 0.0
    %2095 = vmatpush1.msra.mxu0 0.0
    %2096 = vmatprep.subr.mxu0 0.0
    %2097 = vmatpush1.msra.mxu0 0.0
    %2098 = vmatprep.subr.mxu0 0.0
    %2099 = vmatpush1.msra.mxu0 0.0
    %2100 = vmatprep.subr.mxu0 0.0
    %2101 = vmatpush1.msra.mxu0 0.0
    %2102 = vmatprep.subr.mxu0 0.0
    %2103 = vmatpush1.msra.mxu0 0.0
    %2104 = vmatprep.subr.mxu0 0.0
    %2105 = vmatpush1.msra.mxu0 0.0
    %2106 = vmatprep.subr.mxu0 0.0
    %2107 = vmatpush1.msra.mxu0 0.0
    %2108 = vmatprep.subr.mxu0 0.0
    %2109 = vmatpush1.msra.mxu0 0.0
    %2110 = vmatprep.subr.mxu0 0.0
    %2111 = vmatpush1.msra.mxu0 0.0
    %2112 = vmatprep.subr.mxu0 0.0
    %2113 = vmatpush1.msra.mxu0 0.0
    %2114 = vmatprep.subr.mxu0 0.0
    %2115 = vmatpush1.msra.mxu0 0.0
    %2116 = vmatprep.subr.mxu0 0.0
    %2117 = vmatpush1.msra.mxu0 0.0
    %2118 = vmatprep.subr.mxu0 0.0
    %2119 = vmatpush1.msra.mxu0 0.0
    %2120 = vmatprep.subr.mxu0 0.0
    %2121 = vmatpush1.msra.mxu0 0.0
    %2122 = vmatprep.subr.mxu0 0.0
    %2123 = vmatpush1.msra.mxu0 0.0
    %2124 = vmatprep.subr.mxu0 0.0
    %2125 = vmatpush1.msra.mxu0 0.0
    %2126 = vmatprep.subr.mxu0 0.0
    %2127 = vmatpush1.msra.mxu0 0.0
    %2128 = vmatprep.subr.mxu0 0.0
    %2129 = vmatpush1.msra.mxu0 0.0
    %2130 = vmatprep.subr.mxu0 0.0
    %2131 = vmatpush1.msra.mxu0 0.0
    %2132 = vmatprep.subr.mxu0 0.0
    %2133 = vmatpush1.msra.mxu0 0.0
    %2134 = vmatprep.subr.mxu0 0.0
    %2135 = vmatpush1.msra.mxu0 0.0
    %2136 = vmatprep.subr.mxu0 0.0
    %2137 = vmatpush1.msra.mxu0 0.0
    %2138 = vmatprep.subr.mxu0 0.0
    %2139 = vmatpush1.msra.mxu0 0.0
    %2140 = vmatprep.subr.mxu0 0.0
    %2141 = vmatpush1.msra.mxu0 0.0
    %2142 = vmatprep.subr.mxu0 0.0
    %2143 = vmatpush1.msra.mxu0 0.0
    %2144 = vmatprep.subr.mxu0 0.0
    %2145 = vmatpush1.msra.mxu0 0.0
    %2146 = vmatprep.subr.mxu0 0.0
    %2147 = vmatpush1.msra.mxu0 0.0
    %2148 = vmatprep.subr.mxu0 0.0
    %2149 = vmatpush1.msra.mxu0 0.0
    %2150 = vmatprep.subr.mxu0 0.0
    %2151 = vmatpush1.msra.mxu0 0.0
    %2152 = vmatprep.subr.mxu0 0.0
    %2153 = vmatpush1.msra.mxu0 0.0
    %2154 = vmatprep.mubr.f32.mxu0 0.0
    %2155 = vmatmul.mubr.f32.gmra.mrb[0].mxu0 %v2088
    %v2156 = vpop.f32.mrb[0].mxu0
    %v2157 = vadd.f32 0.0, %v2156
    %v2158 = vpop.f32.mrb[0].mxu0
    %2159 = vdwg.mxu0
    %2162 = vrot.lane.b32.xlu0 %v2081, 16
    %v2163 = vpop.permute.xlu0 %2162
    %2164 = vrot.lane.b32.xlu0 %v2157, 16
    %v2165 = vpop.permute.xlu0 %2164
    %v2168 = vsel %vm343, %v1755, %v2163
    %v2169 = vsel %vm343, %v1831, %v2165
    %v2170 = vlaneseq
    %v2171 = vshrl.u32 %v2170, 7
    %v2172 = vsub.s32 0, %v2171
    %v2173 = vrot.slane %v1419, %v2172
    %2178 = vrot.lane.b32.xlu0 %v1409, 32
    %v2179 = vpop.permute.xlu0 %2178
    %2180 = vrot.lane.b32.xlu0 %v1411, 32
    %v2181 = vpop.permute.xlu0 %2180
    %2182 = vrot.lane.b32.xlu0 %v1413, 32
    %v2183 = vpop.permute.xlu0 %2182
    %2184 = vrot.lane.b32.xlu0 %v1415, 32
    %v2185 = vpop.permute.xlu0 %2184
    %v2191 = vsel %vm165, %v2168, 0
    %v2194 = vsel %vm165, %v2169, 0
    %2196 = vmatprep.subr.mxu0 0.0
    %2197 = vmatpush1.msra.mxu0 %v2179
    %2198 = vmatprep.subr.mxu0 0.0
    %2199 = vmatpush1.msra.mxu0 %v2181
    %2200 = vmatprep.subr.mxu0 0.0
    %2201 = vmatpush1.msra.mxu0 %v2183
    %2202 = vmatprep.subr.mxu0 0.0
    %2203 = vmatpush1.msra.mxu0 %v2185
    %2204 = vmatprep.subr.mxu0 0.0
    %2205 = vmatpush1.msra.mxu0 0.0
    %2206 = vmatprep.subr.mxu0 0.0
    %2207 = vmatpush1.msra.mxu0 0.0
    %2208 = vmatprep.subr.mxu0 0.0
    %2209 = vmatpush1.msra.mxu0 0.0
    %2210 = vmatprep.subr.mxu0 0.0
    %2211 = vmatpush1.msra.mxu0 0.0
    %2212 = vmatprep.subr.mxu0 0.0
    %2213 = vmatpush1.msra.mxu0 0.0
    %2214 = vmatprep.subr.mxu0 0.0
    %2215 = vmatpush1.msra.mxu0 0.0
    %2216 = vmatprep.subr.mxu0 0.0
    %2217 = vmatpush1.msra.mxu0 0.0
    %2218 = vmatprep.subr.mxu0 0.0
    %2219 = vmatpush1.msra.mxu0 0.0
    %2220 = vmatprep.subr.mxu0 0.0
    %2221 = vmatpush1.msra.mxu0 0.0
    %2222 = vmatprep.subr.mxu0 0.0
    %2223 = vmatpush1.msra.mxu0 0.0
    %2224 = vmatprep.subr.mxu0 0.0
    %2225 = vmatpush1.msra.mxu0 0.0
    %2226 = vmatprep.subr.mxu0 0.0
    %2227 = vmatpush1.msra.mxu0 0.0
    %2228 = vmatprep.subr.mxu0 0.0
    %2229 = vmatpush1.msra.mxu0 0.0
    %2230 = vmatprep.subr.mxu0 0.0
    %2231 = vmatpush1.msra.mxu0 0.0
    %2232 = vmatprep.subr.mxu0 0.0
    %2233 = vmatpush1.msra.mxu0 0.0
    %2234 = vmatprep.subr.mxu0 0.0
    %2235 = vmatpush1.msra.mxu0 0.0
    %2236 = vmatprep.subr.mxu0 0.0
    %2237 = vmatpush1.msra.mxu0 0.0
    %2238 = vmatprep.subr.mxu0 0.0
    %2239 = vmatpush1.msra.mxu0 0.0
    %2240 = vmatprep.subr.mxu0 0.0
    %2241 = vmatpush1.msra.mxu0 0.0
    %2242 = vmatprep.subr.mxu0 0.0
    %2243 = vmatpush1.msra.mxu0 0.0
    %2244 = vmatprep.subr.mxu0 0.0
    %2245 = vmatpush1.msra.mxu0 0.0
    %2246 = vmatprep.subr.mxu0 0.0
    %2247 = vmatpush1.msra.mxu0 0.0
    %2248 = vmatprep.subr.mxu0 0.0
    %2249 = vmatpush1.msra.mxu0 0.0
    %2250 = vmatprep.subr.mxu0 0.0
    %2251 = vmatpush1.msra.mxu0 0.0
    %2252 = vmatprep.subr.mxu0 0.0
    %2253 = vmatpush1.msra.mxu0 0.0
    %2254 = vmatprep.subr.mxu0 0.0
    %2255 = vmatpush1.msra.mxu0 0.0
    %2256 = vmatprep.subr.mxu0 0.0
    %2257 = vmatpush1.msra.mxu0 0.0
    %2258 = vmatprep.subr.mxu0 0.0
    %2259 = vmatpush1.msra.mxu0 0.0
    %2260 = vmatprep.mubr.f32.mxu0 0.0
    %2261 = vmatmul.mubr.f32.gmra.mrb[0].mxu0 %v2191
    %v2262 = vpop.f32.mrb[0].mxu0
    %v2263 = vadd.f32 %v2173, %v2262
    %v2264 = vpop.f32.mrb[0].mxu0
    %2265 = vmatprep.mubr.f32.mxu0 0.0
    %2266 = vmatmul.mubr.f32.gmra.mrb[0].mxu0 %v2194
    %v2267 = vpop.f32.mrb[0].mxu0
    %v2268 = vadd.f32 %v2173, %v2267
    %v2269 = vpop.f32.mrb[0].mxu0
    %2270 = vdwg.mxu0
    %v2271 = vadd.f32 %v1402, %v2263
    %v2272 = vadd.f32 %v1403, %v2268
    %v2273 = vsel %vm165, %v2271, 0.0
    %2274 = vadd.xlane.f32.xlu0 %v2273
    %v2275 = vpop.xlane.xlu0 %2274
    %v2276 = vsel %vm165, %v2272, 0.0
    %2277 = vadd.xlane.f32.xlu0 %v2276
    %v2278 = vpop.xlane.xlu0 %2277
    %v2279 = vmul.f32 %v2275, %v172
    %v2280 = vmul.f32 %v2278, %v172
    %v2281 = vsub.f32 %v2271, %v2279
    %v2282 = vsub.f32 %v2272, %v2280
    %v2283 = vmul.f32 %v2281, %v2281
    %v2284 = vmul.f32 %v2282, %v2282
    %v2285 = vsel %vm165, %v2283, 0.0
    %2286 = vadd.xlane.f32.xlu0 %v2285
    %v2287 = vpop.xlane.xlu0 %2286
    %v2288 = vsel %vm165, %v2284, 0.0
    %2289 = vadd.xlane.f32.xlu0 %v2288
    %v2290 = vpop.xlane.xlu0 %2289
    %v2291 = vmul.f32 %v2287, %v172
    %v2292 = vmul.f32 %v2290, %v172
    %v2293 = vadd.f32 %v2291, 1e-12
    %v2294 = vadd.f32 %v2292, 1e-12
    %v2295 = vrsqrt.pop %v2293
    %v2296 = vrsqrt.pop %v2294
    %v2297 = vmul.f32 %v2281, %v2295
    %v2298 = vmul.f32 %v2282, %v2296
    %v2299 = vlaneseq
    %v2300 = vshrl.u32 %v2299, 7
    %v2301 = vsub.s32 0, %v2300
    %v2302 = vrot.slane %v1420, %v2301
    %v2303 = vmul.f32 %v2297, %v2302
    %v2304 = vmul.f32 %v2298, %v2302
    %v2305 = vlaneseq
    %v2306 = vshrl.u32 %v2305, 7
    %v2307 = vsub.s32 0, %v2306
    %v2308 = vrot.slane %v1421, %v2307
    %v2309 = vadd.f32 %v2303, %v2308
    %v2310 = vadd.f32 %v2304, %v2308
    %v2311 = vlaneseq
    %v2312 = vshrl.u32 %v2311, 7
    %v2313 = vsub.s32 0, %v2312
    %v2314 = vrot.slane %v1418, %v2313
    %v2316 = vsel %vm165, %v2309, 0
    %v2319 = vsel %vm165, %v2310, 0
    %2321 = vmatprep.subr.mxu0 0.0
    %2322 = vmatpush1.msra.mxu0 %v1410
    %2323 = vmatprep.subr.mxu0 0.0
    %2324 = vmatpush1.msra.mxu0 %v1412
    %2325 = vmatprep.subr.mxu0 0.0
    %2326 = vmatpush1.msra.mxu0 %v1414
    %2327 = vmatprep.subr.mxu0 0.0
    %2328 = vmatpush1.msra.mxu0 %v1416
    %2329 = vmatprep.subr.mxu0 0.0
    %2330 = vmatpush1.msra.mxu0 0.0
    %2331 = vmatprep.subr.mxu0 0.0
    %2332 = vmatpush1.msra.mxu0 0.0
    %2333 = vmatprep.subr.mxu0 0.0
    %2334 = vmatpush1.msra.mxu0 0.0
    %2335 = vmatprep.subr.mxu0 0.0
    %2336 = vmatpush1.msra.mxu0 0.0
    %2337 = vmatprep.subr.mxu0 0.0
    %2338 = vmatpush1.msra.mxu0 0.0
    %2339 = vmatprep.subr.mxu0 0.0
    %2340 = vmatpush1.msra.mxu0 0.0
    %2341 = vmatprep.subr.mxu0 0.0
    %2342 = vmatpush1.msra.mxu0 0.0
    %2343 = vmatprep.subr.mxu0 0.0
    %2344 = vmatpush1.msra.mxu0 0.0
    %2345 = vmatprep.subr.mxu0 0.0
    %2346 = vmatpush1.msra.mxu0 0.0
    %2347 = vmatprep.subr.mxu0 0.0
    %2348 = vmatpush1.msra.mxu0 0.0
    %2349 = vmatprep.subr.mxu0 0.0
    %2350 = vmatpush1.msra.mxu0 0.0
    %2351 = vmatprep.subr.mxu0 0.0
    %2352 = vmatpush1.msra.mxu0 0.0
    %2353 = vmatprep.subr.mxu0 0.0
    %2354 = vmatpush1.msra.mxu0 0.0
    %2355 = vmatprep.subr.mxu0 0.0
    %2356 = vmatpush1.msra.mxu0 0.0
    %2357 = vmatprep.subr.mxu0 0.0
    %2358 = vmatpush1.msra.mxu0 0.0
    %2359 = vmatprep.subr.mxu0 0.0
    %2360 = vmatpush1.msra.mxu0 0.0
    %2361 = vmatprep.subr.mxu0 0.0
    %2362 = vmatpush1.msra.mxu0 0.0
    %2363 = vmatprep.subr.mxu0 0.0
    %2364 = vmatpush1.msra.mxu0 0.0
    %2365 = vmatprep.subr.mxu0 0.0
    %2366 = vmatpush1.msra.mxu0 0.0
    %2367 = vmatprep.subr.mxu0 0.0
    %2368 = vmatpush1.msra.mxu0 0.0
    %2369 = vmatprep.subr.mxu0 0.0
    %2370 = vmatpush1.msra.mxu0 0.0
    %2371 = vmatprep.subr.mxu0 0.0
    %2372 = vmatpush1.msra.mxu0 0.0
    %2373 = vmatprep.subr.mxu0 0.0
    %2374 = vmatpush1.msra.mxu0 0.0
    %2375 = vmatprep.subr.mxu0 0.0
    %2376 = vmatpush1.msra.mxu0 0.0
    %2377 = vmatprep.subr.mxu0 0.0
    %2378 = vmatpush1.msra.mxu0 0.0
    %2379 = vmatprep.subr.mxu0 0.0
    %2380 = vmatpush1.msra.mxu0 0.0
    %2381 = vmatprep.subr.mxu0 0.0
    %2382 = vmatpush1.msra.mxu0 0.0
    %2383 = vmatprep.subr.mxu0 0.0
    %2384 = vmatpush1.msra.mxu0 0.0
    %2385 = vmatprep.mubr.f32.mxu0 0.0
    %2386 = vmatmul.mubr.f32.gmra.mrb[0].mxu0 %v2316
    %v2387 = vpop.f32.mrb[0].mxu0
    %v2388 = vadd.f32 %v2314, %v2387
    %v2389 = vpop.f32.mrb[0].mxu0
    %2390 = vmatprep.mubr.f32.mxu0 0.0
    %2391 = vmatmul.mubr.f32.gmra.mrb[0].mxu0 %v2319
    %v2392 = vpop.f32.mrb[0].mxu0
    %v2393 = vadd.f32 %v2314, %v2392
    %v2394 = vpop.f32.mrb[0].mxu0
    %2395 = vdwg.mxu0
    %v2396 = vmul.f32 %v2388, %v2388
    %v2397 = vmul.f32 %v2393, %v2393
    %v2398 = vmul.f32 %v2388, %v2396
    %v2399 = vmul.f32 %v2393, %v2397
    %v2400 = vmul.f32 %v2398, 0.044715
    %v2401 = vmul.f32 %v2399, 0.044715
    %v2402 = vadd.f32 %v2388, %v2400
    %v2403 = vadd.f32 %v2393, %v2401
    %v2404 = vmul.f32 %v2402, 0.7978846
    %v2405 = vmul.f32 %v2403, 0.7978846
    %v2406 = vtanh.pop %v2404
    %v2407 = vtanh.pop %v2405
    %v2408 = vadd.f32 %v2406, 1.0
    %v2409 = vadd.f32 %v2407, 1.0
    %v2410 = vmul.f32 %v2408, 0.5
    %v2411 = vmul.f32 %v2409, 0.5
    %v2412 = vmul.f32 %v2388, %v2410
    %v2413 = vmul.f32 %v2393, %v2411
    %v2414 = vlaneseq
    %v2415 = vshrl.u32 %v2414, 7
    %v2416 = vsub.s32 0, %v2415
    %v2417 = vrot.slane %v1422, %v2416
    %2422 = vrot.lane.b32.xlu0 %v1410, 64
    %v2423 = vpop.permute.xlu0 %2422
    %2424 = vrot.lane.b32.xlu0 %v1412, 64
    %v2425 = vpop.permute.xlu0 %2424
    %2426 = vrot.lane.b32.xlu0 %v1414, 64
    %v2427 = vpop.permute.xlu0 %2426
    %2428 = vrot.lane.b32.xlu0 %v1416, 64
    %v2429 = vpop.permute.xlu0 %2428
    %v2431 = vsel %vm1274, %v2412, 0
    %v2434 = vsel %vm1274, %v2413, 0
    %v2436 = vsel %vm1274, %v2423, 0
    %v2438 = vsel %vm1274, %v2425, 0
    %v2440 = vsel %vm1274, %v2427, 0
    %v2442 = vsel %vm1274, %v2429, 0
    %2444 = vmatprep.subr.mxu0 0.0
    %2445 = vmatpush1.xpose.msra.mxu0 %v2436
    %2446 = vmatprep.subr.mxu0 0.0
    %2447 = vmatpush1.xpose.msra.mxu0 %v2438
    %2448 = vmatprep.subr.mxu0 0.0
    %2449 = vmatpush1.xpose.msra.mxu0 %v2440
    %2450 = vmatprep.subr.mxu0 0.0
    %2451 = vmatpush1.xpose.msra.mxu0 %v2442
    %2452 = vmatprep.subr.mxu0 0.0
    %2453 = vmatpush1.xpose.msra.mxu0 0.0
    %2454 = vmatprep.subr.mxu0 0.0
    %2455 = vmatpush1.xpose.msra.mxu0 0.0
    %2456 = vmatprep.subr.mxu0 0.0
    %2457 = vmatpush1.xpose.msra.mxu0 0.0
    %2458 = vmatprep.subr.mxu0 0.0
    %2459 = vmatpush1.xpose.msra.mxu0 0.0
    %2460 = vmatprep.subr.mxu0 0.0
    %2461 = vmatpush1.xpose.msra.mxu0 0.0
    %2462 = vmatprep.subr.mxu0 0.0
    %2463 = vmatpush1.xpose.msra.mxu0 0.0
    %2464 = vmatprep.subr.mxu0 0.0
    %2465 = vmatpush1.xpose.msra.mxu0 0.0
    %2466 = vmatprep.subr.mxu0 0.0
    %2467 = vmatpush1.xpose.msra.mxu0 0.0
    %2468 = vmatprep.subr.mxu0 0.0
    %2469 = vmatpush1.xpose.msra.mxu0 0.0
    %2470 = vmatprep.subr.mxu0 0.0
    %2471 = vmatpush1.xpose.msra.mxu0 0.0
    %2472 = vmatprep.subr.mxu0 0.0
    %2473 = vmatpush1.xpose.msra.mxu0 0.0
    %2474 = vmatprep.subr.mxu0 0.0
    %2475 = vmatpush1.xpose.msra.mxu0 0.0
    %2476 = vmatprep.subr.mxu0 0.0
    %2477 = vmatpush1.xpose.msra.mxu0 0.0
    %2478 = vmatprep.subr.mxu0 0.0
    %2479 = vmatpush1.xpose.msra.mxu0 0.0
    %2480 = vmatprep.subr.mxu0 0.0
    %2481 = vmatpush1.xpose.msra.mxu0 0.0
    %2482 = vmatprep.subr.mxu0 0.0
    %2483 = vmatpush1.xpose.msra.mxu0 0.0
    %2484 = vmatprep.subr.mxu0 0.0
    %2485 = vmatpush1.xpose.msra.mxu0 0.0
    %2486 = vmatprep.subr.mxu0 0.0
    %2487 = vmatpush1.xpose.msra.mxu0 0.0
    %2488 = vmatprep.subr.mxu0 0.0
    %2489 = vmatpush1.xpose.msra.mxu0 0.0
    %2490 = vmatprep.subr.mxu0 0.0
    %2491 = vmatpush1.xpose.msra.mxu0 0.0
    %2492 = vmatprep.subr.mxu0 0.0
    %2493 = vmatpush1.xpose.msra.mxu0 0.0
    %2494 = vmatprep.subr.mxu0 0.0
    %2495 = vmatpush1.xpose.msra.mxu0 0.0
    %2496 = vmatprep.subr.mxu0 0.0
    %2497 = vmatpush1.xpose.msra.mxu0 0.0
    %2498 = vmatprep.subr.mxu0 0.0
    %2499 = vmatpush1.xpose.msra.mxu0 0.0
    %2500 = vmatprep.subr.mxu0 0.0
    %2501 = vmatpush1.xpose.msra.mxu0 0.0
    %2502 = vmatprep.subr.mxu0 0.0
    %2503 = vmatpush1.xpose.msra.mxu0 0.0
    %2504 = vmatprep.subr.mxu0 0.0
    %2505 = vmatpush1.xpose.msra.mxu0 0.0
    %2506 = vmatprep.subr.mxu0 0.0
    %2507 = vmatpush1.xpose.msra.mxu0 0.0
    %2508 = vmatprep.mubr.f32.mxu0 0.0
    %2509 = vmatmul.mubr.f32.gmra.mrb[0].mxu0 %v2431
    %v2510 = vpop.f32.mrb[0].mxu0
    %v2511 = vadd.f32 %v2417, %v2510
    %v2512 = vpop.f32.mrb[0].mxu0
    %2513 = vmatprep.mubr.f32.mxu0 0.0
    %2514 = vmatmul.mubr.f32.gmra.mrb[0].mxu0 %v2434
    %v2515 = vpop.f32.mrb[0].mxu0
    %v2516 = vadd.f32 %v2417, %v2515
    %v2517 = vpop.f32.mrb[0].mxu0
    %2518 = vdwg.mxu0
    %v2519 = vadd.f32 %v2309, %v2511
    %v2520 = vadd.f32 %v2310, %v2516
    %v2521 = vsel %vm165, %v2519, 0.0
    %2522 = vadd.xlane.f32.xlu0 %v2521
    %v2523 = vpop.xlane.xlu0 %2522
    %v2524 = vsel %vm165, %v2520, 0.0
    %2525 = vadd.xlane.f32.xlu0 %v2524
    %v2526 = vpop.xlane.xlu0 %2525
    %v2527 = vmul.f32 %v2523, %v172
    %v2528 = vmul.f32 %v2526, %v172
    %v2529 = vsub.f32 %v2519, %v2527
    %v2530 = vsub.f32 %v2520, %v2528
    %v2531 = vmul.f32 %v2529, %v2529
    %v2532 = vmul.f32 %v2530, %v2530
    %v2533 = vsel %vm165, %v2531, 0.0
    %2534 = vadd.xlane.f32.xlu0 %v2533
    %v2535 = vpop.xlane.xlu0 %2534
    %v2536 = vsel %vm165, %v2532, 0.0
    %2537 = vadd.xlane.f32.xlu0 %v2536
    %v2538 = vpop.xlane.xlu0 %2537
    %v2539 = vmul.f32 %v2535, %v172
    %v2540 = vmul.f32 %v2538, %v172
    %v2541 = vadd.f32 %v2539, 1e-12
    %v2542 = vadd.f32 %v2540, 1e-12
    %v2543 = vrsqrt.pop %v2541
    %v2544 = vrsqrt.pop %v2542
    %v2545 = vmul.f32 %v2529, %v2543
    %v2546 = vmul.f32 %v2530, %v2544
    %v2547 = vlaneseq
    %v2548 = vshrl.u32 %v2547, 7
    %v2549 = vsub.s32 0, %v2548
    %v2550 = vrot.slane %v1423, %v2549
    %v2551 = vmul.f32 %v2545, %v2550
    %v2552 = vmul.f32 %v2546, %v2550
    %v2553 = vlaneseq
    %v2554 = vshrl.u32 %v2553, 7
    %v2555 = vsub.s32 0, %v2554
    %v2556 = vrot.slane %v1424, %v2555
    %v2557 = vadd.f32 %v2551, %v2556
    %v2558 = vadd.f32 %v2552, %v2556
    %s2559 = scalar_lea.vmem [#allocation2], 64
    %v2560 = vld [vmem:[%s2559] sm:$0xff]
    %v2561 = vld [vmem:[%s2559 + $0x8] sm:$0xff]
    %v2562 = vld [vmem:[%s2559 + $0x10] sm:$0xff]
    %v2563 = vld [vmem:[%s2559 + $0x18] sm:$0xff]
    %v2564 = vunpack.c.l.bf16 %v2560
    %v2565 = vunpack.c.h.bf16 %v2560
    %v2566 = vunpack.c.l.bf16 %v2561
    %v2567 = vunpack.c.h.bf16 %v2561
    %v2568 = vunpack.c.l.bf16 %v2562
    %v2569 = vunpack.c.h.bf16 %v2562
    %v2570 = vunpack.c.l.bf16 %v2563
    %v2571 = vunpack.c.h.bf16 %v2563
    %v2572 = vld [vmem:[#allocation5 + $0xa8] sm:$0x1]
    %v2573 = vld [vmem:[#allocation5 + $0xa9] sm:$0x1]
    %v2574 = vlaneseq
    %v2575 = vshrl.u32 %v2574, 7
    %v2576 = vsub.s32 0, %v2575
    %v2577 = vrot.slane %v2572, %v2576
    %v2580 = vrot.slane %v2558, 7
    %vm2581 = vcmask 1041409
    %v2582 = vsel %vm2581, %v2580, %v2557
    %v2583 = vsel %vm165, %v2582, 0
    %2585 = vmatprep.subr.mxu0 0.0
    %2586 = vmatpush1.msra.mxu0 %v2564
    %2587 = vmatprep.subr.mxu0 0.0
    %2588 = vmatpush1.msra.mxu0 %v2566
    %2589 = vmatprep.subr.mxu0 0.0
    %2590 = vmatpush1.msra.mxu0 %v2568
    %2591 = vmatprep.subr.mxu0 0.0
    %2592 = vmatpush1.msra.mxu0 %v2570
    %2593 = vmatprep.subr.mxu0 0.0
    %2594 = vmatpush1.msra.mxu0 0.0
    %2595 = vmatprep.subr.mxu0 0.0
    %2596 = vmatpush1.msra.mxu0 0.0
    %2597 = vmatprep.subr.mxu0 0.0
    %2598 = vmatpush1.msra.mxu0 0.0
    %2599 = vmatprep.subr.mxu0 0.0
    %2600 = vmatpush1.msra.mxu0 0.0
    %2601 = vmatprep.subr.mxu0 0.0
    %2602 = vmatpush1.msra.mxu0 0.0
    %2603 = vmatprep.subr.mxu0 0.0
    %2604 = vmatpush1.msra.mxu0 0.0
    %2605 = vmatprep.subr.mxu0 0.0
    %2606 = vmatpush1.msra.mxu0 0.0
    %2607 = vmatprep.subr.mxu0 0.0
    %2608 = vmatpush1.msra.mxu0 0.0
    %2609 = vmatprep.subr.mxu0 0.0
    %2610 = vmatpush1.msra.mxu0 0.0
    %2611 = vmatprep.subr.mxu0 0.0
    %2612 = vmatpush1.msra.mxu0 0.0
    %2613 = vmatprep.subr.mxu0 0.0
    %2614 = vmatpush1.msra.mxu0 0.0
    %2615 = vmatprep.subr.mxu0 0.0
    %2616 = vmatpush1.msra.mxu0 0.0
    %2617 = vmatprep.subr.mxu0 0.0
    %2618 = vmatpush1.msra.mxu0 0.0
    %2619 = vmatprep.subr.mxu0 0.0
    %2620 = vmatpush1.msra.mxu0 0.0
    %2621 = vmatprep.subr.mxu0 0.0
    %2622 = vmatpush1.msra.mxu0 0.0
    %2623 = vmatprep.subr.mxu0 0.0
    %2624 = vmatpush1.msra.mxu0 0.0
    %2625 = vmatprep.subr.mxu0 0.0
    %2626 = vmatpush1.msra.mxu0 0.0
    %2627 = vmatprep.subr.mxu0 0.0
    %2628 = vmatpush1.msra.mxu0 0.0
    %2629 = vmatprep.subr.mxu0 0.0
    %2630 = vmatpush1.msra.mxu0 0.0
    %2631 = vmatprep.subr.mxu0 0.0
    %2632 = vmatpush1.msra.mxu0 0.0
    %2633 = vmatprep.subr.mxu0 0.0
    %2634 = vmatpush1.msra.mxu0 0.0
    %2635 = vmatprep.subr.mxu0 0.0
    %2636 = vmatpush1.msra.mxu0 0.0
    %2637 = vmatprep.subr.mxu0 0.0
    %2638 = vmatpush1.msra.mxu0 0.0
    %2639 = vmatprep.subr.mxu0 0.0
    %2640 = vmatpush1.msra.mxu0 0.0
    %2641 = vmatprep.subr.mxu0 0.0
    %2642 = vmatpush1.msra.mxu0 0.0
    %2643 = vmatprep.subr.mxu0 0.0
    %2644 = vmatpush1.msra.mxu0 0.0
    %2645 = vmatprep.subr.mxu0 0.0
    %2646 = vmatpush1.msra.mxu0 0.0
    %2647 = vmatprep.subr.mxu0 0.0
    %2648 = vmatpush1.msra.mxu0 0.0
    %2649 = vmatprep.mubr.f32.mxu0 0.0
    %2650 = vmatmul.mubr.f32.gmra.mrb[0].mxu0 %v2583
    %v2651 = vpop.f32.mrb[0].mxu0
    %v2652 = vadd.f32 %v2577, %v2651
    %v2653 = vpop.f32.mrb[0].mxu0
    %2654 = vdwg.mxu0
    %v2655 = vtanh.pop %v2652
    %v2656 = vlaneseq
    %v2657 = vshrl.u32 %v2656, 7
    %v2658 = vsub.s32 0, %v2657
    %v2659 = vrot.slane %v2573, %v2658
    %2668 = vrot.lane.b32.xlu0 %v2564, 96
    %v2669 = vpop.permute.xlu0 %2668
    %2670 = vrot.lane.b32.xlu0 %v2565, 96
    %v2671 = vpop.permute.xlu0 %2670
    %2672 = vrot.lane.b32.xlu0 %v2566, 96
    %v2673 = vpop.permute.xlu0 %2672
    %2674 = vrot.lane.b32.xlu0 %v2567, 96
    %v2675 = vpop.permute.xlu0 %2674
    %2676 = vrot.lane.b32.xlu0 %v2568, 96
    %v2677 = vpop.permute.xlu0 %2676
    %2678 = vrot.lane.b32.xlu0 %v2569, 96
    %v2679 = vpop.permute.xlu0 %2678
    %2680 = vrot.lane.b32.xlu0 %v2570, 96
    %v2681 = vpop.permute.xlu0 %2680
    %2682 = vrot.lane.b32.xlu0 %v2571, 96
    %v2683 = vpop.permute.xlu0 %2682
    %vm2684 = vcmask 785408
    %v2685 = vsel %vm2684, %v2669, %v2671
    %v2686 = vsel %vm2684, %v2673, %v2675
    %v2687 = vsel %vm2684, %v2677, %v2679
    %v2688 = vsel %vm2684, %v2681, %v2683
    %v2694 = vsel %vm165, %v2655, 0
    %2696 = vmatprep.subr.mxu0 0.0
    %2697 = vmatpush1.msra.mxu0 %v2685
    %2698 = vmatprep.subr.mxu0 0.0
    %2699 = vmatpush1.msra.mxu0 %v2686
    %2700 = vmatprep.subr.mxu0 0.0
    %2701 = vmatpush1.msra.mxu0 %v2687
    %2702 = vmatprep.subr.mxu0 0.0
    %2703 = vmatpush1.msra.mxu0 %v2688
    %2704 = vmatprep.subr.mxu0 0.0
    %2705 = vmatpush1.msra.mxu0 0.0
    %2706 = vmatprep.subr.mxu0 0.0
    %2707 = vmatpush1.msra.mxu0 0.0
    %2708 = vmatprep.subr.mxu0 0.0
    %2709 = vmatpush1.msra.mxu0 0.0
    %2710 = vmatprep.subr.mxu0 0.0
    %2711 = vmatpush1.msra.mxu0 0.0
    %2712 = vmatprep.subr.mxu0 0.0
    %2713 = vmatpush1.msra.mxu0 0.0
    %2714 = vmatprep.subr.mxu0 0.0
    %2715 = vmatpush1.msra.mxu0 0.0
    %2716 = vmatprep.subr.mxu0 0.0
    %2717 = vmatpush1.msra.mxu0 0.0
    %2718 = vmatprep.subr.mxu0 0.0
    %2719 = vmatpush1.msra.mxu0 0.0
    %2720 = vmatprep.subr.mxu0 0.0
    %2721 = vmatpush1.msra.mxu0 0.0
    %2722 = vmatprep.subr.mxu0 0.0
    %2723 = vmatpush1.msra.mxu0 0.0
    %2724 = vmatprep.subr.mxu0 0.0
    %2725 = vmatpush1.msra.mxu0 0.0
    %2726 = vmatprep.subr.mxu0 0.0
    %2727 = vmatpush1.msra.mxu0 0.0
    %2728 = vmatprep.subr.mxu0 0.0
    %2729 = vmatpush1.msra.mxu0 0.0
    %2730 = vmatprep.subr.mxu0 0.0
    %2731 = vmatpush1.msra.mxu0 0.0
    %2732 = vmatprep.subr.mxu0 0.0
    %2733 = vmatpush1.msra.mxu0 0.0
    %2734 = vmatprep.subr.mxu0 0.0
    %2735 = vmatpush1.msra.mxu0 0.0
    %2736 = vmatprep.subr.mxu0 0.0
    %2737 = vmatpush1.msra.mxu0 0.0
    %2738 = vmatprep.subr.mxu0 0.0
    %2739 = vmatpush1.msra.mxu0 0.0
    %2740 = vmatprep.subr.mxu0 0.0
    %2741 = vmatpush1.msra.mxu0 0.0
    %2742 = vmatprep.subr.mxu0 0.0
    %2743 = vmatpush1.msra.mxu0 0.0
    %2744 = vmatprep.subr.mxu0 0.0
    %2745 = vmatpush1.msra.mxu0 0.0
    %2746 = vmatprep.subr.mxu0 0.0
    %2747 = vmatpush1.msra.mxu0 0.0
    %2748 = vmatprep.subr.mxu0 0.0
    %2749 = vmatpush1.msra.mxu0 0.0
    %2750 = vmatprep.subr.mxu0 0.0
    %2751 = vmatpush1.msra.mxu0 0.0
    %2752 = vmatprep.subr.mxu0 0.0
    %2753 = vmatpush1.msra.mxu0 0.0
    %2754 = vmatprep.subr.mxu0 0.0
    %2755 = vmatpush1.msra.mxu0 0.0
    %2756 = vmatprep.subr.mxu0 0.0
    %2757 = vmatpush1.msra.mxu0 0.0
    %2758 = vmatprep.subr.mxu0 0.0
    %2759 = vmatpush1.msra.mxu0 0.0
    %2760 = vmatprep.mubr.f32.mxu0 0.0
    %2761 = vmatmul.mubr.f32.gmra.mrb[0].mxu0 %v2694
    %v2762 = vpop.f32.mrb[0].mxu0
    %v2763 = vadd.f32 %v2659, %v2762
    %v2764 = vpop.f32.mrb[0].mxu0
    %2765 = vdwg.mxu0
    %2766 = vst [vmem:[#allocation7] sm:$0x3] %v2763
    // Predicated region
    $region26: #{sarcasm_detector_forward.1} parent=1 // pred_check
      _
    $region27: #{sarcasm_detector_forward.1} parent=1 // pred_check_branch
      %2768 = sbr.rel (0) target = $region29
    $region28: #{sarcasm_detector_forward.1} parent=1 // pred_region
      %s2770 = ssub.s32 32, 32
      %2771 = vsyncadd [#allocation4], %s2770
      %s2773 = sshll.u32 [#allocation7], 4
      %s2774 = int_to_ptr.vmem [resolvable:$true] %s2773
      %2776 = dma.vmem_to_hbm [thread:$0]  %s2774, 32, %s4, [#allocation4]
    $region29: #{sarcasm_detector_forward.1} parent=1 // pred_fallthru
      _
    // Predicated region
    $region30: #{sarcasm_detector_forward.1} parent=1 // pred_check
      _
    $region31: #{sarcasm_detector_forward.1} parent=1 // pred_check_branch
      %2778 = sbr.rel (0) target = $region33
    $region32: #{sarcasm_detector_forward.1} parent=1 // pred_region
      %2779 = dma.done [#allocation4], 32
    $region33: #{sarcasm_detector_forward.1} parent=1 // pred_fallthru
      _
    %2780 = vsyncpa [#allocation3], 1
    %2781 = vsyncpa [#allocation6], 1
    %2782 = vsyncpa [#allocation4], 1

</llo_original>
